<compile_context>
chip_gen: v7x
topology: tpu7x:2x2x1
jax: 0.10.0
libtpu: 0.0.40
codegen_flags: <defaults>
</compile_context>

<pallas_src>
import functools

import jax
import jax.numpy as jnp
from jax import lax
from jax.experimental import pallas as pl
from jax.experimental.pallas import tpu as pltpu


# ----------------------------- static geometry ----------------------------- #

K = 5                     # conv kernel size
C0, C0P = 3, 4            # input channels (padded so 32*C0P == 128 lanes)
C1, C1P = 6, 8            # conv1 channels (padded)
C2, C2P = 16, 16          # conv2 channels (no padding needed)
S0 = 32                   # input H = W
S1 = 28                   # conv1 output H = W
SP1 = 14                  # pool1 output H = W
S2 = 10                   # conv2 output H = W
SP2 = 5                   # pool2 output H = W
RB0 = 32                  # rows per image in the input / conv1 slab
RB1 = 16                  # rows per image in the pool1 / conv2 slab
RB2 = 8                   # rows per image in the pool2 slab
FCP = 128                 # padded fc / logits lane width


# --------------------------- parameter preparation -------------------------- #

def _banded_conv_weight(w_oihw, s_in, s_out, c_in_p, c_out_p):
    """Per-kh banded matrices (K, s_in*c_in_p, s_out*c_out_p) for the conv-as-matmul."""
    co_, ci_, kh_, kw_ = w_oihw.shape
    w = jnp.transpose(w_oihw, (2, 3, 1, 0)).astype(jnp.float32)      # (kh, kw, ci, co)
    wp = jnp.zeros((kh_, kw_, c_in_p, c_out_p), jnp.float32)
    wp = wp.at[:, :, :ci_, :co_].set(w)
    mats = []
    for a in range(kh_):
        acc = jnp.zeros((s_in * c_in_p, s_out * c_out_p), jnp.float32)
        for b in range(kw_):
            acc = acc + jnp.kron(jnp.eye(s_in, s_out, k=-b, dtype=jnp.float32), wp[a, b])
        mats.append(acc)
    return jnp.stack(mats)


def _pool_col_selectors(s_in, s_out, c_p):
    """(2, s_in*c_p, s_out*c_p): pick even / odd w-blocks (right-multiply)."""
    eye_c = jnp.eye(c_p, dtype=jnp.float32)
    sel = []
    for d in (0, 1):
        pick = jnp.zeros((s_in, s_out), jnp.float32).at[
            2 * jnp.arange(s_out) + d, jnp.arange(s_out)].set(1.0)
        sel.append(jnp.kron(pick, eye_c))
    return jnp.stack(sel)


def _pool_row_selectors(n, rb_in, rb_out, rows_out):
    """(2, rows_out, n*rb_in): pick even / odd h rows per image (left-multiply)."""
    sel = []
    for d in (0, 1):
        blk = jnp.zeros((rb_out, rb_in), jnp.float32).at[
            jnp.arange(rb_out), 2 * jnp.arange(rb_out) + d].set(1.0)
        m = jnp.zeros((rows_out, n * rb_in), jnp.float32)
        for i in range(n):
            m = m.at[i * rb_out:(i + 1) * rb_out, i * rb_in:(i + 1) * rb_in].set(blk)
        sel.append(m)
    return jnp.stack(sel)


def prepare_inputs(params, n_classes, batch):
    """One-time layout prep: banded conv weights, pool selectors, padded FC mats."""
    assert C2P == C2
    N = batch
    f32 = jnp.float32
    R_A1 = N * RB0
    R_A2 = N * RB1
    R_P1 = R_A2 + 8
    R_P2 = N * RB2
    NP = max(8, ((N + 7) // 8) * 8)
    d1 = params["fc1_w"].shape[0]       # 120
    d2 = params["fc2_w"].shape[0]       # 84

    # conv banded weights + replicated bias rows
    big_w1 = _banded_conv_weight(params["conv1_w"], S0, S1, C0P, C1P)     # (5,128,224)
    big_w2 = _banded_conv_weight(params["conv2_w"], SP1, S2, C1P, C2P)    # (5,112,160)
    b1row = jnp.kron(jnp.ones((1, S1), f32),
                     jnp.zeros((1, C1P), f32).at[0, :C1].set(params["conv1_b"]))
    b2row = jnp.kron(jnp.ones((1, S2), f32),
                     jnp.zeros((1, C2P), f32).at[0, :C2].set(params["conv2_b"]))

    # pooling selectors
    sc1 = _pool_col_selectors(S1, SP1, C1P)                 # (2, 224, 112)
    sr1 = _pool_row_selectors(N, RB0, RB1, R_P1)            # (2, 40, 64)
    sc2 = _pool_col_selectors(S2, SP2, C2P)                 # (2, 160, 80)
    sr2 = _pool_row_selectors(N, RB1, RB2, R_P2)            # (2, 16, 32)

    # fc1 with the NCHW flatten folded in: per output-row h weight slices
    shsel = jnp.zeros((SP2, NP, R_P2), f32)
    for h in range(SP2):
        for i in range(N):
            shsel = shsel.at[h, i, i * RB2 + h].set(1.0)
    w1h = jnp.zeros((SP2, SP2 * C2P, FCP), f32).at[:, :, :d1].set(
        jnp.transpose(params["fc1_w"].reshape(d1, C2, SP2, SP2), (2, 3, 1, 0))
        .reshape(SP2, SP2 * C2, d1))
    bfc1 = jnp.zeros((1, FCP), f32).at[0, :d1].set(params["fc1_b"])
    wfc2 = jnp.zeros((FCP, FCP), f32).at[:d1, :d2].set(params["fc2_w"].T)
    bfc2 = jnp.zeros((1, FCP), f32).at[0, :d2].set(params["fc2_b"])
    wfc3 = jnp.zeros((FCP, FCP), f32).at[:d2, :n_classes].set(params["fc3_w"].T)
    bfc3 = jnp.zeros((1, FCP), f32).at[0, :n_classes].set(params["fc3_b"])

    return {"big_w1": big_w1, "b1row": b1row, "sc1": sc1, "sr1": sr1,
            "big_w2": big_w2, "b2row": b2row, "sc2": sc2, "sr2": sr2,
            "shsel": shsel, "w1h": w1h, "bfc1": bfc1,
            "wfc2": wfc2, "bfc2": bfc2, "wfc3": wfc3, "bfc3": bfc3}


# ------------------------------ fused forward ------------------------------- #

@functools.partial(jax.jit, static_argnames=("n_classes",))
def lenet5_forward(x_nchw, consts, n_classes):
    N = x_nchw.shape[0]
    NP = max(8, ((N + 7) // 8) * 8)
    R_A1 = N * RB0                 # conv1 output rows
    R_X0 = R_A1 + 8                # padded input rows (>= R_A1 + K - 1)
    R_A2 = N * RB1                 # conv2 output rows
    R_P1 = R_A2 + 8                # pool1 rows (>= R_A2 + K - 1)

    # NCHW -> NHWC -> pad channels 3->4 -> 2-D slab (rows=(n,h), lanes=(w,c)=128)
    x_nhwc = jnp.transpose(x_nchw, (0, 2, 3, 1)).astype(jnp.float32)
    x_nhwc = jnp.pad(x_nhwc, ((0, 0), (0, 0), (0, 0), (0, C0P - C0)))
    x2d = x_nhwc.reshape(N * S0, S0 * C0P)
    x2d = jnp.pad(x2d, ((0, R_X0 - N * S0), (0, 0)))

    def kernel(x_ref, bw1_ref, b1_ref, sc1_ref, sr1_ref,
               bw2_ref, b2_ref, sc2_ref, sr2_ref,
               shs_ref, w1h_ref, bfc1_ref, wfc2_ref, bfc2_ref,
               wfc3_ref, bfc3_ref, o_ref, p1_ref):
        f32 = jnp.float32

        # conv1 (banded matmul over kh) + bias + ReLU
        a1 = jnp.zeros((R_A1, S1 * C1P), f32)
        for kh in range(K):
            a1 = a1 + jnp.dot(x_ref[pl.ds(kh, R_A1), :], bw1_ref[kh],
                              preferred_element_type=f32)
        a1 = jnp.maximum(a1 + b1_ref[...], 0.0)

        # pool1: 2x2/2 max via 0/1 selection matmuls (cols then rows)
        cm1 = jnp.maximum(jnp.dot(a1, sc1_ref[0], preferred_element_type=f32),
                          jnp.dot(a1, sc1_ref[1], preferred_element_type=f32))
        p1 = jnp.maximum(jnp.dot(sr1_ref[0], cm1, preferred_element_type=f32),
                         jnp.dot(sr1_ref[1], cm1, preferred_element_type=f32))
        p1_ref[...] = p1                       # park in VMEM so conv2 can row-shift it

        # conv2 + bias + ReLU
        a2 = jnp.zeros((R_A2, S2 * C2P), f32)
        for kh in range(K):
            a2 = a2 + jnp.dot(p1_ref[pl.ds(kh, R_A2), :], bw2_ref[kh],
                              preferred_element_type=f32)
        a2 = jnp.maximum(a2 + b2_ref[...], 0.0)

        # pool2
        cm2 = jnp.maximum(jnp.dot(a2, sc2_ref[0], preferred_element_type=f32),
                          jnp.dot(a2, sc2_ref[1], preferred_element_type=f32))
        p2 = jnp.maximum(jnp.dot(sr2_ref[0], cm2, preferred_element_type=f32),
                         jnp.dot(sr2_ref[1], cm2, preferred_element_type=f32))

        # fc1 (NCHW flatten folded in) -> fc2 -> fc3, all 128-lane padded
        h1 = jnp.zeros((NP, FCP), f32)
        for h in range(SP2):
            rows_h = jnp.dot(shs_ref[h], p2, preferred_element_type=f32)
            h1 = h1 + jnp.dot(rows_h, w1h_ref[h], preferred_element_type=f32)
        h1 = h1 + bfc1_ref[...]
        h2 = jnp.dot(h1, wfc2_ref[...], preferred_element_type=f32) + bfc2_ref[...]
        o_ref[...] = jnp.dot(h2, wfc3_ref[...], preferred_element_type=f32) + bfc3_ref[...]

    out = pl.pallas_call(
        kernel,
        out_shape=jax.ShapeDtypeStruct((NP, FCP), jnp.float32),
        in_specs=[pl.BlockSpec(memory_space=pltpu.MemorySpace.VMEM)] * 16,
        out_specs=pl.BlockSpec(memory_space=pltpu.MemorySpace.VMEM),
        scratch_shapes=[pltpu.VMEM((R_P1, SP1 * C1P), jnp.float32)],
    )(x2d, consts["big_w1"], consts["b1row"], consts["sc1"], consts["sr1"],
      consts["big_w2"], consts["b2row"], consts["sc2"], consts["sr2"],
      consts["shsel"], consts["w1h"], consts["bfc1"], consts["wfc2"],
      consts["bfc2"], consts["wfc3"], consts["bfc3"])

    return out[:N, :n_classes]


# ----------------------------- pure-JAX reference --------------------------- #

def lenet5_reference(x_nchw, params):
    dn = ("NCHW", "OIHW", "NCHW")
    y = lax.conv_general_dilated(x_nchw, params["conv1_w"], (1, 1), "VALID",
                                 dimension_numbers=dn)
    y = jnp.maximum(y + params["conv1_b"][None, :, None, None], 0.0)
    y = lax.reduce_window(y, -jnp.inf, lax.max, (1, 1, 2, 2), (1, 1, 2, 2), "VALID")
    y = lax.conv_general_dilated(y, params["conv2_w"], (1, 1), "VALID",
                                 dimension_numbers=dn)
    y = jnp.maximum(y + params["conv2_b"][None, :, None, None], 0.0)
    y = lax.reduce_window(y, -jnp.inf, lax.max, (1, 1, 2, 2), (1, 1, 2, 2), "VALID")
    flat = y.reshape(y.shape[0], -1)
    h = flat @ params["fc1_w"].T + params["fc1_b"]
    h = h @ params["fc2_w"].T + params["fc2_b"]
    return h @ params["fc3_w"].T + params["fc3_b"]


# ---------------------------------- main ------------------------------------ #

def make_params(key, n_classes):
    ks = jax.random.split(key, 10)
    f32 = jnp.float32
    s = 0.05
    return {
        "conv1_w": s * jax.random.normal(ks[0], (6, 3, 5, 5), f32),
        "conv1_b": s * jax.random.normal(ks[1], (6,), f32),
        "conv2_w": s * jax.random.normal(ks[2], (16, 6, 5, 5), f32),
        "conv2_b": s * jax.random.normal(ks[3], (16,), f32),
        "fc1_w": s * jax.random.normal(ks[4], (120, 5 * 5 * 16), f32),
        "fc1_b": s * jax.random.normal(ks[5], (120,), f32),
        "fc2_w": s * jax.random.normal(ks[6], (84, 120), f32),
        "fc2_b": s * jax.random.normal(ks[7], (84,), f32),
        "fc3_w": s * jax.random.normal(ks[8], (n_classes, 84), f32),
        "fc3_b": s * jax.random.normal(ks[9], (n_classes,), f32),
    }


if __name__ == "__main__":
    n_classes = 10
    key = jax.random.PRNGKey(0)
    k_x, k_p = jax.random.split(key)
    # LeNet-5 geometry requires 32x32x3 inputs (fc_1 expects 5*5*16 features).
    x = jax.random.normal(k_x, (2, 3, 32, 32), jnp.float32)
    params = make_params(k_p, n_classes)

    consts = prepare_inputs(params, n_classes=n_classes, batch=x.shape[0])
    out = jax.block_until_ready(lenet5_forward(x, consts, n_classes=n_classes))
    assert out.shape == (2, n_classes) and out.dtype == jnp.float32

    ref = jax.block_until_ready(lenet5_reference(x, params))
    if not jnp.allclose(out, ref, rtol=1e-3, atol=1e-3):
        raise AssertionError("Pallas LeNet-5 output does not match JAX reference")

    print("KERNEL_OK")
</pallas_src>

<mosaic_0001>
module attributes {stable_mosaic.version = 11 : i64} {
  func.func @kernel(%arg0: memref<72x128xf32, #tpu.memory_space<vmem>>, %arg1: memref<5x128x224xf32, #tpu.memory_space<vmem>>, %arg2: memref<1x224xf32, #tpu.memory_space<vmem>>, %arg3: memref<2x224x112xf32, #tpu.memory_space<vmem>>, %arg4: memref<2x40x64xf32, #tpu.memory_space<vmem>>, %arg5: memref<5x112x160xf32, #tpu.memory_space<vmem>>, %arg6: memref<1x160xf32, #tpu.memory_space<vmem>>, %arg7: memref<2x160x80xf32, #tpu.memory_space<vmem>>, %arg8: memref<2x16x32xf32, #tpu.memory_space<vmem>>, %arg9: memref<5x8x16xf32, #tpu.memory_space<vmem>>, %arg10: memref<5x80x128xf32, #tpu.memory_space<vmem>>, %arg11: memref<1x128xf32, #tpu.memory_space<vmem>>, %arg12: memref<128x128xf32, #tpu.memory_space<vmem>>, %arg13: memref<1x128xf32, #tpu.memory_space<vmem>>, %arg14: memref<128x128xf32, #tpu.memory_space<vmem>>, %arg15: memref<1x128xf32, #tpu.memory_space<vmem>>, %arg16: memref<8x128xf32, #tpu.memory_space<vmem>>, %arg17: memref<40x112xf32, #tpu.memory_space<vmem>>) attributes {dimension_semantics = [], scalar_prefetch = 0 : i64, scratch_operands = 1 : i64, tpu.core_type = #tpu.core_type<tc>} {
    %cst = arith.constant 0.000000e+00 : f32
    %0 = vector.broadcast %cst : f32 to vector<64x224xf32>
    %c0 = arith.constant 0 : index
    %c0_0 = arith.constant 0 : index
    %1 = vector.load %arg0[%c0, %c0_0] : memref<72x128xf32, #tpu.memory_space<vmem>>, vector<64x128xf32>
    %c0_1 = arith.constant 0 : index
    %c0_2 = arith.constant 0 : index
    %c0_3 = arith.constant 0 : index
    %2 = vector.load %arg1[%c0_1, %c0_2, %c0_3] : memref<5x128x224xf32, #tpu.memory_space<vmem>>, vector<1x128x224xf32>
    %3 = vector.shape_cast %2 : vector<1x128x224xf32> to vector<128x224xf32>
    %cst_4 = arith.constant dense<0.000000e+00> : vector<64x224xf32>
    %4 = tpu.matmul %1, %3, %cst_4 {dimension_numbers = #tpu.dot_dimension_numbers<[1], [0], [0], [1], [0, 0, 1, 1], [], []>} : vector<64x128xf32>, vector<128x224xf32>, vector<64x224xf32> -> vector<64x224xf32>
    %5 = arith.addf %0, %4 : vector<64x224xf32>
    %c1 = arith.constant 1 : index
    %c0_5 = arith.constant 0 : index
    %6 = vector.load %arg0[%c1, %c0_5] : memref<72x128xf32, #tpu.memory_space<vmem>>, vector<64x128xf32>
    %c1_6 = arith.constant 1 : index
    %c0_7 = arith.constant 0 : index
    %c0_8 = arith.constant 0 : index
    %7 = vector.load %arg1[%c1_6, %c0_7, %c0_8] : memref<5x128x224xf32, #tpu.memory_space<vmem>>, vector<1x128x224xf32>
    %8 = vector.shape_cast %7 : vector<1x128x224xf32> to vector<128x224xf32>
    %cst_9 = arith.constant dense<0.000000e+00> : vector<64x224xf32>
    %9 = tpu.matmul %6, %8, %cst_9 {dimension_numbers = #tpu.dot_dimension_numbers<[1], [0], [0], [1], [0, 0, 1, 1], [], []>} : vector<64x128xf32>, vector<128x224xf32>, vector<64x224xf32> -> vector<64x224xf32>
    %10 = arith.addf %5, %9 : vector<64x224xf32>
    %c2 = arith.constant 2 : index
    %c0_10 = arith.constant 0 : index
    %11 = vector.load %arg0[%c2, %c0_10] : memref<72x128xf32, #tpu.memory_space<vmem>>, vector<64x128xf32>
    %c2_11 = arith.constant 2 : index
    %c0_12 = arith.constant 0 : index
    %c0_13 = arith.constant 0 : index
    %12 = vector.load %arg1[%c2_11, %c0_12, %c0_13] : memref<5x128x224xf32, #tpu.memory_space<vmem>>, vector<1x128x224xf32>
    %13 = vector.shape_cast %12 : vector<1x128x224xf32> to vector<128x224xf32>
    %cst_14 = arith.constant dense<0.000000e+00> : vector<64x224xf32>
    %14 = tpu.matmul %11, %13, %cst_14 {dimension_numbers = #tpu.dot_dimension_numbers<[1], [0], [0], [1], [0, 0, 1, 1], [], []>} : vector<64x128xf32>, vector<128x224xf32>, vector<64x224xf32> -> vector<64x224xf32>
    %15 = arith.addf %10, %14 : vector<64x224xf32>
    %c3 = arith.constant 3 : index
    %c0_15 = arith.constant 0 : index
    %16 = vector.load %arg0[%c3, %c0_15] : memref<72x128xf32, #tpu.memory_space<vmem>>, vector<64x128xf32>
    %c3_16 = arith.constant 3 : index
    %c0_17 = arith.constant 0 : index
    %c0_18 = arith.constant 0 : index
    %17 = vector.load %arg1[%c3_16, %c0_17, %c0_18] : memref<5x128x224xf32, #tpu.memory_space<vmem>>, vector<1x128x224xf32>
    %18 = vector.shape_cast %17 : vector<1x128x224xf32> to vector<128x224xf32>
    %cst_19 = arith.constant dense<0.000000e+00> : vector<64x224xf32>
    %19 = tpu.matmul %16, %18, %cst_19 {dimension_numbers = #tpu.dot_dimension_numbers<[1], [0], [0], [1], [0, 0, 1, 1], [], []>} : vector<64x128xf32>, vector<128x224xf32>, vector<64x224xf32> -> vector<64x224xf32>
    %20 = arith.addf %15, %19 : vector<64x224xf32>
    %c4 = arith.constant 4 : index
    %c0_20 = arith.constant 0 : index
    %21 = vector.load %arg0[%c4, %c0_20] : memref<72x128xf32, #tpu.memory_space<vmem>>, vector<64x128xf32>
    %c4_21 = arith.constant 4 : index
    %c0_22 = arith.constant 0 : index
    %c0_23 = arith.constant 0 : index
    %22 = vector.load %arg1[%c4_21, %c0_22, %c0_23] : memref<5x128x224xf32, #tpu.memory_space<vmem>>, vector<1x128x224xf32>
    %23 = vector.shape_cast %22 : vector<1x128x224xf32> to vector<128x224xf32>
    %cst_24 = arith.constant dense<0.000000e+00> : vector<64x224xf32>
    %24 = tpu.matmul %21, %23, %cst_24 {dimension_numbers = #tpu.dot_dimension_numbers<[1], [0], [0], [1], [0, 0, 1, 1], [], []>} : vector<64x128xf32>, vector<128x224xf32>, vector<64x224xf32> -> vector<64x224xf32>
    %25 = arith.addf %20, %24 : vector<64x224xf32>
    %c0_25 = arith.constant 0 : index
    %c0_26 = arith.constant 0 : index
    %26 = vector.load %arg2[%c0_25, %c0_26] : memref<1x224xf32, #tpu.memory_space<vmem>>, vector<1x224xf32>
    %27 = vector.broadcast %26 : vector<1x224xf32> to vector<64x224xf32>
    %28 = arith.addf %25, %27 : vector<64x224xf32>
    %cst_27 = arith.constant 0.000000e+00 : f32
    %29 = vector.broadcast %cst_27 : f32 to vector<64x224xf32>
    %30 = arith.maximumf %28, %29 : vector<64x224xf32>
    %c0_28 = arith.constant 0 : index
    %c0_29 = arith.constant 0 : index
    %c0_30 = arith.constant 0 : index
    %31 = vector.load %arg3[%c0_28, %c0_29, %c0_30] : memref<2x224x112xf32, #tpu.memory_space<vmem>>, vector<1x224x112xf32>
    %32 = vector.shape_cast %31 : vector<1x224x112xf32> to vector<224x112xf32>
    %cst_31 = arith.constant dense<0.000000e+00> : vector<64x112xf32>
    %33 = tpu.matmul %30, %32, %cst_31 {dimension_numbers = #tpu.dot_dimension_numbers<[1], [0], [0], [1], [0, 0, 1, 1], [], []>} : vector<64x224xf32>, vector<224x112xf32>, vector<64x112xf32> -> vector<64x112xf32>
    %c1_32 = arith.constant 1 : index
    %c0_33 = arith.constant 0 : index
    %c0_34 = arith.constant 0 : index
    %34 = vector.load %arg3[%c1_32, %c0_33, %c0_34] : memref<2x224x112xf32, #tpu.memory_space<vmem>>, vector<1x224x112xf32>
    %35 = vector.shape_cast %34 : vector<1x224x112xf32> to vector<224x112xf32>
    %cst_35 = arith.constant dense<0.000000e+00> : vector<64x112xf32>
    %36 = tpu.matmul %30, %35, %cst_35 {dimension_numbers = #tpu.dot_dimension_numbers<[1], [0], [0], [1], [0, 0, 1, 1], [], []>} : vector<64x224xf32>, vector<224x112xf32>, vector<64x112xf32> -> vector<64x112xf32>
    %37 = arith.maximumf %33, %36 : vector<64x112xf32>
    %c0_36 = arith.constant 0 : index
    %c0_37 = arith.constant 0 : index
    %c0_38 = arith.constant 0 : index
    %38 = vector.load %arg4[%c0_36, %c0_37, %c0_38] : memref<2x40x64xf32, #tpu.memory_space<vmem>>, vector<1x40x64xf32>
    %39 = vector.shape_cast %38 : vector<1x40x64xf32> to vector<40x64xf32>
    %cst_39 = arith.constant dense<0.000000e+00> : vector<40x112xf32>
    %40 = tpu.matmul %39, %37, %cst_39 {dimension_numbers = #tpu.dot_dimension_numbers<[1], [0], [0], [1], [0, 0, 1, 1], [], []>} : vector<40x64xf32>, vector<64x112xf32>, vector<40x112xf32> -> vector<40x112xf32>
    %c1_40 = arith.constant 1 : index
    %c0_41 = arith.constant 0 : index
    %c0_42 = arith.constant 0 : index
    %41 = vector.load %arg4[%c1_40, %c0_41, %c0_42] : memref<2x40x64xf32, #tpu.memory_space<vmem>>, vector<1x40x64xf32>
    %42 = vector.shape_cast %41 : vector<1x40x64xf32> to vector<40x64xf32>
    %cst_43 = arith.constant dense<0.000000e+00> : vector<40x112xf32>
    %43 = tpu.matmul %42, %37, %cst_43 {dimension_numbers = #tpu.dot_dimension_numbers<[1], [0], [0], [1], [0, 0, 1, 1], [], []>} : vector<40x64xf32>, vector<64x112xf32>, vector<40x112xf32> -> vector<40x112xf32>
    %44 = arith.maximumf %40, %43 : vector<40x112xf32>
    %c0_44 = arith.constant 0 : index
    %c0_45 = arith.constant 0 : index
    %45 = vector.load %arg17[%c0_44, %c0_45] : memref<40x112xf32, #tpu.memory_space<vmem>>, vector<40x112xf32>
    tpu.vector_store %arg17[%c0_44, %c0_45], %44 {strides = array<i32>} : memref<40x112xf32, #tpu.memory_space<vmem>>, vector<40x112xf32>,
    %cst_46 = arith.constant 0.000000e+00 : f32
    %46 = vector.broadcast %cst_46 : f32 to vector<32x160xf32>
    %c0_47 = arith.constant 0 : index
    %c0_48 = arith.constant 0 : index
    %47 = vector.load %arg17[%c0_47, %c0_48] : memref<40x112xf32, #tpu.memory_space<vmem>>, vector<32x112xf32>
    %c0_49 = arith.constant 0 : index
    %c0_50 = arith.constant 0 : index
    %c0_51 = arith.constant 0 : index
    %48 = vector.load %arg5[%c0_49, %c0_50, %c0_51] : memref<5x112x160xf32, #tpu.memory_space<vmem>>, vector<1x112x160xf32>
    %49 = vector.shape_cast %48 : vector<1x112x160xf32> to vector<112x160xf32>
    %cst_52 = arith.constant dense<0.000000e+00> : vector<32x160xf32>
    %50 = tpu.matmul %47, %49, %cst_52 {dimension_numbers = #tpu.dot_dimension_numbers<[1], [0], [0], [1], [0, 0, 1, 1], [], []>} : vector<32x112xf32>, vector<112x160xf32>, vector<32x160xf32> -> vector<32x160xf32>
    %51 = arith.addf %46, %50 : vector<32x160xf32>
    %c1_53 = arith.constant 1 : index
    %c0_54 = arith.constant 0 : index
    %52 = vector.load %arg17[%c1_53, %c0_54] : memref<40x112xf32, #tpu.memory_space<vmem>>, vector<32x112xf32>
    %c1_55 = arith.constant 1 : index
    %c0_56 = arith.constant 0 : index
    %c0_57 = arith.constant 0 : index
    %53 = vector.load %arg5[%c1_55, %c0_56, %c0_57] : memref<5x112x160xf32, #tpu.memory_space<vmem>>, vector<1x112x160xf32>
    %54 = vector.shape_cast %53 : vector<1x112x160xf32> to vector<112x160xf32>
    %cst_58 = arith.constant dense<0.000000e+00> : vector<32x160xf32>
    %55 = tpu.matmul %52, %54, %cst_58 {dimension_numbers = #tpu.dot_dimension_numbers<[1], [0], [0], [1], [0, 0, 1, 1], [], []>} : vector<32x112xf32>, vector<112x160xf32>, vector<32x160xf32> -> vector<32x160xf32>
    %56 = arith.addf %51, %55 : vector<32x160xf32>
    %c2_59 = arith.constant 2 : index
    %c0_60 = arith.constant 0 : index
    %57 = vector.load %arg17[%c2_59, %c0_60] : memref<40x112xf32, #tpu.memory_space<vmem>>, vector<32x112xf32>
    %c2_61 = arith.constant 2 : index
    %c0_62 = arith.constant 0 : index
    %c0_63 = arith.constant 0 : index
    %58 = vector.load %arg5[%c2_61, %c0_62, %c0_63] : memref<5x112x160xf32, #tpu.memory_space<vmem>>, vector<1x112x160xf32>
    %59 = vector.shape_cast %58 : vector<1x112x160xf32> to vector<112x160xf32>
    %cst_64 = arith.constant dense<0.000000e+00> : vector<32x160xf32>
    %60 = tpu.matmul %57, %59, %cst_64 {dimension_numbers = #tpu.dot_dimension_numbers<[1], [0], [0], [1], [0, 0, 1, 1], [], []>} : vector<32x112xf32>, vector<112x160xf32>, vector<32x160xf32> -> vector<32x160xf32>
    %61 = arith.addf %56, %60 : vector<32x160xf32>
    %c3_65 = arith.constant 3 : index
    %c0_66 = arith.constant 0 : index
    %62 = vector.load %arg17[%c3_65, %c0_66] : memref<40x112xf32, #tpu.memory_space<vmem>>, vector<32x112xf32>
    %c3_67 = arith.constant 3 : index
    %c0_68 = arith.constant 0 : index
    %c0_69 = arith.constant 0 : index
    %63 = vector.load %arg5[%c3_67, %c0_68, %c0_69] : memref<5x112x160xf32, #tpu.memory_space<vmem>>, vector<1x112x160xf32>
    %64 = vector.shape_cast %63 : vector<1x112x160xf32> to vector<112x160xf32>
    %cst_70 = arith.constant dense<0.000000e+00> : vector<32x160xf32>
    %65 = tpu.matmul %62, %64, %cst_70 {dimension_numbers = #tpu.dot_dimension_numbers<[1], [0], [0], [1], [0, 0, 1, 1], [], []>} : vector<32x112xf32>, vector<112x160xf32>, vector<32x160xf32> -> vector<32x160xf32>
    %66 = arith.addf %61, %65 : vector<32x160xf32>
    %c4_71 = arith.constant 4 : index
    %c0_72 = arith.constant 0 : index
    %67 = vector.load %arg17[%c4_71, %c0_72] : memref<40x112xf32, #tpu.memory_space<vmem>>, vector<32x112xf32>
    %c4_73 = arith.constant 4 : index
    %c0_74 = arith.constant 0 : index
    %c0_75 = arith.constant 0 : index
    %68 = vector.load %arg5[%c4_73, %c0_74, %c0_75] : memref<5x112x160xf32, #tpu.memory_space<vmem>>, vector<1x112x160xf32>
    %69 = vector.shape_cast %68 : vector<1x112x160xf32> to vector<112x160xf32>
    %cst_76 = arith.constant dense<0.000000e+00> : vector<32x160xf32>
    %70 = tpu.matmul %67, %69, %cst_76 {dimension_numbers = #tpu.dot_dimension_numbers<[1], [0], [0], [1], [0, 0, 1, 1], [], []>} : vector<32x112xf32>, vector<112x160xf32>, vector<32x160xf32> -> vector<32x160xf32>
    %71 = arith.addf %66, %70 : vector<32x160xf32>
    %c0_77 = arith.constant 0 : index
    %c0_78 = arith.constant 0 : index
    %72 = vector.load %arg6[%c0_77, %c0_78] : memref<1x160xf32, #tpu.memory_space<vmem>>, vector<1x160xf32>
    %73 = vector.broadcast %72 : vector<1x160xf32> to vector<32x160xf32>
    %74 = arith.addf %71, %73 : vector<32x160xf32>
    %cst_79 = arith.constant 0.000000e+00 : f32
    %75 = vector.broadcast %cst_79 : f32 to vector<32x160xf32>
    %76 = arith.maximumf %74, %75 : vector<32x160xf32>
    %c0_80 = arith.constant 0 : index
    %c0_81 = arith.constant 0 : index
    %c0_82 = arith.constant 0 : index
    %77 = vector.load %arg7[%c0_80, %c0_81, %c0_82] : memref<2x160x80xf32, #tpu.memory_space<vmem>>, vector<1x160x80xf32>
    %78 = vector.shape_cast %77 : vector<1x160x80xf32> to vector<160x80xf32>
    %cst_83 = arith.constant dense<0.000000e+00> : vector<32x80xf32>
    %79 = tpu.matmul %76, %78, %cst_83 {dimension_numbers = #tpu.dot_dimension_numbers<[1], [0], [0], [1], [0, 0, 1, 1], [], []>} : vector<32x160xf32>, vector<160x80xf32>, vector<32x80xf32> -> vector<32x80xf32>
    %c1_84 = arith.constant 1 : index
    %c0_85 = arith.constant 0 : index
    %c0_86 = arith.constant 0 : index
    %80 = vector.load %arg7[%c1_84, %c0_85, %c0_86] : memref<2x160x80xf32, #tpu.memory_space<vmem>>, vector<1x160x80xf32>
    %81 = vector.shape_cast %80 : vector<1x160x80xf32> to vector<160x80xf32>
    %cst_87 = arith.constant dense<0.000000e+00> : vector<32x80xf32>
    %82 = tpu.matmul %76, %81, %cst_87 {dimension_numbers = #tpu.dot_dimension_numbers<[1], [0], [0], [1], [0, 0, 1, 1], [], []>} : vector<32x160xf32>, vector<160x80xf32>, vector<32x80xf32> -> vector<32x80xf32>
    %83 = arith.maximumf %79, %82 : vector<32x80xf32>
    %c0_88 = arith.constant 0 : index
    %c0_89 = arith.constant 0 : index
    %c0_90 = arith.constant 0 : index
    %84 = vector.load %arg8[%c0_88, %c0_89, %c0_90] : memref<2x16x32xf32, #tpu.memory_space<vmem>>, vector<1x16x32xf32>
    %85 = vector.shape_cast %84 : vector<1x16x32xf32> to vector<16x32xf32>
    %cst_91 = arith.constant dense<0.000000e+00> : vector<16x80xf32>
    %86 = tpu.matmul %85, %83, %cst_91 {dimension_numbers = #tpu.dot_dimension_numbers<[1], [0], [0], [1], [0, 0, 1, 1], [], []>} : vector<16x32xf32>, vector<32x80xf32>, vector<16x80xf32> -> vector<16x80xf32>
    %c1_92 = arith.constant 1 : index
    %c0_93 = arith.constant 0 : index
    %c0_94 = arith.constant 0 : index
    %87 = vector.load %arg8[%c1_92, %c0_93, %c0_94] : memref<2x16x32xf32, #tpu.memory_space<vmem>>, vector<1x16x32xf32>
    %88 = vector.shape_cast %87 : vector<1x16x32xf32> to vector<16x32xf32>
    %cst_95 = arith.constant dense<0.000000e+00> : vector<16x80xf32>
    %89 = tpu.matmul %88, %83, %cst_95 {dimension_numbers = #tpu.dot_dimension_numbers<[1], [0], [0], [1], [0, 0, 1, 1], [], []>} : vector<16x32xf32>, vector<32x80xf32>, vector<16x80xf32> -> vector<16x80xf32>
    %90 = arith.maximumf %86, %89 : vector<16x80xf32>
    %cst_96 = arith.constant 0.000000e+00 : f32
    %91 = vector.broadcast %cst_96 : f32 to vector<8x128xf32>
    %c0_97 = arith.constant 0 : index
    %c0_98 = arith.constant 0 : index
    %c0_99 = arith.constant 0 : index
    %92 = vector.load %arg9[%c0_97, %c0_98, %c0_99] : memref<5x8x16xf32, #tpu.memory_space<vmem>>, vector<1x8x16xf32>
    %93 = vector.shape_cast %92 : vector<1x8x16xf32> to vector<8x16xf32>
    %cst_100 = arith.constant dense<0.000000e+00> : vector<8x80xf32>
    %94 = tpu.matmul %93, %90, %cst_100 {dimension_numbers = #tpu.dot_dimension_numbers<[1], [0], [0], [1], [0, 0, 1, 1], [], []>} : vector<8x16xf32>, vector<16x80xf32>, vector<8x80xf32> -> vector<8x80xf32>
    %c0_101 = arith.constant 0 : index
    %c0_102 = arith.constant 0 : index
    %c0_103 = arith.constant 0 : index
    %95 = vector.load %arg10[%c0_101, %c0_102, %c0_103] : memref<5x80x128xf32, #tpu.memory_space<vmem>>, vector<1x80x128xf32>
    %96 = vector.shape_cast %95 : vector<1x80x128xf32> to vector<80x128xf32>
    %cst_104 = arith.constant dense<0.000000e+00> : vector<8x128xf32>
    %97 = tpu.matmul %94, %96, %cst_104 {dimension_numbers = #tpu.dot_dimension_numbers<[1], [0], [0], [1], [0, 0, 1, 1], [], []>} : vector<8x80xf32>, vector<80x128xf32>, vector<8x128xf32> -> vector<8x128xf32>
    %98 = arith.addf %91, %97 : vector<8x128xf32>
    %c1_105 = arith.constant 1 : index
    %c0_106 = arith.constant 0 : index
    %c0_107 = arith.constant 0 : index
    %99 = vector.load %arg9[%c1_105, %c0_106, %c0_107] : memref<5x8x16xf32, #tpu.memory_space<vmem>>, vector<1x8x16xf32>
    %100 = vector.shape_cast %99 : vector<1x8x16xf32> to vector<8x16xf32>
    %cst_108 = arith.constant dense<0.000000e+00> : vector<8x80xf32>
    %101 = tpu.matmul %100, %90, %cst_108 {dimension_numbers = #tpu.dot_dimension_numbers<[1], [0], [0], [1], [0, 0, 1, 1], [], []>} : vector<8x16xf32>, vector<16x80xf32>, vector<8x80xf32> -> vector<8x80xf32>
    %c1_109 = arith.constant 1 : index
    %c0_110 = arith.constant 0 : index
    %c0_111 = arith.constant 0 : index
    %102 = vector.load %arg10[%c1_109, %c0_110, %c0_111] : memref<5x80x128xf32, #tpu.memory_space<vmem>>, vector<1x80x128xf32>
    %103 = vector.shape_cast %102 : vector<1x80x128xf32> to vector<80x128xf32>
    %cst_112 = arith.constant dense<0.000000e+00> : vector<8x128xf32>
    %104 = tpu.matmul %101, %103, %cst_112 {dimension_numbers = #tpu.dot_dimension_numbers<[1], [0], [0], [1], [0, 0, 1, 1], [], []>} : vector<8x80xf32>, vector<80x128xf32>, vector<8x128xf32> -> vector<8x128xf32>
    %105 = arith.addf %98, %104 : vector<8x128xf32>
    %c2_113 = arith.constant 2 : index
    %c0_114 = arith.constant 0 : index
    %c0_115 = arith.constant 0 : index
    %106 = vector.load %arg9[%c2_113, %c0_114, %c0_115] : memref<5x8x16xf32, #tpu.memory_space<vmem>>, vector<1x8x16xf32>
    %107 = vector.shape_cast %106 : vector<1x8x16xf32> to vector<8x16xf32>
    %cst_116 = arith.constant dense<0.000000e+00> : vector<8x80xf32>
    %108 = tpu.matmul %107, %90, %cst_116 {dimension_numbers = #tpu.dot_dimension_numbers<[1], [0], [0], [1], [0, 0, 1, 1], [], []>} : vector<8x16xf32>, vector<16x80xf32>, vector<8x80xf32> -> vector<8x80xf32>
    %c2_117 = arith.constant 2 : index
    %c0_118 = arith.constant 0 : index
    %c0_119 = arith.constant 0 : index
    %109 = vector.load %arg10[%c2_117, %c0_118, %c0_119] : memref<5x80x128xf32, #tpu.memory_space<vmem>>, vector<1x80x128xf32>
    %110 = vector.shape_cast %109 : vector<1x80x128xf32> to vector<80x128xf32>
    %cst_120 = arith.constant dense<0.000000e+00> : vector<8x128xf32>
    %111 = tpu.matmul %108, %110, %cst_120 {dimension_numbers = #tpu.dot_dimension_numbers<[1], [0], [0], [1], [0, 0, 1, 1], [], []>} : vector<8x80xf32>, vector<80x128xf32>, vector<8x128xf32> -> vector<8x128xf32>
    %112 = arith.addf %105, %111 : vector<8x128xf32>
    %c3_121 = arith.constant 3 : index
    %c0_122 = arith.constant 0 : index
    %c0_123 = arith.constant 0 : index
    %113 = vector.load %arg9[%c3_121, %c0_122, %c0_123] : memref<5x8x16xf32, #tpu.memory_space<vmem>>, vector<1x8x16xf32>
    %114 = vector.shape_cast %113 : vector<1x8x16xf32> to vector<8x16xf32>
    %cst_124 = arith.constant dense<0.000000e+00> : vector<8x80xf32>
    %115 = tpu.matmul %114, %90, %cst_124 {dimension_numbers = #tpu.dot_dimension_numbers<[1], [0], [0], [1], [0, 0, 1, 1], [], []>} : vector<8x16xf32>, vector<16x80xf32>, vector<8x80xf32> -> vector<8x80xf32>
    %c3_125 = arith.constant 3 : index
    %c0_126 = arith.constant 0 : index
    %c0_127 = arith.constant 0 : index
    %116 = vector.load %arg10[%c3_125, %c0_126, %c0_127] : memref<5x80x128xf32, #tpu.memory_space<vmem>>, vector<1x80x128xf32>
    %117 = vector.shape_cast %116 : vector<1x80x128xf32> to vector<80x128xf32>
    %cst_128 = arith.constant dense<0.000000e+00> : vector<8x128xf32>
    %118 = tpu.matmul %115, %117, %cst_128 {dimension_numbers = #tpu.dot_dimension_numbers<[1], [0], [0], [1], [0, 0, 1, 1], [], []>} : vector<8x80xf32>, vector<80x128xf32>, vector<8x128xf32> -> vector<8x128xf32>
    %119 = arith.addf %112, %118 : vector<8x128xf32>
    %c4_129 = arith.constant 4 : index
    %c0_130 = arith.constant 0 : index
    %c0_131 = arith.constant 0 : index
    %120 = vector.load %arg9[%c4_129, %c0_130, %c0_131] : memref<5x8x16xf32, #tpu.memory_space<vmem>>, vector<1x8x16xf32>
    %121 = vector.shape_cast %120 : vector<1x8x16xf32> to vector<8x16xf32>
    %cst_132 = arith.constant dense<0.000000e+00> : vector<8x80xf32>
    %122 = tpu.matmul %121, %90, %cst_132 {dimension_numbers = #tpu.dot_dimension_numbers<[1], [0], [0], [1], [0, 0, 1, 1], [], []>} : vector<8x16xf32>, vector<16x80xf32>, vector<8x80xf32> -> vector<8x80xf32>
    %c4_133 = arith.constant 4 : index
    %c0_134 = arith.constant 0 : index
    %c0_135 = arith.constant 0 : index
    %123 = vector.load %arg10[%c4_133, %c0_134, %c0_135] : memref<5x80x128xf32, #tpu.memory_space<vmem>>, vector<1x80x128xf32>
    %124 = vector.shape_cast %123 : vector<1x80x128xf32> to vector<80x128xf32>
    %cst_136 = arith.constant dense<0.000000e+00> : vector<8x128xf32>
    %125 = tpu.matmul %122, %124, %cst_136 {dimension_numbers = #tpu.dot_dimension_numbers<[1], [0], [0], [1], [0, 0, 1, 1], [], []>} : vector<8x80xf32>, vector<80x128xf32>, vector<8x128xf32> -> vector<8x128xf32>
    %126 = arith.addf %119, %125 : vector<8x128xf32>
    %c0_137 = arith.constant 0 : index
    %c0_138 = arith.constant 0 : index
    %127 = vector.load %arg11[%c0_137, %c0_138] : memref<1x128xf32, #tpu.memory_space<vmem>>, vector<1x128xf32>
    %128 = vector.broadcast %127 : vector<1x128xf32> to vector<8x128xf32>
    %129 = arith.addf %126, %128 : vector<8x128xf32>
    %c0_139 = arith.constant 0 : index
    %c0_140 = arith.constant 0 : index
    %130 = vector.load %arg12[%c0_139, %c0_140] : memref<128x128xf32, #tpu.memory_space<vmem>>, vector<128x128xf32>
    %cst_141 = arith.constant dense<0.000000e+00> : vector<8x128xf32>
    %131 = tpu.matmul %129, %130, %cst_141 {dimension_numbers = #tpu.dot_dimension_numbers<[1], [0], [0], [1], [0, 0, 1, 1], [], []>} : vector<8x128xf32>, vector<128x128xf32>, vector<8x128xf32> -> vector<8x128xf32>
    %c0_142 = arith.constant 0 : index
    %c0_143 = arith.constant 0 : index
    %132 = vector.load %arg13[%c0_142, %c0_143] : memref<1x128xf32, #tpu.memory_space<vmem>>, vector<1x128xf32>
    %133 = vector.broadcast %132 : vector<1x128xf32> to vector<8x128xf32>
    %134 = arith.addf %131, %133 : vector<8x128xf32>
    %c0_144 = arith.constant 0 : index
    %c0_145 = arith.constant 0 : index
    %135 = vector.load %arg14[%c0_144, %c0_145] : memref<128x128xf32, #tpu.memory_space<vmem>>, vector<128x128xf32>
    %cst_146 = arith.constant dense<0.000000e+00> : vector<8x128xf32>
    %136 = tpu.matmul %134, %135, %cst_146 {dimension_numbers = #tpu.dot_dimension_numbers<[1], [0], [0], [1], [0, 0, 1, 1], [], []>} : vector<8x128xf32>, vector<128x128xf32>, vector<8x128xf32> -> vector<8x128xf32>
    %c0_147 = arith.constant 0 : index
    %c0_148 = arith.constant 0 : index
    %137 = vector.load %arg15[%c0_147, %c0_148] : memref<1x128xf32, #tpu.memory_space<vmem>>, vector<1x128xf32>
    %138 = vector.broadcast %137 : vector<1x128xf32> to vector<8x128xf32>
    %139 = arith.addf %136, %138 : vector<8x128xf32>
    %c0_149 = arith.constant 0 : index
    %c0_150 = arith.constant 0 : index
    %140 = vector.load %arg16[%c0_149, %c0_150] : memref<8x128xf32, #tpu.memory_space<vmem>>, vector<8x128xf32>
    tpu.vector_store %arg16[%c0_149, %c0_150], %139 {strides = array<i32>} : memref<8x128xf32, #tpu.memory_space<vmem>>, vector<8x128xf32>,
    return
  }
}

</mosaic_0001>

<llo_original>
// kernel: lenet5_forward.1
$region0: #{lenet5_forward.1}
  #allocation0 [shape = 'u32[]', space=smem, size = 0x4, offset = 0x4, fixed_abs, tag = 'smem constant byte address 0x4 - core index']
  #allocation1 [shape = 'u32[144,128]{1,0:T(1,128)}', space=vmem, size = 0x12000, scoped, tag = 'internal scratch']
  #allocation2 [shape = 'f32[40,112]{1,0:T(8,128)}', space=vmem, size = 0x5000, scoped, tag = 'scratch operand']
  %s0 = inlined_call_operand.vmem [shape: f32[72,128], index: 0, kind: input, shape index: {}]
  %s1 = inlined_call_operand.vmem [shape: f32[5,128,224], index: 1, kind: input, shape index: {}]
  %s2 = inlined_call_operand.vmem [shape: f32[1,224], index: 2, kind: input, shape index: {}]
  %s3 = inlined_call_operand.vmem [shape: f32[2,224,112], index: 3, kind: input, shape index: {}]
  %s4 = inlined_call_operand.vmem [shape: f32[2,40,64], index: 4, kind: input, shape index: {}]
  %s5 = inlined_call_operand.vmem [shape: f32[5,112,160], index: 5, kind: input, shape index: {}]
  %s6 = inlined_call_operand.vmem [shape: f32[1,160], index: 6, kind: input, shape index: {}]
  %s7 = inlined_call_operand.vmem [shape: f32[2,160,80], index: 7, kind: input, shape index: {}]
  %s8 = inlined_call_operand.vmem [shape: f32[2,16,32], index: 8, kind: input, shape index: {}]
  %s9 = inlined_call_operand.vmem [shape: f32[5,8,16], index: 9, kind: input, shape index: {}]
  %s10 = inlined_call_operand.vmem [shape: f32[5,80,128], index: 10, kind: input, shape index: {}]
  %s11 = inlined_call_operand.vmem [shape: f32[1,128], index: 11, kind: input, shape index: {}]
  %s12 = inlined_call_operand.vmem [shape: f32[128,128], index: 12, kind: input, shape index: {}]
  %s13 = inlined_call_operand.vmem [shape: f32[1,128], index: 13, kind: input, shape index: {}]
  %s14 = inlined_call_operand.vmem [shape: f32[128,128], index: 14, kind: input, shape index: {}]
  %s15 = inlined_call_operand.vmem [shape: f32[1,128], index: 15, kind: input, shape index: {}]
  %s16 = inlined_call_operand.vmem [shape: f32[8,128], index: 16, kind: output, shape index: {}]
  %s17 = sld [smem:[#allocation0]]
  $region74: #{lenet5_forward.1} parent=0
    _
  %s19 = ssub.s32 1, %s17
  %s20 = scalar_select 0, %s19, %s17
  // Predicated region
  $region2: #{lenet5_forward.1} parent=0 // pred_check
    _
  $region3: #{lenet5_forward.1} parent=0 // pred_check_branch
    %22 = sbr.rel (0) target = $region5
  $region4: #{lenet5_forward.1} parent=0 // pred_region
    _
  $region5: #{lenet5_forward.1} parent=0 // pred_fallthru
    _
  // Predicated region
  $region6: #{lenet5_forward.1} parent=0 // pred_check
    _
  $region7: #{lenet5_forward.1} parent=0 // pred_check_branch
    %24 = sbr.rel (0) target = $region9
  $region8: #{lenet5_forward.1} parent=0 // pred_region
    _
  $region9: #{lenet5_forward.1} parent=0 // pred_fallthru
    _
  // Predicated region
  $region10: #{lenet5_forward.1} parent=0 // pred_check
    _
  $region11: #{lenet5_forward.1} parent=0 // pred_check_branch
    %26 = sbr.rel (0) target = $region13
  $region12: #{lenet5_forward.1} parent=0 // pred_region
    _
  $region13: #{lenet5_forward.1} parent=0 // pred_fallthru
    _
  // Predicated region
  $region14: #{lenet5_forward.1} parent=0 // pred_check
    _
  $region15: #{lenet5_forward.1} parent=0 // pred_check_branch
    %28 = sbr.rel (0) target = $region17
  $region16: #{lenet5_forward.1} parent=0 // pred_region
    _
  $region17: #{lenet5_forward.1} parent=0 // pred_fallthru
    _
  // Predicated region
  $region18: #{lenet5_forward.1} parent=0 // pred_check
    _
  $region19: #{lenet5_forward.1} parent=0 // pred_check_branch
    %30 = sbr.rel (0) target = $region21
  $region20: #{lenet5_forward.1} parent=0 // pred_region
    _
  $region21: #{lenet5_forward.1} parent=0 // pred_fallthru
    _
  // Predicated region
  $region22: #{lenet5_forward.1} parent=0 // pred_check
    _
  $region23: #{lenet5_forward.1} parent=0 // pred_check_branch
    %32 = sbr.rel (0) target = $region25
  $region24: #{lenet5_forward.1} parent=0 // pred_region
    _
  $region25: #{lenet5_forward.1} parent=0 // pred_fallthru
    _
  // Predicated region
  $region26: #{lenet5_forward.1} parent=0 // pred_check
    _
  $region27: #{lenet5_forward.1} parent=0 // pred_check_branch
    %34 = sbr.rel (0) target = $region29
  $region28: #{lenet5_forward.1} parent=0 // pred_region
    _
  $region29: #{lenet5_forward.1} parent=0 // pred_fallthru
    _
  // Predicated region
  $region30: #{lenet5_forward.1} parent=0 // pred_check
    _
  $region31: #{lenet5_forward.1} parent=0 // pred_check_branch
    %36 = sbr.rel (0) target = $region33
  $region32: #{lenet5_forward.1} parent=0 // pred_region
    _
  $region33: #{lenet5_forward.1} parent=0 // pred_fallthru
    _
  // Predicated region
  $region34: #{lenet5_forward.1} parent=0 // pred_check
    _
  $region35: #{lenet5_forward.1} parent=0 // pred_check_branch
    %38 = sbr.rel (0) target = $region37
  $region36: #{lenet5_forward.1} parent=0 // pred_region
    _
  $region37: #{lenet5_forward.1} parent=0 // pred_fallthru
    _
  // Predicated region
  $region38: #{lenet5_forward.1} parent=0 // pred_check
    _
  $region39: #{lenet5_forward.1} parent=0 // pred_check_branch
    %40 = sbr.rel (0) target = $region41
  $region40: #{lenet5_forward.1} parent=0 // pred_region
    _
  $region41: #{lenet5_forward.1} parent=0 // pred_fallthru
    _
  // Predicated region
  $region42: #{lenet5_forward.1} parent=0 // pred_check
    _
  $region43: #{lenet5_forward.1} parent=0 // pred_check_branch
    %42 = sbr.rel (0) target = $region45
  $region44: #{lenet5_forward.1} parent=0 // pred_region
    _
  $region45: #{lenet5_forward.1} parent=0 // pred_fallthru
    _
  // Predicated region
  $region46: #{lenet5_forward.1} parent=0 // pred_check
    _
  $region47: #{lenet5_forward.1} parent=0 // pred_check_branch
    %44 = sbr.rel (0) target = $region49
  $region48: #{lenet5_forward.1} parent=0 // pred_region
    _
  $region49: #{lenet5_forward.1} parent=0 // pred_fallthru
    _
  // Predicated region
  $region50: #{lenet5_forward.1} parent=0 // pred_check
    _
  $region51: #{lenet5_forward.1} parent=0 // pred_check_branch
    %46 = sbr.rel (0) target = $region53
  $region52: #{lenet5_forward.1} parent=0 // pred_region
    _
  $region53: #{lenet5_forward.1} parent=0 // pred_fallthru
    _
  // Predicated region
  $region54: #{lenet5_forward.1} parent=0 // pred_check
    _
  $region55: #{lenet5_forward.1} parent=0 // pred_check_branch
    %48 = sbr.rel (0) target = $region57
  $region56: #{lenet5_forward.1} parent=0 // pred_region
    _
  $region57: #{lenet5_forward.1} parent=0 // pred_fallthru
    _
  // Predicated region
  $region58: #{lenet5_forward.1} parent=0 // pred_check
    _
  $region59: #{lenet5_forward.1} parent=0 // pred_check_branch
    %50 = sbr.rel (0) target = $region61
  $region60: #{lenet5_forward.1} parent=0 // pred_region
    _
  $region61: #{lenet5_forward.1} parent=0 // pred_fallthru
    _
  // Predicated region
  $region62: #{lenet5_forward.1} parent=0 // pred_check
    _
  $region63: #{lenet5_forward.1} parent=0 // pred_check_branch
    %52 = sbr.rel (0) target = $region65
  $region64: #{lenet5_forward.1} parent=0 // pred_region
    _
  $region65: #{lenet5_forward.1} parent=0 // pred_fallthru
    _
  %v53 = vld [vmem:[%s0] sm:$0xff]
  %v54 = vld [vmem:[%s0 + $0x8] sm:$0xff]
  %v55 = vld [vmem:[%s0 + $0x10] sm:$0xff]
  %v56 = vld [vmem:[%s0 + $0x18] sm:$0xff]
  %v57 = vld [vmem:[%s0 + $0x20] sm:$0xff]
  %v58 = vld [vmem:[%s0 + $0x28] sm:$0xff]
  %v59 = vld [vmem:[%s0 + $0x30] sm:$0xff]
  %v60 = vld [vmem:[%s0 + $0x38] sm:$0xff]
  %v61 = vld [vmem:[%s1] sm:$0xff]
  %v62 = vld [vmem:[%s1 + $0x8] sm:$0xff]
  %v63 = vld [vmem:[%s1 + $0x10] sm:$0xff]
  %v64 = vld [vmem:[%s1 + $0x18] sm:$0xff]
  %v65 = vld [vmem:[%s1 + $0x20] sm:$0xff]
  %v66 = vld [vmem:[%s1 + $0x28] sm:$0xff]
  %v67 = vld [vmem:[%s1 + $0x30] sm:$0xff]
  %v68 = vld [vmem:[%s1 + $0x38] sm:$0xff]
  %v69 = vld [vmem:[%s1 + $0x40] sm:$0xff]
  %v70 = vld [vmem:[%s1 + $0x48] sm:$0xff]
  %v71 = vld [vmem:[%s1 + $0x50] sm:$0xff]
  %v72 = vld [vmem:[%s1 + $0x58] sm:$0xff]
  %v73 = vld [vmem:[%s1 + $0x60] sm:$0xff]
  %v74 = vld [vmem:[%s1 + $0x68] sm:$0xff]
  %v75 = vld [vmem:[%s1 + $0x70] sm:$0xff]
  %v76 = vld [vmem:[%s1 + $0x78] sm:$0xff]
  %v77 = vld [vmem:[%s1 + $0x80] sm:$0xff]
  %v78 = vld [vmem:[%s1 + $0x88] sm:$0xff]
  %v79 = vld [vmem:[%s1 + $0x90] sm:$0xff]
  %v80 = vld [vmem:[%s1 + $0x98] sm:$0xff]
  %v81 = vld [vmem:[%s1 + $0xa0] sm:$0xff]
  %v82 = vld [vmem:[%s1 + $0xa8] sm:$0xff]
  %v83 = vld [vmem:[%s1 + $0xb0] sm:$0xff]
  %v84 = vld [vmem:[%s1 + $0xb8] sm:$0xff]
  %v85 = vld [vmem:[%s1 + $0xc0] sm:$0xff]
  %v86 = vld [vmem:[%s1 + $0xc8] sm:$0xff]
  %v87 = vld [vmem:[%s1 + $0xd0] sm:$0xff]
  %v88 = vld [vmem:[%s1 + $0xd8] sm:$0xff]
  %v89 = vld [vmem:[%s1 + $0xe0] sm:$0xff]
  %v90 = vld [vmem:[%s1 + $0xe8] sm:$0xff]
  %v91 = vld [vmem:[%s1 + $0xf0] sm:$0xff]
  %v92 = vld [vmem:[%s1 + $0xf8] sm:$0xff]
  %v93 = vld [vmem:[%s0 + $0x1] sm:$0xff]
  %v94 = vld [vmem:[%s0 + $0x9] sm:$0xff]
  %v95 = vld [vmem:[%s0 + $0x11] sm:$0xff]
  %v96 = vld [vmem:[%s0 + $0x19] sm:$0xff]
  %v97 = vld [vmem:[%s0 + $0x21] sm:$0xff]
  %v98 = vld [vmem:[%s0 + $0x29] sm:$0xff]
  %v99 = vld [vmem:[%s0 + $0x31] sm:$0xff]
  %v100 = vld [vmem:[%s0 + $0x39] sm:$0xff]
  %s101 = scalar_lea.vmem %s1, 256
  %v102 = vld [vmem:[%s101] sm:$0xff]
  %v103 = vld [vmem:[%s101 + $0x8] sm:$0xff]
  %v104 = vld [vmem:[%s101 + $0x10] sm:$0xff]
  %v105 = vld [vmem:[%s101 + $0x18] sm:$0xff]
  %v106 = vld [vmem:[%s101 + $0x20] sm:$0xff]
  %v107 = vld [vmem:[%s101 + $0x28] sm:$0xff]
  %v108 = vld [vmem:[%s101 + $0x30] sm:$0xff]
  %v109 = vld [vmem:[%s101 + $0x38] sm:$0xff]
  %v110 = vld [vmem:[%s101 + $0x40] sm:$0xff]
  %v111 = vld [vmem:[%s101 + $0x48] sm:$0xff]
  %v112 = vld [vmem:[%s101 + $0x50] sm:$0xff]
  %v113 = vld [vmem:[%s101 + $0x58] sm:$0xff]
  %v114 = vld [vmem:[%s101 + $0x60] sm:$0xff]
  %v115 = vld [vmem:[%s101 + $0x68] sm:$0xff]
  %v116 = vld [vmem:[%s101 + $0x70] sm:$0xff]
  %v117 = vld [vmem:[%s101 + $0x78] sm:$0xff]
  %v118 = vld [vmem:[%s101 + $0x80] sm:$0xff]
  %v119 = vld [vmem:[%s101 + $0x88] sm:$0xff]
  %v120 = vld [vmem:[%s101 + $0x90] sm:$0xff]
  %v121 = vld [vmem:[%s101 + $0x98] sm:$0xff]
  %v122 = vld [vmem:[%s101 + $0xa0] sm:$0xff]
  %v123 = vld [vmem:[%s101 + $0xa8] sm:$0xff]
  %v124 = vld [vmem:[%s101 + $0xb0] sm:$0xff]
  %v125 = vld [vmem:[%s101 + $0xb8] sm:$0xff]
  %v126 = vld [vmem:[%s101 + $0xc0] sm:$0xff]
  %v127 = vld [vmem:[%s101 + $0xc8] sm:$0xff]
  %v128 = vld [vmem:[%s101 + $0xd0] sm:$0xff]
  %v129 = vld [vmem:[%s101 + $0xd8] sm:$0xff]
  %v130 = vld [vmem:[%s101 + $0xe0] sm:$0xff]
  %v131 = vld [vmem:[%s101 + $0xe8] sm:$0xff]
  %v132 = vld [vmem:[%s101 + $0xf0] sm:$0xff]
  %v133 = vld [vmem:[%s101 + $0xf8] sm:$0xff]
  %134 = vmatprep.subr.mxu0 %v103
  %135 = vmatpush1.msra.mxu0 %v102
  %136 = vmatprep.subr.mxu0 %v105
  %137 = vmatpush1.msra.mxu0 %v104
  %138 = vmatprep.subr.mxu0 %v107
  %139 = vmatpush1.msra.mxu0 %v106
  %140 = vmatprep.subr.mxu0 %v109
  %141 = vmatpush1.msra.mxu0 %v108
  %142 = vmatprep.subr.mxu0 %v111
  %143 = vmatpush1.msra.mxu0 %v110
  %144 = vmatprep.subr.mxu0 %v113
  %145 = vmatpush1.msra.mxu0 %v112
  %146 = vmatprep.subr.mxu0 %v115
  %147 = vmatpush1.msra.mxu0 %v114
  %148 = vmatprep.subr.mxu0 %v117
  %149 = vmatpush1.msra.mxu0 %v116
  %150 = vmatprep.subr.mxu0 %v119
  %151 = vmatpush1.msra.mxu0 %v118
  %152 = vmatprep.subr.mxu0 %v121
  %153 = vmatpush1.msra.mxu0 %v120
  %154 = vmatprep.subr.mxu0 %v123
  %155 = vmatpush1.msra.mxu0 %v122
  %156 = vmatprep.subr.mxu0 %v125
  %157 = vmatpush1.msra.mxu0 %v124
  %158 = vmatprep.subr.mxu0 %v127
  %159 = vmatpush1.msra.mxu0 %v126
  %160 = vmatprep.subr.mxu0 %v129
  %161 = vmatpush1.msra.mxu0 %v128
  %162 = vmatprep.subr.mxu0 %v131
  %163 = vmatpush1.msra.mxu0 %v130
  %164 = vmatprep.subr.mxu0 %v133
  %165 = vmatpush1.msra.mxu0 %v132
  %166 = vmatprep.subr.mxu0 0.0
  %167 = vmatpush1.msra.mxu0 0.0
  %168 = vmatprep.subr.mxu0 0.0
  %169 = vmatpush1.msra.mxu0 0.0
  %170 = vmatprep.subr.mxu0 0.0
  %171 = vmatpush1.msra.mxu0 0.0
  %172 = vmatprep.subr.mxu0 0.0
  %173 = vmatpush1.msra.mxu0 0.0
  %174 = vmatprep.subr.mxu0 0.0
  %175 = vmatpush1.msra.mxu0 0.0
  %176 = vmatprep.subr.mxu0 0.0
  %177 = vmatpush1.msra.mxu0 0.0
  %178 = vmatprep.subr.mxu0 0.0
  %179 = vmatpush1.msra.mxu0 0.0
  %180 = vmatprep.subr.mxu0 0.0
  %181 = vmatpush1.msra.mxu0 0.0
  %182 = vmatprep.subr.mxu0 0.0
  %183 = vmatpush1.msra.mxu0 0.0
  %184 = vmatprep.subr.mxu0 0.0
  %185 = vmatpush1.msra.mxu0 0.0
  %186 = vmatprep.subr.mxu0 0.0
  %187 = vmatpush1.msra.mxu0 0.0
  %188 = vmatprep.subr.mxu0 0.0
  %189 = vmatpush1.msra.mxu0 0.0
  %190 = vmatprep.subr.mxu0 0.0
  %191 = vmatpush1.msra.mxu0 0.0
  %192 = vmatprep.subr.mxu0 0.0
  %193 = vmatpush1.msra.mxu0 0.0
  %194 = vmatprep.subr.mxu0 0.0
  %195 = vmatpush1.msra.mxu0 0.0
  %196 = vmatprep.subr.mxu0 0.0
  %197 = vmatpush1.msra.mxu0 0.0
  %198 = vmatprep.mubr.f32.mxu0 0.0
  %199 = vmatmul.mubr.f32.gmra.mrb[0].mxu0 %v93
  %v200 = vpop.f32.mrb[0].mxu0
  %v201 = vadd.f32 0.0, %v200
  %v202 = vpop.f32.mrb[0].mxu0
  %v203 = vadd.f32 0.0, %v202
  %204 = vmatprep.mubr.f32.mxu0 0.0
  %205 = vmatmul.mubr.f32.gmra.mrb[0].mxu0 %v94
  %v206 = vpop.f32.mrb[0].mxu0
  %v207 = vadd.f32 0.0, %v206
  %v208 = vpop.f32.mrb[0].mxu0
  %v209 = vadd.f32 0.0, %v208
  %210 = vmatprep.mubr.f32.mxu0 0.0
  %211 = vmatmul.mubr.f32.gmra.mrb[0].mxu0 %v95
  %v212 = vpop.f32.mrb[0].mxu0
  %v213 = vadd.f32 0.0, %v212
  %v214 = vpop.f32.mrb[0].mxu0
  %v215 = vadd.f32 0.0, %v214
  %216 = vmatprep.mubr.f32.mxu0 0.0
  %217 = vmatmul.mubr.f32.gmra.mrb[0].mxu0 %v96
  %v218 = vpop.f32.mrb[0].mxu0
  %v219 = vadd.f32 0.0, %v218
  %v220 = vpop.f32.mrb[0].mxu0
  %v221 = vadd.f32 0.0, %v220
  %222 = vmatprep.mubr.f32.mxu0 0.0
  %223 = vmatmul.mubr.f32.gmra.mrb[0].mxu0 %v97
  %v224 = vpop.f32.mrb[0].mxu0
  %v225 = vadd.f32 0.0, %v224
  %v226 = vpop.f32.mrb[0].mxu0
  %v227 = vadd.f32 0.0, %v226
  %228 = vmatprep.mubr.f32.mxu0 0.0
  %229 = vmatmul.mubr.f32.gmra.mrb[0].mxu0 %v98
  %v230 = vpop.f32.mrb[0].mxu0
  %v231 = vadd.f32 0.0, %v230
  %v232 = vpop.f32.mrb[0].mxu0
  %v233 = vadd.f32 0.0, %v232
  %234 = vmatprep.mubr.f32.mxu0 0.0
  %235 = vmatmul.mubr.f32.gmra.mrb[0].mxu0 %v99
  %v236 = vpop.f32.mrb[0].mxu0
  %v237 = vadd.f32 0.0, %v236
  %v238 = vpop.f32.mrb[0].mxu0
  %v239 = vadd.f32 0.0, %v238
  %240 = vmatprep.mubr.f32.mxu0 0.0
  %241 = vmatmul.mubr.f32.gmra.mrb[0].mxu0 %v100
  %v242 = vpop.f32.mrb[0].mxu0
  %v243 = vadd.f32 0.0, %v242
  %v244 = vpop.f32.mrb[0].mxu0
  %v245 = vadd.f32 0.0, %v244
  %246 = vdwg.mxu0
  %247 = vmatprep.subr.mxu0 %v62
  %248 = vmatpush1.msra.mxu0 %v61
  %249 = vmatprep.subr.mxu0 %v64
  %250 = vmatpush1.msra.mxu0 %v63
  %251 = vmatprep.subr.mxu0 %v66
  %252 = vmatpush1.msra.mxu0 %v65
  %253 = vmatprep.subr.mxu0 %v68
  %254 = vmatpush1.msra.mxu0 %v67
  %255 = vmatprep.subr.mxu0 %v70
  %256 = vmatpush1.msra.mxu0 %v69
  %257 = vmatprep.subr.mxu0 %v72
  %258 = vmatpush1.msra.mxu0 %v71
  %259 = vmatprep.subr.mxu0 %v74
  %260 = vmatpush1.msra.mxu0 %v73
  %261 = vmatprep.subr.mxu0 %v76
  %262 = vmatpush1.msra.mxu0 %v75
  %263 = vmatprep.subr.mxu0 %v78
  %264 = vmatpush1.msra.mxu0 %v77
  %265 = vmatprep.subr.mxu0 %v80
  %266 = vmatpush1.msra.mxu0 %v79
  %267 = vmatprep.subr.mxu0 %v82
  %268 = vmatpush1.msra.mxu0 %v81
  %269 = vmatprep.subr.mxu0 %v84
  %270 = vmatpush1.msra.mxu0 %v83
  %271 = vmatprep.subr.mxu0 %v86
  %272 = vmatpush1.msra.mxu0 %v85
  %273 = vmatprep.subr.mxu0 %v88
  %274 = vmatpush1.msra.mxu0 %v87
  %275 = vmatprep.subr.mxu0 %v90
  %276 = vmatpush1.msra.mxu0 %v89
  %277 = vmatprep.subr.mxu0 %v92
  %278 = vmatpush1.msra.mxu0 %v91
  %279 = vmatprep.subr.mxu0 0.0
  %280 = vmatpush1.msra.mxu0 0.0
  %281 = vmatprep.subr.mxu0 0.0
  %282 = vmatpush1.msra.mxu0 0.0
  %283 = vmatprep.subr.mxu0 0.0
  %284 = vmatpush1.msra.mxu0 0.0
  %285 = vmatprep.subr.mxu0 0.0
  %286 = vmatpush1.msra.mxu0 0.0
  %287 = vmatprep.subr.mxu0 0.0
  %288 = vmatpush1.msra.mxu0 0.0
  %289 = vmatprep.subr.mxu0 0.0
  %290 = vmatpush1.msra.mxu0 0.0
  %291 = vmatprep.subr.mxu0 0.0
  %292 = vmatpush1.msra.mxu0 0.0
  %293 = vmatprep.subr.mxu0 0.0
  %294 = vmatpush1.msra.mxu0 0.0
  %295 = vmatprep.subr.mxu0 0.0
  %296 = vmatpush1.msra.mxu0 0.0
  %297 = vmatprep.subr.mxu0 0.0
  %298 = vmatpush1.msra.mxu0 0.0
  %299 = vmatprep.subr.mxu0 0.0
  %300 = vmatpush1.msra.mxu0 0.0
  %301 = vmatprep.subr.mxu0 0.0
  %302 = vmatpush1.msra.mxu0 0.0
  %303 = vmatprep.subr.mxu0 0.0
  %304 = vmatpush1.msra.mxu0 0.0
  %305 = vmatprep.subr.mxu0 0.0
  %306 = vmatpush1.msra.mxu0 0.0
  %307 = vmatprep.subr.mxu0 0.0
  %308 = vmatpush1.msra.mxu0 0.0
  %309 = vmatprep.subr.mxu0 0.0
  %310 = vmatpush1.msra.mxu0 0.0
  %311 = vmatprep.mubr.f32.mxu0 0.0
  %312 = vmatmul.mubr.f32.gmra.mrb[0].mxu0 %v53
  %v313 = vpop.f32.mrb[0].mxu0
  %v314 = vadd.f32 %v201, %v313
  %v315 = vpop.f32.mrb[0].mxu0
  %v316 = vadd.f32 %v203, %v315
  %317 = vmatprep.mubr.f32.mxu0 0.0
  %318 = vmatmul.mubr.f32.gmra.mrb[0].mxu0 %v54
  %v319 = vpop.f32.mrb[0].mxu0
  %v320 = vadd.f32 %v207, %v319
  %v321 = vpop.f32.mrb[0].mxu0
  %v322 = vadd.f32 %v209, %v321
  %323 = vmatprep.mubr.f32.mxu0 0.0
  %324 = vmatmul.mubr.f32.gmra.mrb[0].mxu0 %v55
  %v325 = vpop.f32.mrb[0].mxu0
  %v326 = vadd.f32 %v213, %v325
  %v327 = vpop.f32.mrb[0].mxu0
  %v328 = vadd.f32 %v215, %v327
  %329 = vmatprep.mubr.f32.mxu0 0.0
  %330 = vmatmul.mubr.f32.gmra.mrb[0].mxu0 %v56
  %v331 = vpop.f32.mrb[0].mxu0
  %v332 = vadd.f32 %v219, %v331
  %v333 = vpop.f32.mrb[0].mxu0
  %v334 = vadd.f32 %v221, %v333
  %335 = vmatprep.mubr.f32.mxu0 0.0
  %336 = vmatmul.mubr.f32.gmra.mrb[0].mxu0 %v57
  %v337 = vpop.f32.mrb[0].mxu0
  %v338 = vadd.f32 %v225, %v337
  %v339 = vpop.f32.mrb[0].mxu0
  %v340 = vadd.f32 %v227, %v339
  %341 = vmatprep.mubr.f32.mxu0 0.0
  %342 = vmatmul.mubr.f32.gmra.mrb[0].mxu0 %v58
  %v343 = vpop.f32.mrb[0].mxu0
  %v344 = vadd.f32 %v231, %v343
  %v345 = vpop.f32.mrb[0].mxu0
  %v346 = vadd.f32 %v233, %v345
  %347 = vmatprep.mubr.f32.mxu0 0.0
  %348 = vmatmul.mubr.f32.gmra.mrb[0].mxu0 %v59
  %v349 = vpop.f32.mrb[0].mxu0
  %v350 = vadd.f32 %v237, %v349
  %v351 = vpop.f32.mrb[0].mxu0
  %v352 = vadd.f32 %v239, %v351
  %353 = vmatprep.mubr.f32.mxu0 0.0
  %354 = vmatmul.mubr.f32.gmra.mrb[0].mxu0 %v60
  %v355 = vpop.f32.mrb[0].mxu0
  %v356 = vadd.f32 %v243, %v355
  %v357 = vpop.f32.mrb[0].mxu0
  %v358 = vadd.f32 %v245, %v357
  %359 = vdwg.mxu0
  %v360 = vld [vmem:[%s0 + $0x2] sm:$0xff]
  %v361 = vld [vmem:[%s0 + $0xa] sm:$0xff]
  %v362 = vld [vmem:[%s0 + $0x12] sm:$0xff]
  %v363 = vld [vmem:[%s0 + $0x1a] sm:$0xff]
  %v364 = vld [vmem:[%s0 + $0x22] sm:$0xff]
  %v365 = vld [vmem:[%s0 + $0x2a] sm:$0xff]
  %v366 = vld [vmem:[%s0 + $0x32] sm:$0xff]
  %v367 = vld [vmem:[%s0 + $0x3a] sm:$0xff]
  %s368 = scalar_lea.vmem %s1, 512
  %v369 = vld [vmem:[%s368] sm:$0xff]
  %v370 = vld [vmem:[%s368 + $0x8] sm:$0xff]
  %v371 = vld [vmem:[%s368 + $0x10] sm:$0xff]
  %v372 = vld [vmem:[%s368 + $0x18] sm:$0xff]
  %v373 = vld [vmem:[%s368 + $0x20] sm:$0xff]
  %v374 = vld [vmem:[%s368 + $0x28] sm:$0xff]
  %v375 = vld [vmem:[%s368 + $0x30] sm:$0xff]
  %v376 = vld [vmem:[%s368 + $0x38] sm:$0xff]
  %v377 = vld [vmem:[%s368 + $0x40] sm:$0xff]
  %v378 = vld [vmem:[%s368 + $0x48] sm:$0xff]
  %v379 = vld [vmem:[%s368 + $0x50] sm:$0xff]
  %v380 = vld [vmem:[%s368 + $0x58] sm:$0xff]
  %v381 = vld [vmem:[%s368 + $0x60] sm:$0xff]
  %v382 = vld [vmem:[%s368 + $0x68] sm:$0xff]
  %v383 = vld [vmem:[%s368 + $0x70] sm:$0xff]
  %v384 = vld [vmem:[%s368 + $0x78] sm:$0xff]
  %v385 = vld [vmem:[%s368 + $0x80] sm:$0xff]
  %v386 = vld [vmem:[%s368 + $0x88] sm:$0xff]
  %v387 = vld [vmem:[%s368 + $0x90] sm:$0xff]
  %v388 = vld [vmem:[%s368 + $0x98] sm:$0xff]
  %v389 = vld [vmem:[%s368 + $0xa0] sm:$0xff]
  %v390 = vld [vmem:[%s368 + $0xa8] sm:$0xff]
  %v391 = vld [vmem:[%s368 + $0xb0] sm:$0xff]
  %v392 = vld [vmem:[%s368 + $0xb8] sm:$0xff]
  %v393 = vld [vmem:[%s368 + $0xc0] sm:$0xff]
  %v394 = vld [vmem:[%s368 + $0xc8] sm:$0xff]
  %v395 = vld [vmem:[%s368 + $0xd0] sm:$0xff]
  %v396 = vld [vmem:[%s368 + $0xd8] sm:$0xff]
  %v397 = vld [vmem:[%s368 + $0xe0] sm:$0xff]
  %v398 = vld [vmem:[%s368 + $0xe8] sm:$0xff]
  %v399 = vld [vmem:[%s368 + $0xf0] sm:$0xff]
  %v400 = vld [vmem:[%s368 + $0xf8] sm:$0xff]
  %401 = vmatprep.subr.mxu0 %v370
  %402 = vmatpush1.msra.mxu0 %v369
  %403 = vmatprep.subr.mxu0 %v372
  %404 = vmatpush1.msra.mxu0 %v371
  %405 = vmatprep.subr.mxu0 %v374
  %406 = vmatpush1.msra.mxu0 %v373
  %407 = vmatprep.subr.mxu0 %v376
  %408 = vmatpush1.msra.mxu0 %v375
  %409 = vmatprep.subr.mxu0 %v378
  %410 = vmatpush1.msra.mxu0 %v377
  %411 = vmatprep.subr.mxu0 %v380
  %412 = vmatpush1.msra.mxu0 %v379
  %413 = vmatprep.subr.mxu0 %v382
  %414 = vmatpush1.msra.mxu0 %v381
  %415 = vmatprep.subr.mxu0 %v384
  %416 = vmatpush1.msra.mxu0 %v383
  %417 = vmatprep.subr.mxu0 %v386
  %418 = vmatpush1.msra.mxu0 %v385
  %419 = vmatprep.subr.mxu0 %v388
  %420 = vmatpush1.msra.mxu0 %v387
  %421 = vmatprep.subr.mxu0 %v390
  %422 = vmatpush1.msra.mxu0 %v389
  %423 = vmatprep.subr.mxu0 %v392
  %424 = vmatpush1.msra.mxu0 %v391
  %425 = vmatprep.subr.mxu0 %v394
  %426 = vmatpush1.msra.mxu0 %v393
  %427 = vmatprep.subr.mxu0 %v396
  %428 = vmatpush1.msra.mxu0 %v395
  %429 = vmatprep.subr.mxu0 %v398
  %430 = vmatpush1.msra.mxu0 %v397
  %431 = vmatprep.subr.mxu0 %v400
  %432 = vmatpush1.msra.mxu0 %v399
  %433 = vmatprep.subr.mxu0 0.0
  %434 = vmatpush1.msra.mxu0 0.0
  %435 = vmatprep.subr.mxu0 0.0
  %436 = vmatpush1.msra.mxu0 0.0
  %437 = vmatprep.subr.mxu0 0.0
  %438 = vmatpush1.msra.mxu0 0.0
  %439 = vmatprep.subr.mxu0 0.0
  %440 = vmatpush1.msra.mxu0 0.0
  %441 = vmatprep.subr.mxu0 0.0
  %442 = vmatpush1.msra.mxu0 0.0
  %443 = vmatprep.subr.mxu0 0.0
  %444 = vmatpush1.msra.mxu0 0.0
  %445 = vmatprep.subr.mxu0 0.0
  %446 = vmatpush1.msra.mxu0 0.0
  %447 = vmatprep.subr.mxu0 0.0
  %448 = vmatpush1.msra.mxu0 0.0
  %449 = vmatprep.subr.mxu0 0.0
  %450 = vmatpush1.msra.mxu0 0.0
  %451 = vmatprep.subr.mxu0 0.0
  %452 = vmatpush1.msra.mxu0 0.0
  %453 = vmatprep.subr.mxu0 0.0
  %454 = vmatpush1.msra.mxu0 0.0
  %455 = vmatprep.subr.mxu0 0.0
  %456 = vmatpush1.msra.mxu0 0.0
  %457 = vmatprep.subr.mxu0 0.0
  %458 = vmatpush1.msra.mxu0 0.0
  %459 = vmatprep.subr.mxu0 0.0
  %460 = vmatpush1.msra.mxu0 0.0
  %461 = vmatprep.subr.mxu0 0.0
  %462 = vmatpush1.msra.mxu0 0.0
  %463 = vmatprep.subr.mxu0 0.0
  %464 = vmatpush1.msra.mxu0 0.0
  %465 = vmatprep.mubr.f32.mxu0 0.0
  %466 = vmatmul.mubr.f32.gmra.mrb[0].mxu0 %v360
  %v467 = vpop.f32.mrb[0].mxu0
  %v468 = vadd.f32 0.0, %v467
  %v469 = vpop.f32.mrb[0].mxu0
  %v470 = vadd.f32 0.0, %v469
  %471 = vmatprep.mubr.f32.mxu0 0.0
  %472 = vmatmul.mubr.f32.gmra.mrb[0].mxu0 %v361
  %v473 = vpop.f32.mrb[0].mxu0
  %v474 = vadd.f32 0.0, %v473
  %v475 = vpop.f32.mrb[0].mxu0
  %v476 = vadd.f32 0.0, %v475
  %477 = vmatprep.mubr.f32.mxu0 0.0
  %478 = vmatmul.mubr.f32.gmra.mrb[0].mxu0 %v362
  %v479 = vpop.f32.mrb[0].mxu0
  %v480 = vadd.f32 0.0, %v479
  %v481 = vpop.f32.mrb[0].mxu0
  %v482 = vadd.f32 0.0, %v481
  %483 = vmatprep.mubr.f32.mxu0 0.0
  %484 = vmatmul.mubr.f32.gmra.mrb[0].mxu0 %v363
  %v485 = vpop.f32.mrb[0].mxu0
  %v486 = vadd.f32 0.0, %v485
  %v487 = vpop.f32.mrb[0].mxu0
  %v488 = vadd.f32 0.0, %v487
  %489 = vmatprep.mubr.f32.mxu0 0.0
  %490 = vmatmul.mubr.f32.gmra.mrb[0].mxu0 %v364
  %v491 = vpop.f32.mrb[0].mxu0
  %v492 = vadd.f32 0.0, %v491
  %v493 = vpop.f32.mrb[0].mxu0
  %v494 = vadd.f32 0.0, %v493
  %495 = vmatprep.mubr.f32.mxu0 0.0
  %496 = vmatmul.mubr.f32.gmra.mrb[0].mxu0 %v365
  %v497 = vpop.f32.mrb[0].mxu0
  %v498 = vadd.f32 0.0, %v497
  %v499 = vpop.f32.mrb[0].mxu0
  %v500 = vadd.f32 0.0, %v499
  %501 = vmatprep.mubr.f32.mxu0 0.0
  %502 = vmatmul.mubr.f32.gmra.mrb[0].mxu0 %v366
  %v503 = vpop.f32.mrb[0].mxu0
  %v504 = vadd.f32 0.0, %v503
  %v505 = vpop.f32.mrb[0].mxu0
  %v506 = vadd.f32 0.0, %v505
  %507 = vmatprep.mubr.f32.mxu0 0.0
  %508 = vmatmul.mubr.f32.gmra.mrb[0].mxu0 %v367
  %v509 = vpop.f32.mrb[0].mxu0
  %v510 = vadd.f32 0.0, %v509
  %v511 = vpop.f32.mrb[0].mxu0
  %v512 = vadd.f32 0.0, %v511
  %513 = vdwg.mxu0
  %v514 = vadd.f32 %v314, %v468
  %v515 = vadd.f32 %v316, %v470
  %v516 = vadd.f32 %v320, %v474
  %v517 = vadd.f32 %v322, %v476
  %v518 = vadd.f32 %v326, %v480
  %v519 = vadd.f32 %v328, %v482
  %v520 = vadd.f32 %v332, %v486
  %v521 = vadd.f32 %v334, %v488
  %v522 = vadd.f32 %v338, %v492
  %v523 = vadd.f32 %v340, %v494
  %v524 = vadd.f32 %v344, %v498
  %v525 = vadd.f32 %v346, %v500
  %v526 = vadd.f32 %v350, %v504
  %v527 = vadd.f32 %v352, %v506
  %v528 = vadd.f32 %v356, %v510
  %v529 = vadd.f32 %v358, %v512
  %v530 = vld [vmem:[%s0 + $0x3] sm:$0xff]
  %v531 = vld [vmem:[%s0 + $0xb] sm:$0xff]
  %v532 = vld [vmem:[%s0 + $0x13] sm:$0xff]
  %v533 = vld [vmem:[%s0 + $0x1b] sm:$0xff]
  %v534 = vld [vmem:[%s0 + $0x23] sm:$0xff]
  %v535 = vld [vmem:[%s0 + $0x2b] sm:$0xff]
  %v536 = vld [vmem:[%s0 + $0x33] sm:$0xff]
  %v537 = vld [vmem:[%s0 + $0x3b] sm:$0xff]
  %s538 = scalar_lea.vmem %s1, 768
  %v539 = vld [vmem:[%s538] sm:$0xff]
  %v540 = vld [vmem:[%s538 + $0x8] sm:$0xff]
  %v541 = vld [vmem:[%s538 + $0x10] sm:$0xff]
  %v542 = vld [vmem:[%s538 + $0x18] sm:$0xff]
  %v543 = vld [vmem:[%s538 + $0x20] sm:$0xff]
  %v544 = vld [vmem:[%s538 + $0x28] sm:$0xff]
  %v545 = vld [vmem:[%s538 + $0x30] sm:$0xff]
  %v546 = vld [vmem:[%s538 + $0x38] sm:$0xff]
  %v547 = vld [vmem:[%s538 + $0x40] sm:$0xff]
  %v548 = vld [vmem:[%s538 + $0x48] sm:$0xff]
  %v549 = vld [vmem:[%s538 + $0x50] sm:$0xff]
  %v550 = vld [vmem:[%s538 + $0x58] sm:$0xff]
  %v551 = vld [vmem:[%s538 + $0x60] sm:$0xff]
  %v552 = vld [vmem:[%s538 + $0x68] sm:$0xff]
  %v553 = vld [vmem:[%s538 + $0x70] sm:$0xff]
  %v554 = vld [vmem:[%s538 + $0x78] sm:$0xff]
  %v555 = vld [vmem:[%s538 + $0x80] sm:$0xff]
  %v556 = vld [vmem:[%s538 + $0x88] sm:$0xff]
  %v557 = vld [vmem:[%s538 + $0x90] sm:$0xff]
  %v558 = vld [vmem:[%s538 + $0x98] sm:$0xff]
  %v559 = vld [vmem:[%s538 + $0xa0] sm:$0xff]
  %v560 = vld [vmem:[%s538 + $0xa8] sm:$0xff]
  %v561 = vld [vmem:[%s538 + $0xb0] sm:$0xff]
  %v562 = vld [vmem:[%s538 + $0xb8] sm:$0xff]
  %v563 = vld [vmem:[%s538 + $0xc0] sm:$0xff]
  %v564 = vld [vmem:[%s538 + $0xc8] sm:$0xff]
  %v565 = vld [vmem:[%s538 + $0xd0] sm:$0xff]
  %v566 = vld [vmem:[%s538 + $0xd8] sm:$0xff]
  %v567 = vld [vmem:[%s538 + $0xe0] sm:$0xff]
  %v568 = vld [vmem:[%s538 + $0xe8] sm:$0xff]
  %v569 = vld [vmem:[%s538 + $0xf0] sm:$0xff]
  %v570 = vld [vmem:[%s538 + $0xf8] sm:$0xff]
  %571 = vmatprep.subr.mxu0 %v540
  %572 = vmatpush1.msra.mxu0 %v539
  %573 = vmatprep.subr.mxu0 %v542
  %574 = vmatpush1.msra.mxu0 %v541
  %575 = vmatprep.subr.mxu0 %v544
  %576 = vmatpush1.msra.mxu0 %v543
  %577 = vmatprep.subr.mxu0 %v546
  %578 = vmatpush1.msra.mxu0 %v545
  %579 = vmatprep.subr.mxu0 %v548
  %580 = vmatpush1.msra.mxu0 %v547
  %581 = vmatprep.subr.mxu0 %v550
  %582 = vmatpush1.msra.mxu0 %v549
  %583 = vmatprep.subr.mxu0 %v552
  %584 = vmatpush1.msra.mxu0 %v551
  %585 = vmatprep.subr.mxu0 %v554
  %586 = vmatpush1.msra.mxu0 %v553
  %587 = vmatprep.subr.mxu0 %v556
  %588 = vmatpush1.msra.mxu0 %v555
  %589 = vmatprep.subr.mxu0 %v558
  %590 = vmatpush1.msra.mxu0 %v557
  %591 = vmatprep.subr.mxu0 %v560
  %592 = vmatpush1.msra.mxu0 %v559
  %593 = vmatprep.subr.mxu0 %v562
  %594 = vmatpush1.msra.mxu0 %v561
  %595 = vmatprep.subr.mxu0 %v564
  %596 = vmatpush1.msra.mxu0 %v563
  %597 = vmatprep.subr.mxu0 %v566
  %598 = vmatpush1.msra.mxu0 %v565
  %599 = vmatprep.subr.mxu0 %v568
  %600 = vmatpush1.msra.mxu0 %v567
  %601 = vmatprep.subr.mxu0 %v570
  %602 = vmatpush1.msra.mxu0 %v569
  %603 = vmatprep.subr.mxu0 0.0
  %604 = vmatpush1.msra.mxu0 0.0
  %605 = vmatprep.subr.mxu0 0.0
  %606 = vmatpush1.msra.mxu0 0.0
  %607 = vmatprep.subr.mxu0 0.0
  %608 = vmatpush1.msra.mxu0 0.0
  %609 = vmatprep.subr.mxu0 0.0
  %610 = vmatpush1.msra.mxu0 0.0
  %611 = vmatprep.subr.mxu0 0.0
  %612 = vmatpush1.msra.mxu0 0.0
  %613 = vmatprep.subr.mxu0 0.0
  %614 = vmatpush1.msra.mxu0 0.0
  %615 = vmatprep.subr.mxu0 0.0
  %616 = vmatpush1.msra.mxu0 0.0
  %617 = vmatprep.subr.mxu0 0.0
  %618 = vmatpush1.msra.mxu0 0.0
  %619 = vmatprep.subr.mxu0 0.0
  %620 = vmatpush1.msra.mxu0 0.0
  %621 = vmatprep.subr.mxu0 0.0
  %622 = vmatpush1.msra.mxu0 0.0
  %623 = vmatprep.subr.mxu0 0.0
  %624 = vmatpush1.msra.mxu0 0.0
  %625 = vmatprep.subr.mxu0 0.0
  %626 = vmatpush1.msra.mxu0 0.0
  %627 = vmatprep.subr.mxu0 0.0
  %628 = vmatpush1.msra.mxu0 0.0
  %629 = vmatprep.subr.mxu0 0.0
  %630 = vmatpush1.msra.mxu0 0.0
  %631 = vmatprep.subr.mxu0 0.0
  %632 = vmatpush1.msra.mxu0 0.0
  %633 = vmatprep.subr.mxu0 0.0
  %634 = vmatpush1.msra.mxu0 0.0
  %635 = vmatprep.mubr.f32.mxu0 0.0
  %636 = vmatmul.mubr.f32.gmra.mrb[0].mxu0 %v530
  %v637 = vpop.f32.mrb[0].mxu0
  %v638 = vadd.f32 0.0, %v637
  %v639 = vpop.f32.mrb[0].mxu0
  %v640 = vadd.f32 0.0, %v639
  %641 = vmatprep.mubr.f32.mxu0 0.0
  %642 = vmatmul.mubr.f32.gmra.mrb[0].mxu0 %v531
  %v643 = vpop.f32.mrb[0].mxu0
  %v644 = vadd.f32 0.0, %v643
  %v645 = vpop.f32.mrb[0].mxu0
  %v646 = vadd.f32 0.0, %v645
  %647 = vmatprep.mubr.f32.mxu0 0.0
  %648 = vmatmul.mubr.f32.gmra.mrb[0].mxu0 %v532
  %v649 = vpop.f32.mrb[0].mxu0
  %v650 = vadd.f32 0.0, %v649
  %v651 = vpop.f32.mrb[0].mxu0
  %v652 = vadd.f32 0.0, %v651
  %653 = vmatprep.mubr.f32.mxu0 0.0
  %654 = vmatmul.mubr.f32.gmra.mrb[0].mxu0 %v533
  %v655 = vpop.f32.mrb[0].mxu0
  %v656 = vadd.f32 0.0, %v655
  %v657 = vpop.f32.mrb[0].mxu0
  %v658 = vadd.f32 0.0, %v657
  %659 = vmatprep.mubr.f32.mxu0 0.0
  %660 = vmatmul.mubr.f32.gmra.mrb[0].mxu0 %v534
  %v661 = vpop.f32.mrb[0].mxu0
  %v662 = vadd.f32 0.0, %v661
  %v663 = vpop.f32.mrb[0].mxu0
  %v664 = vadd.f32 0.0, %v663
  %665 = vmatprep.mubr.f32.mxu0 0.0
  %666 = vmatmul.mubr.f32.gmra.mrb[0].mxu0 %v535
  %v667 = vpop.f32.mrb[0].mxu0
  %v668 = vadd.f32 0.0, %v667
  %v669 = vpop.f32.mrb[0].mxu0
  %v670 = vadd.f32 0.0, %v669
  %671 = vmatprep.mubr.f32.mxu0 0.0
  %672 = vmatmul.mubr.f32.gmra.mrb[0].mxu0 %v536
  %v673 = vpop.f32.mrb[0].mxu0
  %v674 = vadd.f32 0.0, %v673
  %v675 = vpop.f32.mrb[0].mxu0
  %v676 = vadd.f32 0.0, %v675
  %677 = vmatprep.mubr.f32.mxu0 0.0
  %678 = vmatmul.mubr.f32.gmra.mrb[0].mxu0 %v537
  %v679 = vpop.f32.mrb[0].mxu0
  %v680 = vadd.f32 0.0, %v679
  %v681 = vpop.f32.mrb[0].mxu0
  %v682 = vadd.f32 0.0, %v681
  %683 = vdwg.mxu0
  %v684 = vadd.f32 %v514, %v638
  %v685 = vadd.f32 %v515, %v640
  %v686 = vadd.f32 %v516, %v644
  %v687 = vadd.f32 %v517, %v646
  %v688 = vadd.f32 %v518, %v650
  %v689 = vadd.f32 %v519, %v652
  %v690 = vadd.f32 %v520, %v656
  %v691 = vadd.f32 %v521, %v658
  %v692 = vadd.f32 %v522, %v662
  %v693 = vadd.f32 %v523, %v664
  %v694 = vadd.f32 %v524, %v668
  %v695 = vadd.f32 %v525, %v670
  %v696 = vadd.f32 %v526, %v674
  %v697 = vadd.f32 %v527, %v676
  %v698 = vadd.f32 %v528, %v680
  %v699 = vadd.f32 %v529, %v682
  %v700 = vld [vmem:[%s0 + $0x4] sm:$0xff]
  %v701 = vld [vmem:[%s0 + $0xc] sm:$0xff]
  %v702 = vld [vmem:[%s0 + $0x14] sm:$0xff]
  %v703 = vld [vmem:[%s0 + $0x1c] sm:$0xff]
  %v704 = vld [vmem:[%s0 + $0x24] sm:$0xff]
  %v705 = vld [vmem:[%s0 + $0x2c] sm:$0xff]
  %v706 = vld [vmem:[%s0 + $0x34] sm:$0xff]
  %v707 = vld [vmem:[%s0 + $0x3c] sm:$0xff]
  %s708 = scalar_lea.vmem %s1, 1024
  %v709 = vld [vmem:[%s708] sm:$0xff]
  %v710 = vld [vmem:[%s708 + $0x8] sm:$0xff]
  %v711 = vld [vmem:[%s708 + $0x10] sm:$0xff]
  %v712 = vld [vmem:[%s708 + $0x18] sm:$0xff]
  %v713 = vld [vmem:[%s708 + $0x20] sm:$0xff]
  %v714 = vld [vmem:[%s708 + $0x28] sm:$0xff]
  %v715 = vld [vmem:[%s708 + $0x30] sm:$0xff]
  %v716 = vld [vmem:[%s708 + $0x38] sm:$0xff]
  %v717 = vld [vmem:[%s708 + $0x40] sm:$0xff]
  %v718 = vld [vmem:[%s708 + $0x48] sm:$0xff]
  %v719 = vld [vmem:[%s708 + $0x50] sm:$0xff]
  %v720 = vld [vmem:[%s708 + $0x58] sm:$0xff]
  %v721 = vld [vmem:[%s708 + $0x60] sm:$0xff]
  %v722 = vld [vmem:[%s708 + $0x68] sm:$0xff]
  %v723 = vld [vmem:[%s708 + $0x70] sm:$0xff]
  %v724 = vld [vmem:[%s708 + $0x78] sm:$0xff]
  %v725 = vld [vmem:[%s708 + $0x80] sm:$0xff]
  %v726 = vld [vmem:[%s708 + $0x88] sm:$0xff]
  %v727 = vld [vmem:[%s708 + $0x90] sm:$0xff]
  %v728 = vld [vmem:[%s708 + $0x98] sm:$0xff]
  %v729 = vld [vmem:[%s708 + $0xa0] sm:$0xff]
  %v730 = vld [vmem:[%s708 + $0xa8] sm:$0xff]
  %v731 = vld [vmem:[%s708 + $0xb0] sm:$0xff]
  %v732 = vld [vmem:[%s708 + $0xb8] sm:$0xff]
  %v733 = vld [vmem:[%s708 + $0xc0] sm:$0xff]
  %v734 = vld [vmem:[%s708 + $0xc8] sm:$0xff]
  %v735 = vld [vmem:[%s708 + $0xd0] sm:$0xff]
  %v736 = vld [vmem:[%s708 + $0xd8] sm:$0xff]
  %v737 = vld [vmem:[%s708 + $0xe0] sm:$0xff]
  %v738 = vld [vmem:[%s708 + $0xe8] sm:$0xff]
  %v739 = vld [vmem:[%s708 + $0xf0] sm:$0xff]
  %v740 = vld [vmem:[%s708 + $0xf8] sm:$0xff]
  %741 = vmatprep.subr.mxu0 %v710
  %742 = vmatpush1.msra.mxu0 %v709
  %743 = vmatprep.subr.mxu0 %v712
  %744 = vmatpush1.msra.mxu0 %v711
  %745 = vmatprep.subr.mxu0 %v714
  %746 = vmatpush1.msra.mxu0 %v713
  %747 = vmatprep.subr.mxu0 %v716
  %748 = vmatpush1.msra.mxu0 %v715
  %749 = vmatprep.subr.mxu0 %v718
  %750 = vmatpush1.msra.mxu0 %v717
  %751 = vmatprep.subr.mxu0 %v720
  %752 = vmatpush1.msra.mxu0 %v719
  %753 = vmatprep.subr.mxu0 %v722
  %754 = vmatpush1.msra.mxu0 %v721
  %755 = vmatprep.subr.mxu0 %v724
  %756 = vmatpush1.msra.mxu0 %v723
  %757 = vmatprep.subr.mxu0 %v726
  %758 = vmatpush1.msra.mxu0 %v725
  %759 = vmatprep.subr.mxu0 %v728
  %760 = vmatpush1.msra.mxu0 %v727
  %761 = vmatprep.subr.mxu0 %v730
  %762 = vmatpush1.msra.mxu0 %v729
  %763 = vmatprep.subr.mxu0 %v732
  %764 = vmatpush1.msra.mxu0 %v731
  %765 = vmatprep.subr.mxu0 %v734
  %766 = vmatpush1.msra.mxu0 %v733
  %767 = vmatprep.subr.mxu0 %v736
  %768 = vmatpush1.msra.mxu0 %v735
  %769 = vmatprep.subr.mxu0 %v738
  %770 = vmatpush1.msra.mxu0 %v737
  %771 = vmatprep.subr.mxu0 %v740
  %772 = vmatpush1.msra.mxu0 %v739
  %773 = vmatprep.subr.mxu0 0.0
  %774 = vmatpush1.msra.mxu0 0.0
  %775 = vmatprep.subr.mxu0 0.0
  %776 = vmatpush1.msra.mxu0 0.0
  %777 = vmatprep.subr.mxu0 0.0
  %778 = vmatpush1.msra.mxu0 0.0
  %779 = vmatprep.subr.mxu0 0.0
  %780 = vmatpush1.msra.mxu0 0.0
  %781 = vmatprep.subr.mxu0 0.0
  %782 = vmatpush1.msra.mxu0 0.0
  %783 = vmatprep.subr.mxu0 0.0
  %784 = vmatpush1.msra.mxu0 0.0
  %785 = vmatprep.subr.mxu0 0.0
  %786 = vmatpush1.msra.mxu0 0.0
  %787 = vmatprep.subr.mxu0 0.0
  %788 = vmatpush1.msra.mxu0 0.0
  %789 = vmatprep.subr.mxu0 0.0
  %790 = vmatpush1.msra.mxu0 0.0
  %791 = vmatprep.subr.mxu0 0.0
  %792 = vmatpush1.msra.mxu0 0.0
  %793 = vmatprep.subr.mxu0 0.0
  %794 = vmatpush1.msra.mxu0 0.0
  %795 = vmatprep.subr.mxu0 0.0
  %796 = vmatpush1.msra.mxu0 0.0
  %797 = vmatprep.subr.mxu0 0.0
  %798 = vmatpush1.msra.mxu0 0.0
  %799 = vmatprep.subr.mxu0 0.0
  %800 = vmatpush1.msra.mxu0 0.0
  %801 = vmatprep.subr.mxu0 0.0
  %802 = vmatpush1.msra.mxu0 0.0
  %803 = vmatprep.subr.mxu0 0.0
  %804 = vmatpush1.msra.mxu0 0.0
  %805 = vmatprep.mubr.f32.mxu0 0.0
  %806 = vmatmul.mubr.f32.gmra.mrb[0].mxu0 %v700
  %v807 = vpop.f32.mrb[0].mxu0
  %v808 = vadd.f32 0.0, %v807
  %v809 = vpop.f32.mrb[0].mxu0
  %v810 = vadd.f32 0.0, %v809
  %811 = vmatprep.mubr.f32.mxu0 0.0
  %812 = vmatmul.mubr.f32.gmra.mrb[0].mxu0 %v701
  %v813 = vpop.f32.mrb[0].mxu0
  %v814 = vadd.f32 0.0, %v813
  %v815 = vpop.f32.mrb[0].mxu0
  %v816 = vadd.f32 0.0, %v815
  %817 = vmatprep.mubr.f32.mxu0 0.0
  %818 = vmatmul.mubr.f32.gmra.mrb[0].mxu0 %v702
  %v819 = vpop.f32.mrb[0].mxu0
  %v820 = vadd.f32 0.0, %v819
  %v821 = vpop.f32.mrb[0].mxu0
  %v822 = vadd.f32 0.0, %v821
  %823 = vmatprep.mubr.f32.mxu0 0.0
  %824 = vmatmul.mubr.f32.gmra.mrb[0].mxu0 %v703
  %v825 = vpop.f32.mrb[0].mxu0
  %v826 = vadd.f32 0.0, %v825
  %v827 = vpop.f32.mrb[0].mxu0
  %v828 = vadd.f32 0.0, %v827
  %829 = vmatprep.mubr.f32.mxu0 0.0
  %830 = vmatmul.mubr.f32.gmra.mrb[0].mxu0 %v704
  %v831 = vpop.f32.mrb[0].mxu0
  %v832 = vadd.f32 0.0, %v831
  %v833 = vpop.f32.mrb[0].mxu0
  %v834 = vadd.f32 0.0, %v833
  %835 = vmatprep.mubr.f32.mxu0 0.0
  %836 = vmatmul.mubr.f32.gmra.mrb[0].mxu0 %v705
  %v837 = vpop.f32.mrb[0].mxu0
  %v838 = vadd.f32 0.0, %v837
  %v839 = vpop.f32.mrb[0].mxu0
  %v840 = vadd.f32 0.0, %v839
  %841 = vmatprep.mubr.f32.mxu0 0.0
  %842 = vmatmul.mubr.f32.gmra.mrb[0].mxu0 %v706
  %v843 = vpop.f32.mrb[0].mxu0
  %v844 = vadd.f32 0.0, %v843
  %v845 = vpop.f32.mrb[0].mxu0
  %v846 = vadd.f32 0.0, %v845
  %847 = vmatprep.mubr.f32.mxu0 0.0
  %848 = vmatmul.mubr.f32.gmra.mrb[0].mxu0 %v707
  %v849 = vpop.f32.mrb[0].mxu0
  %v850 = vadd.f32 0.0, %v849
  %v851 = vpop.f32.mrb[0].mxu0
  %v852 = vadd.f32 0.0, %v851
  %853 = vdwg.mxu0
  %v854 = vadd.f32 %v684, %v808
  %v855 = vadd.f32 %v685, %v810
  %v856 = vadd.f32 %v686, %v814
  %v857 = vadd.f32 %v687, %v816
  %v858 = vadd.f32 %v688, %v820
  %v859 = vadd.f32 %v689, %v822
  %v860 = vadd.f32 %v690, %v826
  %v861 = vadd.f32 %v691, %v828
  %v862 = vadd.f32 %v692, %v832
  %v863 = vadd.f32 %v693, %v834
  %v864 = vadd.f32 %v694, %v838
  %v865 = vadd.f32 %v695, %v840
  %v866 = vadd.f32 %v696, %v844
  %v867 = vadd.f32 %v697, %v846
  %v868 = vadd.f32 %v698, %v850
  %v869 = vadd.f32 %v699, %v852
  %v870 = vld [vmem:[%s2] sm:$0x3]
  %v872 = vlaneseq
  %v873 = vshrl.u32 %v872, 7
  %v874 = vsub.s32 0, %v873
  %v875 = vrot.slane %v870, %v874
  %v876 = vlaneseq
  %v877 = vshrl.u32 %v876, 7
  %v878 = vsub.s32 1, %v877
  %v879 = vrot.slane %v870, %v878
  %v882 = vadd.f32 %v854, %v875
  %v883 = vadd.f32 %v855, %v879
  %v884 = vadd.f32 %v856, %v875
  %v885 = vadd.f32 %v857, %v879
  %v886 = vadd.f32 %v858, %v875
  %v887 = vadd.f32 %v859, %v879
  %v888 = vadd.f32 %v860, %v875
  %v889 = vadd.f32 %v861, %v879
  %v890 = vadd.f32 %v862, %v875
  %v891 = vadd.f32 %v863, %v879
  %v892 = vadd.f32 %v864, %v875
  %v893 = vadd.f32 %v865, %v879
  %v894 = vadd.f32 %v866, %v875
  %v895 = vadd.f32 %v867, %v879
  %v896 = vadd.f32 %v868, %v875
  %v897 = vadd.f32 %v869, %v879
  %v898 = vmax.f32 %v882, 0.0
  %v899 = vmax.f32 %v883, 0.0
  %v900 = vmax.f32 %v884, 0.0
  %v901 = vmax.f32 %v885, 0.0
  %v902 = vmax.f32 %v886, 0.0
  %v903 = vmax.f32 %v887, 0.0
  %v904 = vmax.f32 %v888, 0.0
  %v905 = vmax.f32 %v889, 0.0
  %v906 = vmax.f32 %v890, 0.0
  %v907 = vmax.f32 %v891, 0.0
  %v908 = vmax.f32 %v892, 0.0
  %v909 = vmax.f32 %v893, 0.0
  %v910 = vmax.f32 %v894, 0.0
  %v911 = vmax.f32 %v895, 0.0
  %v912 = vmax.f32 %v896, 0.0
  %v913 = vmax.f32 %v897, 0.0
  %v914 = vld [vmem:[%s3] sm:$0xff]
  %v915 = vld [vmem:[%s3 + $0x8] sm:$0xff]
  %v916 = vld [vmem:[%s3 + $0x10] sm:$0xff]
  %v917 = vld [vmem:[%s3 + $0x18] sm:$0xff]
  %v918 = vld [vmem:[%s3 + $0x20] sm:$0xff]
  %v919 = vld [vmem:[%s3 + $0x28] sm:$0xff]
  %v920 = vld [vmem:[%s3 + $0x30] sm:$0xff]
  %v921 = vld [vmem:[%s3 + $0x38] sm:$0xff]
  %v922 = vld [vmem:[%s3 + $0x40] sm:$0xff]
  %v923 = vld [vmem:[%s3 + $0x48] sm:$0xff]
  %v924 = vld [vmem:[%s3 + $0x50] sm:$0xff]
  %v925 = vld [vmem:[%s3 + $0x58] sm:$0xff]
  %v926 = vld [vmem:[%s3 + $0x60] sm:$0xff]
  %v927 = vld [vmem:[%s3 + $0x68] sm:$0xff]
  %v928 = vld [vmem:[%s3 + $0x70] sm:$0xff]
  %v929 = vld [vmem:[%s3 + $0x78] sm:$0xff]
  %v930 = vld [vmem:[%s3 + $0x80] sm:$0xff]
  %v931 = vld [vmem:[%s3 + $0x88] sm:$0xff]
  %v932 = vld [vmem:[%s3 + $0x90] sm:$0xff]
  %v933 = vld [vmem:[%s3 + $0x98] sm:$0xff]
  %v934 = vld [vmem:[%s3 + $0xa0] sm:$0xff]
  %v935 = vld [vmem:[%s3 + $0xa8] sm:$0xff]
  %v936 = vld [vmem:[%s3 + $0xb0] sm:$0xff]
  %v937 = vld [vmem:[%s3 + $0xb8] sm:$0xff]
  %v938 = vld [vmem:[%s3 + $0xc0] sm:$0xff]
  %v939 = vld [vmem:[%s3 + $0xc8] sm:$0xff]
  %v940 = vld [vmem:[%s3 + $0xd0] sm:$0xff]
  %v941 = vld [vmem:[%s3 + $0xd8] sm:$0xff]
  %vm942 = vcmask 785408
  %v944 = vsel %vm942, %v899, 0
  %v947 = vsel %vm942, %v901, 0
  %v950 = vsel %vm942, %v903, 0
  %v953 = vsel %vm942, %v905, 0
  %v956 = vsel %vm942, %v907, 0
  %v959 = vsel %vm942, %v909, 0
  %v962 = vsel %vm942, %v911, 0
  %v965 = vsel %vm942, %v913, 0
  %967 = vmatprep.subr.mxu0 0.0
  %968 = vmatpush1.msra.mxu0 %v914
  %969 = vmatprep.subr.mxu0 0.0
  %970 = vmatpush1.msra.mxu0 %v915
  %971 = vmatprep.subr.mxu0 0.0
  %972 = vmatpush1.msra.mxu0 %v916
  %973 = vmatprep.subr.mxu0 0.0
  %974 = vmatpush1.msra.mxu0 %v917
  %975 = vmatprep.subr.mxu0 0.0
  %976 = vmatpush1.msra.mxu0 %v918
  %977 = vmatprep.subr.mxu0 0.0
  %978 = vmatpush1.msra.mxu0 %v919
  %979 = vmatprep.subr.mxu0 0.0
  %980 = vmatpush1.msra.mxu0 %v920
  %981 = vmatprep.subr.mxu0 0.0
  %982 = vmatpush1.msra.mxu0 %v921
  %983 = vmatprep.subr.mxu0 0.0
  %984 = vmatpush1.msra.mxu0 %v922
  %985 = vmatprep.subr.mxu0 0.0
  %986 = vmatpush1.msra.mxu0 %v923
  %987 = vmatprep.subr.mxu0 0.0
  %988 = vmatpush1.msra.mxu0 %v924
  %989 = vmatprep.subr.mxu0 0.0
  %990 = vmatpush1.msra.mxu0 %v925
  %991 = vmatprep.subr.mxu0 0.0
  %992 = vmatpush1.msra.mxu0 %v926
  %993 = vmatprep.subr.mxu0 0.0
  %994 = vmatpush1.msra.mxu0 %v927
  %995 = vmatprep.subr.mxu0 0.0
  %996 = vmatpush1.msra.mxu0 %v928
  %997 = vmatprep.subr.mxu0 0.0
  %998 = vmatpush1.msra.mxu0 %v929
  %999 = vmatprep.subr.mxu0 0.0
  %1000 = vmatpush1.msra.mxu0 %v930
  %1001 = vmatprep.subr.mxu0 0.0
  %1002 = vmatpush1.msra.mxu0 %v931
  %1003 = vmatprep.subr.mxu0 0.0
  %1004 = vmatpush1.msra.mxu0 %v932
  %1005 = vmatprep.subr.mxu0 0.0
  %1006 = vmatpush1.msra.mxu0 %v933
  %1007 = vmatprep.subr.mxu0 0.0
  %1008 = vmatpush1.msra.mxu0 %v934
  %1009 = vmatprep.subr.mxu0 0.0
  %1010 = vmatpush1.msra.mxu0 %v935
  %1011 = vmatprep.subr.mxu0 0.0
  %1012 = vmatpush1.msra.mxu0 %v936
  %1013 = vmatprep.subr.mxu0 0.0
  %1014 = vmatpush1.msra.mxu0 %v937
  %1015 = vmatprep.subr.mxu0 0.0
  %1016 = vmatpush1.msra.mxu0 %v938
  %1017 = vmatprep.subr.mxu0 0.0
  %1018 = vmatpush1.msra.mxu0 %v939
  %1019 = vmatprep.subr.mxu0 0.0
  %1020 = vmatpush1.msra.mxu0 %v940
  %1021 = vmatprep.subr.mxu0 0.0
  %1022 = vmatpush1.msra.mxu0 %v941
  %1023 = vmatprep.subr.mxu0 0.0
  %1024 = vmatpush1.msra.mxu0 0.0
  %1025 = vmatprep.subr.mxu0 0.0
  %1026 = vmatpush1.msra.mxu0 0.0
  %1027 = vmatprep.subr.mxu0 0.0
  %1028 = vmatpush1.msra.mxu0 0.0
  %1029 = vmatprep.subr.mxu0 0.0
  %1030 = vmatpush1.msra.mxu0 0.0
  %1031 = vmatprep.mubr.f32.mxu0 %v944
  %1032 = vmatmul.mubr.f32.gmra.mrb[0].mxu0 %v898
  %v1033 = vpop.f32.mrb[0].mxu0
  %v1034 = vadd.f32 0.0, %v1033
  %v1035 = vpop.f32.mrb[0].mxu0
  %1036 = vmatprep.mubr.f32.mxu0 %v947
  %1037 = vmatmul.mubr.f32.gmra.mrb[0].mxu0 %v900
  %v1038 = vpop.f32.mrb[0].mxu0
  %v1039 = vadd.f32 0.0, %v1038
  %v1040 = vpop.f32.mrb[0].mxu0
  %1041 = vmatprep.mubr.f32.mxu0 %v950
  %1042 = vmatmul.mubr.f32.gmra.mrb[0].mxu0 %v902
  %v1043 = vpop.f32.mrb[0].mxu0
  %v1044 = vadd.f32 0.0, %v1043
  %v1045 = vpop.f32.mrb[0].mxu0
  %1046 = vmatprep.mubr.f32.mxu0 %v953
  %1047 = vmatmul.mubr.f32.gmra.mrb[0].mxu0 %v904
  %v1048 = vpop.f32.mrb[0].mxu0
  %v1049 = vadd.f32 0.0, %v1048
  %v1050 = vpop.f32.mrb[0].mxu0
  %1051 = vmatprep.mubr.f32.mxu0 %v956
  %1052 = vmatmul.mubr.f32.gmra.mrb[0].mxu0 %v906
  %v1053 = vpop.f32.mrb[0].mxu0
  %v1054 = vadd.f32 0.0, %v1053
  %v1055 = vpop.f32.mrb[0].mxu0
  %1056 = vmatprep.mubr.f32.mxu0 %v959
  %1057 = vmatmul.mubr.f32.gmra.mrb[0].mxu0 %v908
  %v1058 = vpop.f32.mrb[0].mxu0
  %v1059 = vadd.f32 0.0, %v1058
  %v1060 = vpop.f32.mrb[0].mxu0
  %1061 = vmatprep.mubr.f32.mxu0 %v962
  %1062 = vmatmul.mubr.f32.gmra.mrb[0].mxu0 %v910
  %v1063 = vpop.f32.mrb[0].mxu0
  %v1064 = vadd.f32 0.0, %v1063
  %v1065 = vpop.f32.mrb[0].mxu0
  %1066 = vmatprep.mubr.f32.mxu0 %v965
  %1067 = vmatmul.mubr.f32.gmra.mrb[0].mxu0 %v912
  %v1068 = vpop.f32.mrb[0].mxu0
  %v1069 = vadd.f32 0.0, %v1068
  %v1070 = vpop.f32.mrb[0].mxu0
  %1071 = vdwg.mxu0
  %s1072 = scalar_lea.vmem %s3, 224
  %v1073 = vld [vmem:[%s1072] sm:$0xff]
  %v1074 = vld [vmem:[%s1072 + $0x8] sm:$0xff]
  %v1075 = vld [vmem:[%s1072 + $0x10] sm:$0xff]
  %v1076 = vld [vmem:[%s1072 + $0x18] sm:$0xff]
  %v1077 = vld [vmem:[%s1072 + $0x20] sm:$0xff]
  %v1078 = vld [vmem:[%s1072 + $0x28] sm:$0xff]
  %v1079 = vld [vmem:[%s1072 + $0x30] sm:$0xff]
  %v1080 = vld [vmem:[%s1072 + $0x38] sm:$0xff]
  %v1081 = vld [vmem:[%s1072 + $0x40] sm:$0xff]
  %v1082 = vld [vmem:[%s1072 + $0x48] sm:$0xff]
  %v1083 = vld [vmem:[%s1072 + $0x50] sm:$0xff]
  %v1084 = vld [vmem:[%s1072 + $0x58] sm:$0xff]
  %v1085 = vld [vmem:[%s1072 + $0x60] sm:$0xff]
  %v1086 = vld [vmem:[%s1072 + $0x68] sm:$0xff]
  %v1087 = vld [vmem:[%s1072 + $0x70] sm:$0xff]
  %v1088 = vld [vmem:[%s1072 + $0x78] sm:$0xff]
  %v1089 = vld [vmem:[%s1072 + $0x80] sm:$0xff]
  %v1090 = vld [vmem:[%s1072 + $0x88] sm:$0xff]
  %v1091 = vld [vmem:[%s1072 + $0x90] sm:$0xff]
  %v1092 = vld [vmem:[%s1072 + $0x98] sm:$0xff]
  %v1093 = vld [vmem:[%s1072 + $0xa0] sm:$0xff]
  %v1094 = vld [vmem:[%s1072 + $0xa8] sm:$0xff]
  %v1095 = vld [vmem:[%s1072 + $0xb0] sm:$0xff]
  %v1096 = vld [vmem:[%s1072 + $0xb8] sm:$0xff]
  %v1097 = vld [vmem:[%s1072 + $0xc0] sm:$0xff]
  %v1098 = vld [vmem:[%s1072 + $0xc8] sm:$0xff]
  %v1099 = vld [vmem:[%s1072 + $0xd0] sm:$0xff]
  %v1100 = vld [vmem:[%s1072 + $0xd8] sm:$0xff]
  %1101 = vmatprep.subr.mxu0 0.0
  %1102 = vmatpush1.msra.mxu0 %v1073
  %1103 = vmatprep.subr.mxu0 0.0
  %1104 = vmatpush1.msra.mxu0 %v1074
  %1105 = vmatprep.subr.mxu0 0.0
  %1106 = vmatpush1.msra.mxu0 %v1075
  %1107 = vmatprep.subr.mxu0 0.0
  %1108 = vmatpush1.msra.mxu0 %v1076
  %1109 = vmatprep.subr.mxu0 0.0
  %1110 = vmatpush1.msra.mxu0 %v1077
  %1111 = vmatprep.subr.mxu0 0.0
  %1112 = vmatpush1.msra.mxu0 %v1078
  %1113 = vmatprep.subr.mxu0 0.0
  %1114 = vmatpush1.msra.mxu0 %v1079
  %1115 = vmatprep.subr.mxu0 0.0
  %1116 = vmatpush1.msra.mxu0 %v1080
  %1117 = vmatprep.subr.mxu0 0.0
  %1118 = vmatpush1.msra.mxu0 %v1081
  %1119 = vmatprep.subr.mxu0 0.0
  %1120 = vmatpush1.msra.mxu0 %v1082
  %1121 = vmatprep.subr.mxu0 0.0
  %1122 = vmatpush1.msra.mxu0 %v1083
  %1123 = vmatprep.subr.mxu0 0.0
  %1124 = vmatpush1.msra.mxu0 %v1084
  %1125 = vmatprep.subr.mxu0 0.0
  %1126 = vmatpush1.msra.mxu0 %v1085
  %1127 = vmatprep.subr.mxu0 0.0
  %1128 = vmatpush1.msra.mxu0 %v1086
  %1129 = vmatprep.subr.mxu0 0.0
  %1130 = vmatpush1.msra.mxu0 %v1087
  %1131 = vmatprep.subr.mxu0 0.0
  %1132 = vmatpush1.msra.mxu0 %v1088
  %1133 = vmatprep.subr.mxu0 0.0
  %1134 = vmatpush1.msra.mxu0 %v1089
  %1135 = vmatprep.subr.mxu0 0.0
  %1136 = vmatpush1.msra.mxu0 %v1090
  %1137 = vmatprep.subr.mxu0 0.0
  %1138 = vmatpush1.msra.mxu0 %v1091
  %1139 = vmatprep.subr.mxu0 0.0
  %1140 = vmatpush1.msra.mxu0 %v1092
  %1141 = vmatprep.subr.mxu0 0.0
  %1142 = vmatpush1.msra.mxu0 %v1093
  %1143 = vmatprep.subr.mxu0 0.0
  %1144 = vmatpush1.msra.mxu0 %v1094
  %1145 = vmatprep.subr.mxu0 0.0
  %1146 = vmatpush1.msra.mxu0 %v1095
  %1147 = vmatprep.subr.mxu0 0.0
  %1148 = vmatpush1.msra.mxu0 %v1096
  %1149 = vmatprep.subr.mxu0 0.0
  %1150 = vmatpush1.msra.mxu0 %v1097
  %1151 = vmatprep.subr.mxu0 0.0
  %1152 = vmatpush1.msra.mxu0 %v1098
  %1153 = vmatprep.subr.mxu0 0.0
  %1154 = vmatpush1.msra.mxu0 %v1099
  %1155 = vmatprep.subr.mxu0 0.0
  %1156 = vmatpush1.msra.mxu0 %v1100
  %1157 = vmatprep.subr.mxu0 0.0
  %1158 = vmatpush1.msra.mxu0 0.0
  %1159 = vmatprep.subr.mxu0 0.0
  %1160 = vmatpush1.msra.mxu0 0.0
  %1161 = vmatprep.subr.mxu0 0.0
  %1162 = vmatpush1.msra.mxu0 0.0
  %1163 = vmatprep.subr.mxu0 0.0
  %1164 = vmatpush1.msra.mxu0 0.0
  %1165 = vmatprep.mubr.f32.mxu0 %v944
  %1166 = vmatmul.mubr.f32.gmra.mrb[0].mxu0 %v898
  %v1167 = vpop.f32.mrb[0].mxu0
  %v1168 = vadd.f32 0.0, %v1167
  %v1169 = vpop.f32.mrb[0].mxu0
  %1170 = vmatprep.mubr.f32.mxu0 %v947
  %1171 = vmatmul.mubr.f32.gmra.mrb[0].mxu0 %v900
  %v1172 = vpop.f32.mrb[0].mxu0
  %v1173 = vadd.f32 0.0, %v1172
  %v1174 = vpop.f32.mrb[0].mxu0
  %1175 = vmatprep.mubr.f32.mxu0 %v950
  %1176 = vmatmul.mubr.f32.gmra.mrb[0].mxu0 %v902
  %v1177 = vpop.f32.mrb[0].mxu0
  %v1178 = vadd.f32 0.0, %v1177
  %v1179 = vpop.f32.mrb[0].mxu0
  %1180 = vmatprep.mubr.f32.mxu0 %v953
  %1181 = vmatmul.mubr.f32.gmra.mrb[0].mxu0 %v904
  %v1182 = vpop.f32.mrb[0].mxu0
  %v1183 = vadd.f32 0.0, %v1182
  %v1184 = vpop.f32.mrb[0].mxu0
  %1185 = vmatprep.mubr.f32.mxu0 %v956
  %1186 = vmatmul.mubr.f32.gmra.mrb[0].mxu0 %v906
  %v1187 = vpop.f32.mrb[0].mxu0
  %v1188 = vadd.f32 0.0, %v1187
  %v1189 = vpop.f32.mrb[0].mxu0
  %1190 = vmatprep.mubr.f32.mxu0 %v959
  %1191 = vmatmul.mubr.f32.gmra.mrb[0].mxu0 %v908
  %v1192 = vpop.f32.mrb[0].mxu0
  %v1193 = vadd.f32 0.0, %v1192
  %v1194 = vpop.f32.mrb[0].mxu0
  %1195 = vmatprep.mubr.f32.mxu0 %v962
  %1196 = vmatmul.mubr.f32.gmra.mrb[0].mxu0 %v910
  %v1197 = vpop.f32.mrb[0].mxu0
  %v1198 = vadd.f32 0.0, %v1197
  %v1199 = vpop.f32.mrb[0].mxu0
  %1200 = vmatprep.mubr.f32.mxu0 %v965
  %1201 = vmatmul.mubr.f32.gmra.mrb[0].mxu0 %v912
  %v1202 = vpop.f32.mrb[0].mxu0
  %v1203 = vadd.f32 0.0, %v1202
  %v1204 = vpop.f32.mrb[0].mxu0
  %1205 = vdwg.mxu0
  %v1206 = vmax.f32 %v1034, %v1168
  %v1207 = vmax.f32 %v1039, %v1173
  %v1208 = vmax.f32 %v1044, %v1178
  %v1209 = vmax.f32 %v1049, %v1183
  %v1210 = vmax.f32 %v1054, %v1188
  %v1211 = vmax.f32 %v1059, %v1193
  %v1212 = vmax.f32 %v1064, %v1198
  %v1213 = vmax.f32 %v1069, %v1203
  %v1214 = vld [vmem:[%s4] sm:$0xff]
  %v1215 = vld [vmem:[%s4 + $0x8] sm:$0xff]
  %v1216 = vld [vmem:[%s4 + $0x10] sm:$0xff]
  %v1217 = vld [vmem:[%s4 + $0x18] sm:$0xff]
  %v1218 = vld [vmem:[%s4 + $0x20] sm:$0xff]
  %vm1219 = vcmask 523264
  %v1221 = vsel %vm1219, %v1214, 0
  %v1224 = vsel %vm1219, %v1215, 0
  %v1227 = vsel %vm1219, %v1216, 0
  %v1230 = vsel %vm1219, %v1217, 0
  %v1233 = vsel %vm1219, %v1218, 0
  %1235 = vmatprep.subr.mxu0 0.0
  %1236 = vmatpush1.msra.mxu0 %v1206
  %1237 = vmatprep.subr.mxu0 0.0
  %1238 = vmatpush1.msra.mxu0 %v1207
  %1239 = vmatprep.subr.mxu0 0.0
  %1240 = vmatpush1.msra.mxu0 %v1208
  %1241 = vmatprep.subr.mxu0 0.0
  %1242 = vmatpush1.msra.mxu0 %v1209
  %1243 = vmatprep.subr.mxu0 0.0
  %1244 = vmatpush1.msra.mxu0 %v1210
  %1245 = vmatprep.subr.mxu0 0.0
  %1246 = vmatpush1.msra.mxu0 %v1211
  %1247 = vmatprep.subr.mxu0 0.0
  %1248 = vmatpush1.msra.mxu0 %v1212
  %1249 = vmatprep.subr.mxu0 0.0
  %1250 = vmatpush1.msra.mxu0 %v1213
  %1251 = vmatprep.subr.mxu0 0.0
  %1252 = vmatpush1.msra.mxu0 0.0
  %1253 = vmatprep.subr.mxu0 0.0
  %1254 = vmatpush1.msra.mxu0 0.0
  %1255 = vmatprep.subr.mxu0 0.0
  %1256 = vmatpush1.msra.mxu0 0.0
  %1257 = vmatprep.subr.mxu0 0.0
  %1258 = vmatpush1.msra.mxu0 0.0
  %1259 = vmatprep.subr.mxu0 0.0
  %1260 = vmatpush1.msra.mxu0 0.0
  %1261 = vmatprep.subr.mxu0 0.0
  %1262 = vmatpush1.msra.mxu0 0.0
  %1263 = vmatprep.subr.mxu0 0.0
  %1264 = vmatpush1.msra.mxu0 0.0
  %1265 = vmatprep.subr.mxu0 0.0
  %1266 = vmatpush1.msra.mxu0 0.0
  %1267 = vmatprep.subr.mxu0 0.0
  %1268 = vmatpush1.msra.mxu0 0.0
  %1269 = vmatprep.subr.mxu0 0.0
  %1270 = vmatpush1.msra.mxu0 0.0
  %1271 = vmatprep.subr.mxu0 0.0
  %1272 = vmatpush1.msra.mxu0 0.0
  %1273 = vmatprep.subr.mxu0 0.0
  %1274 = vmatpush1.msra.mxu0 0.0
  %1275 = vmatprep.subr.mxu0 0.0
  %1276 = vmatpush1.msra.mxu0 0.0
  %1277 = vmatprep.subr.mxu0 0.0
  %1278 = vmatpush1.msra.mxu0 0.0
  %1279 = vmatprep.subr.mxu0 0.0
  %1280 = vmatpush1.msra.mxu0 0.0
  %1281 = vmatprep.subr.mxu0 0.0
  %1282 = vmatpush1.msra.mxu0 0.0
  %1283 = vmatprep.subr.mxu0 0.0
  %1284 = vmatpush1.msra.mxu0 0.0
  %1285 = vmatprep.subr.mxu0 0.0
  %1286 = vmatpush1.msra.mxu0 0.0
  %1287 = vmatprep.subr.mxu0 0.0
  %1288 = vmatpush1.msra.mxu0 0.0
  %1289 = vmatprep.subr.mxu0 0.0
  %1290 = vmatpush1.msra.mxu0 0.0
  %1291 = vmatprep.subr.mxu0 0.0
  %1292 = vmatpush1.msra.mxu0 0.0
  %1293 = vmatprep.subr.mxu0 0.0
  %1294 = vmatpush1.msra.mxu0 0.0
  %1295 = vmatprep.subr.mxu0 0.0
  %1296 = vmatpush1.msra.mxu0 0.0
  %1297 = vmatprep.subr.mxu0 0.0
  %1298 = vmatpush1.msra.mxu0 0.0
  %1299 = vmatprep.mubr.f32.mxu0 0.0
  %1300 = vmatmul.mubr.f32.gmra.mrb[0].mxu0 %v1221
  %v1301 = vpop.f32.mrb[0].mxu0
  %v1302 = vadd.f32 0.0, %v1301
  %v1303 = vpop.f32.mrb[0].mxu0
  %1304 = vmatprep.mubr.f32.mxu0 0.0
  %1305 = vmatmul.mubr.f32.gmra.mrb[0].mxu0 %v1224
  %v1306 = vpop.f32.mrb[0].mxu0
  %v1307 = vadd.f32 0.0, %v1306
  %v1308 = vpop.f32.mrb[0].mxu0
  %1309 = vmatprep.mubr.f32.mxu0 0.0
  %1310 = vmatmul.mubr.f32.gmra.mrb[0].mxu0 %v1227
  %v1311 = vpop.f32.mrb[0].mxu0
  %v1312 = vadd.f32 0.0, %v1311
  %v1313 = vpop.f32.mrb[0].mxu0
  %1314 = vmatprep.mubr.f32.mxu0 0.0
  %1315 = vmatmul.mubr.f32.gmra.mrb[0].mxu0 %v1230
  %v1316 = vpop.f32.mrb[0].mxu0
  %v1317 = vadd.f32 0.0, %v1316
  %v1318 = vpop.f32.mrb[0].mxu0
  %1319 = vmatprep.mubr.f32.mxu0 0.0
  %1320 = vmatmul.mubr.f32.gmra.mrb[0].mxu0 %v1233
  %v1321 = vpop.f32.mrb[0].mxu0
  %v1322 = vadd.f32 0.0, %v1321
  %v1323 = vpop.f32.mrb[0].mxu0
  %1324 = vdwg.mxu0
  %s1325 = scalar_lea.vmem %s4, 40
  %v1326 = vld [vmem:[%s1325] sm:$0xff]
  %v1327 = vld [vmem:[%s1325 + $0x8] sm:$0xff]
  %v1328 = vld [vmem:[%s1325 + $0x10] sm:$0xff]
  %v1329 = vld [vmem:[%s1325 + $0x18] sm:$0xff]
  %v1330 = vld [vmem:[%s1325 + $0x20] sm:$0xff]
  %v1332 = vsel %vm1219, %v1326, 0
  %v1335 = vsel %vm1219, %v1327, 0
  %v1338 = vsel %vm1219, %v1328, 0
  %v1341 = vsel %vm1219, %v1329, 0
  %v1344 = vsel %vm1219, %v1330, 0
  %1346 = vmatprep.subr.mxu0 0.0
  %1347 = vmatpush1.msra.mxu0 %v1206
  %1348 = vmatprep.subr.mxu0 0.0
  %1349 = vmatpush1.msra.mxu0 %v1207
  %1350 = vmatprep.subr.mxu0 0.0
  %1351 = vmatpush1.msra.mxu0 %v1208
  %1352 = vmatprep.subr.mxu0 0.0
  %1353 = vmatpush1.msra.mxu0 %v1209
  %1354 = vmatprep.subr.mxu0 0.0
  %1355 = vmatpush1.msra.mxu0 %v1210
  %1356 = vmatprep.subr.mxu0 0.0
  %1357 = vmatpush1.msra.mxu0 %v1211
  %1358 = vmatprep.subr.mxu0 0.0
  %1359 = vmatpush1.msra.mxu0 %v1212
  %1360 = vmatprep.subr.mxu0 0.0
  %1361 = vmatpush1.msra.mxu0 %v1213
  %1362 = vmatprep.subr.mxu0 0.0
  %1363 = vmatpush1.msra.mxu0 0.0
  %1364 = vmatprep.subr.mxu0 0.0
  %1365 = vmatpush1.msra.mxu0 0.0
  %1366 = vmatprep.subr.mxu0 0.0
  %1367 = vmatpush1.msra.mxu0 0.0
  %1368 = vmatprep.subr.mxu0 0.0
  %1369 = vmatpush1.msra.mxu0 0.0
  %1370 = vmatprep.subr.mxu0 0.0
  %1371 = vmatpush1.msra.mxu0 0.0
  %1372 = vmatprep.subr.mxu0 0.0
  %1373 = vmatpush1.msra.mxu0 0.0
  %1374 = vmatprep.subr.mxu0 0.0
  %1375 = vmatpush1.msra.mxu0 0.0
  %1376 = vmatprep.subr.mxu0 0.0
  %1377 = vmatpush1.msra.mxu0 0.0
  %1378 = vmatprep.subr.mxu0 0.0
  %1379 = vmatpush1.msra.mxu0 0.0
  %1380 = vmatprep.subr.mxu0 0.0
  %1381 = vmatpush1.msra.mxu0 0.0
  %1382 = vmatprep.subr.mxu0 0.0
  %1383 = vmatpush1.msra.mxu0 0.0
  %1384 = vmatprep.subr.mxu0 0.0
  %1385 = vmatpush1.msra.mxu0 0.0
  %1386 = vmatprep.subr.mxu0 0.0
  %1387 = vmatpush1.msra.mxu0 0.0
  %1388 = vmatprep.subr.mxu0 0.0
  %1389 = vmatpush1.msra.mxu0 0.0
  %1390 = vmatprep.subr.mxu0 0.0
  %1391 = vmatpush1.msra.mxu0 0.0
  %1392 = vmatprep.subr.mxu0 0.0
  %1393 = vmatpush1.msra.mxu0 0.0
  %1394 = vmatprep.subr.mxu0 0.0
  %1395 = vmatpush1.msra.mxu0 0.0
  %1396 = vmatprep.subr.mxu0 0.0
  %1397 = vmatpush1.msra.mxu0 0.0
  %1398 = vmatprep.subr.mxu0 0.0
  %1399 = vmatpush1.msra.mxu0 0.0
  %1400 = vmatprep.subr.mxu0 0.0
  %1401 = vmatpush1.msra.mxu0 0.0
  %1402 = vmatprep.subr.mxu0 0.0
  %1403 = vmatpush1.msra.mxu0 0.0
  %1404 = vmatprep.subr.mxu0 0.0
  %1405 = vmatpush1.msra.mxu0 0.0
  %1406 = vmatprep.subr.mxu0 0.0
  %1407 = vmatpush1.msra.mxu0 0.0
  %1408 = vmatprep.subr.mxu0 0.0
  %1409 = vmatpush1.msra.mxu0 0.0
  %1410 = vmatprep.mubr.f32.mxu0 0.0
  %1411 = vmatmul.mubr.f32.gmra.mrb[0].mxu0 %v1332
  %v1412 = vpop.f32.mrb[0].mxu0
  %v1413 = vadd.f32 0.0, %v1412
  %v1414 = vpop.f32.mrb[0].mxu0
  %1415 = vmatprep.mubr.f32.mxu0 0.0
  %1416 = vmatmul.mubr.f32.gmra.mrb[0].mxu0 %v1335
  %v1417 = vpop.f32.mrb[0].mxu0
  %v1418 = vadd.f32 0.0, %v1417
  %v1419 = vpop.f32.mrb[0].mxu0
  %1420 = vmatprep.mubr.f32.mxu0 0.0
  %1421 = vmatmul.mubr.f32.gmra.mrb[0].mxu0 %v1338
  %v1422 = vpop.f32.mrb[0].mxu0
  %v1423 = vadd.f32 0.0, %v1422
  %v1424 = vpop.f32.mrb[0].mxu0
  %1425 = vmatprep.mubr.f32.mxu0 0.0
  %1426 = vmatmul.mubr.f32.gmra.mrb[0].mxu0 %v1341
  %v1427 = vpop.f32.mrb[0].mxu0
  %v1428 = vadd.f32 0.0, %v1427
  %v1429 = vpop.f32.mrb[0].mxu0
  %1430 = vmatprep.mubr.f32.mxu0 0.0
  %1431 = vmatmul.mubr.f32.gmra.mrb[0].mxu0 %v1344
  %v1432 = vpop.f32.mrb[0].mxu0
  %v1433 = vadd.f32 0.0, %v1432
  %v1434 = vpop.f32.mrb[0].mxu0
  %1435 = vdwg.mxu0
  %v1436 = vmax.f32 %v1302, %v1413
  %v1437 = vmax.f32 %v1307, %v1418
  %v1438 = vmax.f32 %v1312, %v1423
  %v1439 = vmax.f32 %v1317, %v1428
  %v1440 = vmax.f32 %v1322, %v1433
  %vm1441 = vcmask 916480
  %1442 = vst.msk [vmem:[#allocation2] sm:$0xff] %vm1441, %v1436
  %1443 = vst.msk [vmem:[#allocation2 + $0x8] sm:$0xff] %vm1441, %v1437
  %1444 = vst.msk [vmem:[#allocation2 + $0x10] sm:$0xff] %vm1441, %v1438
  %1445 = vst.msk [vmem:[#allocation2 + $0x18] sm:$0xff] %vm1441, %v1439
  %1446 = vst.msk [vmem:[#allocation2 + $0x20] sm:$0xff] %vm1441, %v1440
  %v1447 = vld [vmem:[#allocation2] sm:$0xff]
  %v1448 = vld [vmem:[#allocation2 + $0x8] sm:$0xff]
  %v1449 = vld [vmem:[#allocation2 + $0x10] sm:$0xff]
  %v1450 = vld [vmem:[#allocation2 + $0x18] sm:$0xff]
  %v1451 = vld [vmem:[%s5] sm:$0xff]
  %v1452 = vld [vmem:[%s5 + $0x8] sm:$0xff]
  %v1453 = vld [vmem:[%s5 + $0x10] sm:$0xff]
  %v1454 = vld [vmem:[%s5 + $0x18] sm:$0xff]
  %v1455 = vld [vmem:[%s5 + $0x20] sm:$0xff]
  %v1456 = vld [vmem:[%s5 + $0x28] sm:$0xff]
  %v1457 = vld [vmem:[%s5 + $0x30] sm:$0xff]
  %v1458 = vld [vmem:[%s5 + $0x38] sm:$0xff]
  %v1459 = vld [vmem:[%s5 + $0x40] sm:$0xff]
  %v1460 = vld [vmem:[%s5 + $0x48] sm:$0xff]
  %v1461 = vld [vmem:[%s5 + $0x50] sm:$0xff]
  %v1462 = vld [vmem:[%s5 + $0x58] sm:$0xff]
  %v1463 = vld [vmem:[%s5 + $0x60] sm:$0xff]
  %v1464 = vld [vmem:[%s5 + $0x68] sm:$0xff]
  %v1465 = vld [vmem:[%s5 + $0x70] sm:$0xff]
  %v1466 = vld [vmem:[%s5 + $0x78] sm:$0xff]
  %v1467 = vld [vmem:[%s5 + $0x80] sm:$0xff]
  %v1468 = vld [vmem:[%s5 + $0x88] sm:$0xff]
  %v1469 = vld [vmem:[%s5 + $0x90] sm:$0xff]
  %v1470 = vld [vmem:[%s5 + $0x98] sm:$0xff]
  %v1471 = vld [vmem:[%s5 + $0xa0] sm:$0xff]
  %v1472 = vld [vmem:[%s5 + $0xa8] sm:$0xff]
  %v1473 = vld [vmem:[%s5 + $0xb0] sm:$0xff]
  %v1474 = vld [vmem:[%s5 + $0xb8] sm:$0xff]
  %v1475 = vld [vmem:[%s5 + $0xc0] sm:$0xff]
  %v1476 = vld [vmem:[%s5 + $0xc8] sm:$0xff]
  %v1477 = vld [vmem:[%s5 + $0xd0] sm:$0xff]
  %v1478 = vld [vmem:[%s5 + $0xd8] sm:$0xff]
  %v1479 = vld [vmem:[#allocation2 + $0x1] sm:$0xff]
  %v1480 = vld [vmem:[#allocation2 + $0x9] sm:$0xff]
  %v1481 = vld [vmem:[#allocation2 + $0x11] sm:$0xff]
  %v1482 = vld [vmem:[#allocation2 + $0x19] sm:$0xff]
  %s1483 = scalar_lea.vmem %s5, 224
  %v1484 = vld [vmem:[%s1483] sm:$0xff]
  %v1485 = vld [vmem:[%s1483 + $0x8] sm:$0xff]
  %v1486 = vld [vmem:[%s1483 + $0x10] sm:$0xff]
  %v1487 = vld [vmem:[%s1483 + $0x18] sm:$0xff]
  %v1488 = vld [vmem:[%s1483 + $0x20] sm:$0xff]
  %v1489 = vld [vmem:[%s1483 + $0x28] sm:$0xff]
  %v1490 = vld [vmem:[%s1483 + $0x30] sm:$0xff]
  %v1491 = vld [vmem:[%s1483 + $0x38] sm:$0xff]
  %v1492 = vld [vmem:[%s1483 + $0x40] sm:$0xff]
  %v1493 = vld [vmem:[%s1483 + $0x48] sm:$0xff]
  %v1494 = vld [vmem:[%s1483 + $0x50] sm:$0xff]
  %v1495 = vld [vmem:[%s1483 + $0x58] sm:$0xff]
  %v1496 = vld [vmem:[%s1483 + $0x60] sm:$0xff]
  %v1497 = vld [vmem:[%s1483 + $0x68] sm:$0xff]
  %v1498 = vld [vmem:[%s1483 + $0x70] sm:$0xff]
  %v1499 = vld [vmem:[%s1483 + $0x78] sm:$0xff]
  %v1500 = vld [vmem:[%s1483 + $0x80] sm:$0xff]
  %v1501 = vld [vmem:[%s1483 + $0x88] sm:$0xff]
  %v1502 = vld [vmem:[%s1483 + $0x90] sm:$0xff]
  %v1503 = vld [vmem:[%s1483 + $0x98] sm:$0xff]
  %v1504 = vld [vmem:[%s1483 + $0xa0] sm:$0xff]
  %v1505 = vld [vmem:[%s1483 + $0xa8] sm:$0xff]
  %v1506 = vld [vmem:[%s1483 + $0xb0] sm:$0xff]
  %v1507 = vld [vmem:[%s1483 + $0xb8] sm:$0xff]
  %v1508 = vld [vmem:[%s1483 + $0xc0] sm:$0xff]
  %v1509 = vld [vmem:[%s1483 + $0xc8] sm:$0xff]
  %v1510 = vld [vmem:[%s1483 + $0xd0] sm:$0xff]
  %v1511 = vld [vmem:[%s1483 + $0xd8] sm:$0xff]
  %v1513 = vsel %vm1441, %v1479, 0
  %v1516 = vsel %vm1441, %v1480, 0
  %v1519 = vsel %vm1441, %v1481, 0
  %v1522 = vsel %vm1441, %v1482, 0
  %1524 = vmatprep.subr.mxu0 %v1485
  %1525 = vmatpush1.msra.mxu0 %v1484
  %1526 = vmatprep.subr.mxu0 %v1487
  %1527 = vmatpush1.msra.mxu0 %v1486
  %1528 = vmatprep.subr.mxu0 %v1489
  %1529 = vmatpush1.msra.mxu0 %v1488
  %1530 = vmatprep.subr.mxu0 %v1491
  %1531 = vmatpush1.msra.mxu0 %v1490
  %1532 = vmatprep.subr.mxu0 %v1493
  %1533 = vmatpush1.msra.mxu0 %v1492
  %1534 = vmatprep.subr.mxu0 %v1495
  %1535 = vmatpush1.msra.mxu0 %v1494
  %1536 = vmatprep.subr.mxu0 %v1497
  %1537 = vmatpush1.msra.mxu0 %v1496
  %1538 = vmatprep.subr.mxu0 %v1499
  %1539 = vmatpush1.msra.mxu0 %v1498
  %1540 = vmatprep.subr.mxu0 %v1501
  %1541 = vmatpush1.msra.mxu0 %v1500
  %1542 = vmatprep.subr.mxu0 %v1503
  %1543 = vmatpush1.msra.mxu0 %v1502
  %1544 = vmatprep.subr.mxu0 %v1505
  %1545 = vmatpush1.msra.mxu0 %v1504
  %1546 = vmatprep.subr.mxu0 %v1507
  %1547 = vmatpush1.msra.mxu0 %v1506
  %1548 = vmatprep.subr.mxu0 %v1509
  %1549 = vmatpush1.msra.mxu0 %v1508
  %1550 = vmatprep.subr.mxu0 %v1511
  %1551 = vmatpush1.msra.mxu0 %v1510
  %1552 = vmatprep.subr.mxu0 0.0
  %1553 = vmatpush1.msra.mxu0 0.0
  %1554 = vmatprep.subr.mxu0 0.0
  %1555 = vmatpush1.msra.mxu0 0.0
  %1556 = vmatprep.subr.mxu0 0.0
  %1557 = vmatpush1.msra.mxu0 0.0
  %1558 = vmatprep.subr.mxu0 0.0
  %1559 = vmatpush1.msra.mxu0 0.0
  %1560 = vmatprep.subr.mxu0 0.0
  %1561 = vmatpush1.msra.mxu0 0.0
  %1562 = vmatprep.subr.mxu0 0.0
  %1563 = vmatpush1.msra.mxu0 0.0
  %1564 = vmatprep.subr.mxu0 0.0
  %1565 = vmatpush1.msra.mxu0 0.0
  %1566 = vmatprep.subr.mxu0 0.0
  %1567 = vmatpush1.msra.mxu0 0.0
  %1568 = vmatprep.subr.mxu0 0.0
  %1569 = vmatpush1.msra.mxu0 0.0
  %1570 = vmatprep.subr.mxu0 0.0
  %1571 = vmatpush1.msra.mxu0 0.0
  %1572 = vmatprep.subr.mxu0 0.0
  %1573 = vmatpush1.msra.mxu0 0.0
  %1574 = vmatprep.subr.mxu0 0.0
  %1575 = vmatpush1.msra.mxu0 0.0
  %1576 = vmatprep.subr.mxu0 0.0
  %1577 = vmatpush1.msra.mxu0 0.0
  %1578 = vmatprep.subr.mxu0 0.0
  %1579 = vmatpush1.msra.mxu0 0.0
  %1580 = vmatprep.subr.mxu0 0.0
  %1581 = vmatpush1.msra.mxu0 0.0
  %1582 = vmatprep.subr.mxu0 0.0
  %1583 = vmatpush1.msra.mxu0 0.0
  %1584 = vmatprep.subr.mxu0 0.0
  %1585 = vmatpush1.msra.mxu0 0.0
  %1586 = vmatprep.subr.mxu0 0.0
  %1587 = vmatpush1.msra.mxu0 0.0
  %1588 = vmatprep.mubr.f32.mxu0 0.0
  %1589 = vmatmul.mubr.f32.gmra.mrb[0].mxu0 %v1513
  %v1590 = vpop.f32.mrb[0].mxu0
  %v1591 = vadd.f32 0.0, %v1590
  %v1592 = vpop.f32.mrb[0].mxu0
  %v1593 = vadd.f32 0.0, %v1592
  %1594 = vmatprep.mubr.f32.mxu0 0.0
  %1595 = vmatmul.mubr.f32.gmra.mrb[0].mxu0 %v1516
  %v1596 = vpop.f32.mrb[0].mxu0
  %v1597 = vadd.f32 0.0, %v1596
  %v1598 = vpop.f32.mrb[0].mxu0
  %v1599 = vadd.f32 0.0, %v1598
  %1600 = vmatprep.mubr.f32.mxu0 0.0
  %1601 = vmatmul.mubr.f32.gmra.mrb[0].mxu0 %v1519
  %v1602 = vpop.f32.mrb[0].mxu0
  %v1603 = vadd.f32 0.0, %v1602
  %v1604 = vpop.f32.mrb[0].mxu0
  %v1605 = vadd.f32 0.0, %v1604
  %1606 = vmatprep.mubr.f32.mxu0 0.0
  %1607 = vmatmul.mubr.f32.gmra.mrb[0].mxu0 %v1522
  %v1608 = vpop.f32.mrb[0].mxu0
  %v1609 = vadd.f32 0.0, %v1608
  %v1610 = vpop.f32.mrb[0].mxu0
  %v1611 = vadd.f32 0.0, %v1610
  %1612 = vdwg.mxu0
  %v1614 = vsel %vm1441, %v1447, 0
  %v1617 = vsel %vm1441, %v1448, 0
  %v1620 = vsel %vm1441, %v1449, 0
  %v1623 = vsel %vm1441, %v1450, 0
  %1625 = vmatprep.subr.mxu0 %v1452
  %1626 = vmatpush1.msra.mxu0 %v1451
  %1627 = vmatprep.subr.mxu0 %v1454
  %1628 = vmatpush1.msra.mxu0 %v1453
  %1629 = vmatprep.subr.mxu0 %v1456
  %1630 = vmatpush1.msra.mxu0 %v1455
  %1631 = vmatprep.subr.mxu0 %v1458
  %1632 = vmatpush1.msra.mxu0 %v1457
  %1633 = vmatprep.subr.mxu0 %v1460
  %1634 = vmatpush1.msra.mxu0 %v1459
  %1635 = vmatprep.subr.mxu0 %v1462
  %1636 = vmatpush1.msra.mxu0 %v1461
  %1637 = vmatprep.subr.mxu0 %v1464
  %1638 = vmatpush1.msra.mxu0 %v1463
  %1639 = vmatprep.subr.mxu0 %v1466
  %1640 = vmatpush1.msra.mxu0 %v1465
  %1641 = vmatprep.subr.mxu0 %v1468
  %1642 = vmatpush1.msra.mxu0 %v1467
  %1643 = vmatprep.subr.mxu0 %v1470
  %1644 = vmatpush1.msra.mxu0 %v1469
  %1645 = vmatprep.subr.mxu0 %v1472
  %1646 = vmatpush1.msra.mxu0 %v1471
  %1647 = vmatprep.subr.mxu0 %v1474
  %1648 = vmatpush1.msra.mxu0 %v1473
  %1649 = vmatprep.subr.mxu0 %v1476
  %1650 = vmatpush1.msra.mxu0 %v1475
  %1651 = vmatprep.subr.mxu0 %v1478
  %1652 = vmatpush1.msra.mxu0 %v1477
  %1653 = vmatprep.subr.mxu0 0.0
  %1654 = vmatpush1.msra.mxu0 0.0
  %1655 = vmatprep.subr.mxu0 0.0
  %1656 = vmatpush1.msra.mxu0 0.0
  %1657 = vmatprep.subr.mxu0 0.0
  %1658 = vmatpush1.msra.mxu0 0.0
  %1659 = vmatprep.subr.mxu0 0.0
  %1660 = vmatpush1.msra.mxu0 0.0
  %1661 = vmatprep.subr.mxu0 0.0
  %1662 = vmatpush1.msra.mxu0 0.0
  %1663 = vmatprep.subr.mxu0 0.0
  %1664 = vmatpush1.msra.mxu0 0.0
  %1665 = vmatprep.subr.mxu0 0.0
  %1666 = vmatpush1.msra.mxu0 0.0
  %1667 = vmatprep.subr.mxu0 0.0
  %1668 = vmatpush1.msra.mxu0 0.0
  %1669 = vmatprep.subr.mxu0 0.0
  %1670 = vmatpush1.msra.mxu0 0.0
  %1671 = vmatprep.subr.mxu0 0.0
  %1672 = vmatpush1.msra.mxu0 0.0
  %1673 = vmatprep.subr.mxu0 0.0
  %1674 = vmatpush1.msra.mxu0 0.0
  %1675 = vmatprep.subr.mxu0 0.0
  %1676 = vmatpush1.msra.mxu0 0.0
  %1677 = vmatprep.subr.mxu0 0.0
  %1678 = vmatpush1.msra.mxu0 0.0
  %1679 = vmatprep.subr.mxu0 0.0
  %1680 = vmatpush1.msra.mxu0 0.0
  %1681 = vmatprep.subr.mxu0 0.0
  %1682 = vmatpush1.msra.mxu0 0.0
  %1683 = vmatprep.subr.mxu0 0.0
  %1684 = vmatpush1.msra.mxu0 0.0
  %1685 = vmatprep.subr.mxu0 0.0
  %1686 = vmatpush1.msra.mxu0 0.0
  %1687 = vmatprep.subr.mxu0 0.0
  %1688 = vmatpush1.msra.mxu0 0.0
  %1689 = vmatprep.mubr.f32.mxu0 0.0
  %1690 = vmatmul.mubr.f32.gmra.mrb[0].mxu0 %v1614
  %v1691 = vpop.f32.mrb[0].mxu0
  %v1692 = vadd.f32 %v1591, %v1691
  %v1693 = vpop.f32.mrb[0].mxu0
  %v1694 = vadd.f32 %v1593, %v1693
  %1695 = vmatprep.mubr.f32.mxu0 0.0
  %1696 = vmatmul.mubr.f32.gmra.mrb[0].mxu0 %v1617
  %v1697 = vpop.f32.mrb[0].mxu0
  %v1698 = vadd.f32 %v1597, %v1697
  %v1699 = vpop.f32.mrb[0].mxu0
  %v1700 = vadd.f32 %v1599, %v1699
  %1701 = vmatprep.mubr.f32.mxu0 0.0
  %1702 = vmatmul.mubr.f32.gmra.mrb[0].mxu0 %v1620
  %v1703 = vpop.f32.mrb[0].mxu0
  %v1704 = vadd.f32 %v1603, %v1703
  %v1705 = vpop.f32.mrb[0].mxu0
  %v1706 = vadd.f32 %v1605, %v1705
  %1707 = vmatprep.mubr.f32.mxu0 0.0
  %1708 = vmatmul.mubr.f32.gmra.mrb[0].mxu0 %v1623
  %v1709 = vpop.f32.mrb[0].mxu0
  %v1710 = vadd.f32 %v1609, %v1709
  %v1711 = vpop.f32.mrb[0].mxu0
  %v1712 = vadd.f32 %v1611, %v1711
  %1713 = vdwg.mxu0
  %v1714 = vld [vmem:[#allocation2 + $0x2] sm:$0xff]
  %v1715 = vld [vmem:[#allocation2 + $0xa] sm:$0xff]
  %v1716 = vld [vmem:[#allocation2 + $0x12] sm:$0xff]
  %v1717 = vld [vmem:[#allocation2 + $0x1a] sm:$0xff]
  %s1718 = scalar_lea.vmem %s5, 448
  %v1719 = vld [vmem:[%s1718] sm:$0xff]
  %v1720 = vld [vmem:[%s1718 + $0x8] sm:$0xff]
  %v1721 = vld [vmem:[%s1718 + $0x10] sm:$0xff]
  %v1722 = vld [vmem:[%s1718 + $0x18] sm:$0xff]
  %v1723 = vld [vmem:[%s1718 + $0x20] sm:$0xff]
  %v1724 = vld [vmem:[%s1718 + $0x28] sm:$0xff]
  %v1725 = vld [vmem:[%s1718 + $0x30] sm:$0xff]
  %v1726 = vld [vmem:[%s1718 + $0x38] sm:$0xff]
  %v1727 = vld [vmem:[%s1718 + $0x40] sm:$0xff]
  %v1728 = vld [vmem:[%s1718 + $0x48] sm:$0xff]
  %v1729 = vld [vmem:[%s1718 + $0x50] sm:$0xff]
  %v1730 = vld [vmem:[%s1718 + $0x58] sm:$0xff]
  %v1731 = vld [vmem:[%s1718 + $0x60] sm:$0xff]
  %v1732 = vld [vmem:[%s1718 + $0x68] sm:$0xff]
  %v1733 = vld [vmem:[%s1718 + $0x70] sm:$0xff]
  %v1734 = vld [vmem:[%s1718 + $0x78] sm:$0xff]
  %v1735 = vld [vmem:[%s1718 + $0x80] sm:$0xff]
  %v1736 = vld [vmem:[%s1718 + $0x88] sm:$0xff]
  %v1737 = vld [vmem:[%s1718 + $0x90] sm:$0xff]
  %v1738 = vld [vmem:[%s1718 + $0x98] sm:$0xff]
  %v1739 = vld [vmem:[%s1718 + $0xa0] sm:$0xff]
  %v1740 = vld [vmem:[%s1718 + $0xa8] sm:$0xff]
  %v1741 = vld [vmem:[%s1718 + $0xb0] sm:$0xff]
  %v1742 = vld [vmem:[%s1718 + $0xb8] sm:$0xff]
  %v1743 = vld [vmem:[%s1718 + $0xc0] sm:$0xff]
  %v1744 = vld [vmem:[%s1718 + $0xc8] sm:$0xff]
  %v1745 = vld [vmem:[%s1718 + $0xd0] sm:$0xff]
  %v1746 = vld [vmem:[%s1718 + $0xd8] sm:$0xff]
  %v1748 = vsel %vm1441, %v1714, 0
  %v1751 = vsel %vm1441, %v1715, 0
  %v1754 = vsel %vm1441, %v1716, 0
  %v1757 = vsel %vm1441, %v1717, 0
  %1759 = vmatprep.subr.mxu0 %v1720
  %1760 = vmatpush1.msra.mxu0 %v1719
  %1761 = vmatprep.subr.mxu0 %v1722
  %1762 = vmatpush1.msra.mxu0 %v1721
  %1763 = vmatprep.subr.mxu0 %v1724
  %1764 = vmatpush1.msra.mxu0 %v1723
  %1765 = vmatprep.subr.mxu0 %v1726
  %1766 = vmatpush1.msra.mxu0 %v1725
  %1767 = vmatprep.subr.mxu0 %v1728
  %1768 = vmatpush1.msra.mxu0 %v1727
  %1769 = vmatprep.subr.mxu0 %v1730
  %1770 = vmatpush1.msra.mxu0 %v1729
  %1771 = vmatprep.subr.mxu0 %v1732
  %1772 = vmatpush1.msra.mxu0 %v1731
  %1773 = vmatprep.subr.mxu0 %v1734
  %1774 = vmatpush1.msra.mxu0 %v1733
  %1775 = vmatprep.subr.mxu0 %v1736
  %1776 = vmatpush1.msra.mxu0 %v1735
  %1777 = vmatprep.subr.mxu0 %v1738
  %1778 = vmatpush1.msra.mxu0 %v1737
  %1779 = vmatprep.subr.mxu0 %v1740
  %1780 = vmatpush1.msra.mxu0 %v1739
  %1781 = vmatprep.subr.mxu0 %v1742
  %1782 = vmatpush1.msra.mxu0 %v1741
  %1783 = vmatprep.subr.mxu0 %v1744
  %1784 = vmatpush1.msra.mxu0 %v1743
  %1785 = vmatprep.subr.mxu0 %v1746
  %1786 = vmatpush1.msra.mxu0 %v1745
  %1787 = vmatprep.subr.mxu0 0.0
  %1788 = vmatpush1.msra.mxu0 0.0
  %1789 = vmatprep.subr.mxu0 0.0
  %1790 = vmatpush1.msra.mxu0 0.0
  %1791 = vmatprep.subr.mxu0 0.0
  %1792 = vmatpush1.msra.mxu0 0.0
  %1793 = vmatprep.subr.mxu0 0.0
  %1794 = vmatpush1.msra.mxu0 0.0
  %1795 = vmatprep.subr.mxu0 0.0
  %1796 = vmatpush1.msra.mxu0 0.0
  %1797 = vmatprep.subr.mxu0 0.0
  %1798 = vmatpush1.msra.mxu0 0.0
  %1799 = vmatprep.subr.mxu0 0.0
  %1800 = vmatpush1.msra.mxu0 0.0
  %1801 = vmatprep.subr.mxu0 0.0
  %1802 = vmatpush1.msra.mxu0 0.0
  %1803 = vmatprep.subr.mxu0 0.0
  %1804 = vmatpush1.msra.mxu0 0.0
  %1805 = vmatprep.subr.mxu0 0.0
  %1806 = vmatpush1.msra.mxu0 0.0
  %1807 = vmatprep.subr.mxu0 0.0
  %1808 = vmatpush1.msra.mxu0 0.0
  %1809 = vmatprep.subr.mxu0 0.0
  %1810 = vmatpush1.msra.mxu0 0.0
  %1811 = vmatprep.subr.mxu0 0.0
  %1812 = vmatpush1.msra.mxu0 0.0
  %1813 = vmatprep.subr.mxu0 0.0
  %1814 = vmatpush1.msra.mxu0 0.0
  %1815 = vmatprep.subr.mxu0 0.0
  %1816 = vmatpush1.msra.mxu0 0.0
  %1817 = vmatprep.subr.mxu0 0.0
  %1818 = vmatpush1.msra.mxu0 0.0
  %1819 = vmatprep.subr.mxu0 0.0
  %1820 = vmatpush1.msra.mxu0 0.0
  %1821 = vmatprep.subr.mxu0 0.0
  %1822 = vmatpush1.msra.mxu0 0.0
  %1823 = vmatprep.mubr.f32.mxu0 0.0
  %1824 = vmatmul.mubr.f32.gmra.mrb[0].mxu0 %v1748
  %v1825 = vpop.f32.mrb[0].mxu0
  %v1826 = vadd.f32 0.0, %v1825
  %v1827 = vpop.f32.mrb[0].mxu0
  %v1828 = vadd.f32 0.0, %v1827
  %1829 = vmatprep.mubr.f32.mxu0 0.0
  %1830 = vmatmul.mubr.f32.gmra.mrb[0].mxu0 %v1751
  %v1831 = vpop.f32.mrb[0].mxu0
  %v1832 = vadd.f32 0.0, %v1831
  %v1833 = vpop.f32.mrb[0].mxu0
  %v1834 = vadd.f32 0.0, %v1833
  %1835 = vmatprep.mubr.f32.mxu0 0.0
  %1836 = vmatmul.mubr.f32.gmra.mrb[0].mxu0 %v1754
  %v1837 = vpop.f32.mrb[0].mxu0
  %v1838 = vadd.f32 0.0, %v1837
  %v1839 = vpop.f32.mrb[0].mxu0
  %v1840 = vadd.f32 0.0, %v1839
  %1841 = vmatprep.mubr.f32.mxu0 0.0
  %1842 = vmatmul.mubr.f32.gmra.mrb[0].mxu0 %v1757
  %v1843 = vpop.f32.mrb[0].mxu0
  %v1844 = vadd.f32 0.0, %v1843
  %v1845 = vpop.f32.mrb[0].mxu0
  %v1846 = vadd.f32 0.0, %v1845
  %1847 = vdwg.mxu0
  %v1848 = vadd.f32 %v1692, %v1826
  %v1849 = vadd.f32 %v1694, %v1828
  %v1850 = vadd.f32 %v1698, %v1832
  %v1851 = vadd.f32 %v1700, %v1834
  %v1852 = vadd.f32 %v1704, %v1838
  %v1853 = vadd.f32 %v1706, %v1840
  %v1854 = vadd.f32 %v1710, %v1844
  %v1855 = vadd.f32 %v1712, %v1846
  %v1856 = vld [vmem:[#allocation2 + $0x3] sm:$0xff]
  %v1857 = vld [vmem:[#allocation2 + $0xb] sm:$0xff]
  %v1858 = vld [vmem:[#allocation2 + $0x13] sm:$0xff]
  %v1859 = vld [vmem:[#allocation2 + $0x1b] sm:$0xff]
  %s1860 = scalar_lea.vmem %s5, 672
  %v1861 = vld [vmem:[%s1860] sm:$0xff]
  %v1862 = vld [vmem:[%s1860 + $0x8] sm:$0xff]
  %v1863 = vld [vmem:[%s1860 + $0x10] sm:$0xff]
  %v1864 = vld [vmem:[%s1860 + $0x18] sm:$0xff]
  %v1865 = vld [vmem:[%s1860 + $0x20] sm:$0xff]
  %v1866 = vld [vmem:[%s1860 + $0x28] sm:$0xff]
  %v1867 = vld [vmem:[%s1860 + $0x30] sm:$0xff]
  %v1868 = vld [vmem:[%s1860 + $0x38] sm:$0xff]
  %v1869 = vld [vmem:[%s1860 + $0x40] sm:$0xff]
  %v1870 = vld [vmem:[%s1860 + $0x48] sm:$0xff]
  %v1871 = vld [vmem:[%s1860 + $0x50] sm:$0xff]
  %v1872 = vld [vmem:[%s1860 + $0x58] sm:$0xff]
  %v1873 = vld [vmem:[%s1860 + $0x60] sm:$0xff]
  %v1874 = vld [vmem:[%s1860 + $0x68] sm:$0xff]
  %v1875 = vld [vmem:[%s1860 + $0x70] sm:$0xff]
  %v1876 = vld [vmem:[%s1860 + $0x78] sm:$0xff]
  %v1877 = vld [vmem:[%s1860 + $0x80] sm:$0xff]
  %v1878 = vld [vmem:[%s1860 + $0x88] sm:$0xff]
  %v1879 = vld [vmem:[%s1860 + $0x90] sm:$0xff]
  %v1880 = vld [vmem:[%s1860 + $0x98] sm:$0xff]
  %v1881 = vld [vmem:[%s1860 + $0xa0] sm:$0xff]
  %v1882 = vld [vmem:[%s1860 + $0xa8] sm:$0xff]
  %v1883 = vld [vmem:[%s1860 + $0xb0] sm:$0xff]
  %v1884 = vld [vmem:[%s1860 + $0xb8] sm:$0xff]
  %v1885 = vld [vmem:[%s1860 + $0xc0] sm:$0xff]
  %v1886 = vld [vmem:[%s1860 + $0xc8] sm:$0xff]
  %v1887 = vld [vmem:[%s1860 + $0xd0] sm:$0xff]
  %v1888 = vld [vmem:[%s1860 + $0xd8] sm:$0xff]
  %v1890 = vsel %vm1441, %v1856, 0
  %v1893 = vsel %vm1441, %v1857, 0
  %v1896 = vsel %vm1441, %v1858, 0
  %v1899 = vsel %vm1441, %v1859, 0
  %1901 = vmatprep.subr.mxu0 %v1862
  %1902 = vmatpush1.msra.mxu0 %v1861
  %1903 = vmatprep.subr.mxu0 %v1864
  %1904 = vmatpush1.msra.mxu0 %v1863
  %1905 = vmatprep.subr.mxu0 %v1866
  %1906 = vmatpush1.msra.mxu0 %v1865
  %1907 = vmatprep.subr.mxu0 %v1868
  %1908 = vmatpush1.msra.mxu0 %v1867
  %1909 = vmatprep.subr.mxu0 %v1870
  %1910 = vmatpush1.msra.mxu0 %v1869
  %1911 = vmatprep.subr.mxu0 %v1872
  %1912 = vmatpush1.msra.mxu0 %v1871
  %1913 = vmatprep.subr.mxu0 %v1874
  %1914 = vmatpush1.msra.mxu0 %v1873
  %1915 = vmatprep.subr.mxu0 %v1876
  %1916 = vmatpush1.msra.mxu0 %v1875
  %1917 = vmatprep.subr.mxu0 %v1878
  %1918 = vmatpush1.msra.mxu0 %v1877
  %1919 = vmatprep.subr.mxu0 %v1880
  %1920 = vmatpush1.msra.mxu0 %v1879
  %1921 = vmatprep.subr.mxu0 %v1882
  %1922 = vmatpush1.msra.mxu0 %v1881
  %1923 = vmatprep.subr.mxu0 %v1884
  %1924 = vmatpush1.msra.mxu0 %v1883
  %1925 = vmatprep.subr.mxu0 %v1886
  %1926 = vmatpush1.msra.mxu0 %v1885
  %1927 = vmatprep.subr.mxu0 %v1888
  %1928 = vmatpush1.msra.mxu0 %v1887
  %1929 = vmatprep.subr.mxu0 0.0
  %1930 = vmatpush1.msra.mxu0 0.0
  %1931 = vmatprep.subr.mxu0 0.0
  %1932 = vmatpush1.msra.mxu0 0.0
  %1933 = vmatprep.subr.mxu0 0.0
  %1934 = vmatpush1.msra.mxu0 0.0
  %1935 = vmatprep.subr.mxu0 0.0
  %1936 = vmatpush1.msra.mxu0 0.0
  %1937 = vmatprep.subr.mxu0 0.0
  %1938 = vmatpush1.msra.mxu0 0.0
  %1939 = vmatprep.subr.mxu0 0.0
  %1940 = vmatpush1.msra.mxu0 0.0
  %1941 = vmatprep.subr.mxu0 0.0
  %1942 = vmatpush1.msra.mxu0 0.0
  %1943 = vmatprep.subr.mxu0 0.0
  %1944 = vmatpush1.msra.mxu0 0.0
  %1945 = vmatprep.subr.mxu0 0.0
  %1946 = vmatpush1.msra.mxu0 0.0
  %1947 = vmatprep.subr.mxu0 0.0
  %1948 = vmatpush1.msra.mxu0 0.0
  %1949 = vmatprep.subr.mxu0 0.0
  %1950 = vmatpush1.msra.mxu0 0.0
  %1951 = vmatprep.subr.mxu0 0.0
  %1952 = vmatpush1.msra.mxu0 0.0
  %1953 = vmatprep.subr.mxu0 0.0
  %1954 = vmatpush1.msra.mxu0 0.0
  %1955 = vmatprep.subr.mxu0 0.0
  %1956 = vmatpush1.msra.mxu0 0.0
  %1957 = vmatprep.subr.mxu0 0.0
  %1958 = vmatpush1.msra.mxu0 0.0
  %1959 = vmatprep.subr.mxu0 0.0
  %1960 = vmatpush1.msra.mxu0 0.0
  %1961 = vmatprep.subr.mxu0 0.0
  %1962 = vmatpush1.msra.mxu0 0.0
  %1963 = vmatprep.subr.mxu0 0.0
  %1964 = vmatpush1.msra.mxu0 0.0
  %1965 = vmatprep.mubr.f32.mxu0 0.0
  %1966 = vmatmul.mubr.f32.gmra.mrb[0].mxu0 %v1890
  %v1967 = vpop.f32.mrb[0].mxu0
  %v1968 = vadd.f32 0.0, %v1967
  %v1969 = vpop.f32.mrb[0].mxu0
  %v1970 = vadd.f32 0.0, %v1969
  %1971 = vmatprep.mubr.f32.mxu0 0.0
  %1972 = vmatmul.mubr.f32.gmra.mrb[0].mxu0 %v1893
  %v1973 = vpop.f32.mrb[0].mxu0
  %v1974 = vadd.f32 0.0, %v1973
  %v1975 = vpop.f32.mrb[0].mxu0
  %v1976 = vadd.f32 0.0, %v1975
  %1977 = vmatprep.mubr.f32.mxu0 0.0
  %1978 = vmatmul.mubr.f32.gmra.mrb[0].mxu0 %v1896
  %v1979 = vpop.f32.mrb[0].mxu0
  %v1980 = vadd.f32 0.0, %v1979
  %v1981 = vpop.f32.mrb[0].mxu0
  %v1982 = vadd.f32 0.0, %v1981
  %1983 = vmatprep.mubr.f32.mxu0 0.0
  %1984 = vmatmul.mubr.f32.gmra.mrb[0].mxu0 %v1899
  %v1985 = vpop.f32.mrb[0].mxu0
  %v1986 = vadd.f32 0.0, %v1985
  %v1987 = vpop.f32.mrb[0].mxu0
  %v1988 = vadd.f32 0.0, %v1987
  %1989 = vdwg.mxu0
  %v1990 = vadd.f32 %v1848, %v1968
  %v1991 = vadd.f32 %v1849, %v1970
  %v1992 = vadd.f32 %v1850, %v1974
  %v1993 = vadd.f32 %v1851, %v1976
  %v1994 = vadd.f32 %v1852, %v1980
  %v1995 = vadd.f32 %v1853, %v1982
  %v1996 = vadd.f32 %v1854, %v1986
  %v1997 = vadd.f32 %v1855, %v1988
  %v1998 = vld [vmem:[#allocation2 + $0x4] sm:$0xff]
  %v1999 = vld [vmem:[#allocation2 + $0xc] sm:$0xff]
  %v2000 = vld [vmem:[#allocation2 + $0x14] sm:$0xff]
  %v2001 = vld [vmem:[#allocation2 + $0x1c] sm:$0xff]
  %s2002 = scalar_lea.vmem %s5, 896
  %v2003 = vld [vmem:[%s2002] sm:$0xff]
  %v2004 = vld [vmem:[%s2002 + $0x8] sm:$0xff]
  %v2005 = vld [vmem:[%s2002 + $0x10] sm:$0xff]
  %v2006 = vld [vmem:[%s2002 + $0x18] sm:$0xff]
  %v2007 = vld [vmem:[%s2002 + $0x20] sm:$0xff]
  %v2008 = vld [vmem:[%s2002 + $0x28] sm:$0xff]
  %v2009 = vld [vmem:[%s2002 + $0x30] sm:$0xff]
  %v2010 = vld [vmem:[%s2002 + $0x38] sm:$0xff]
  %v2011 = vld [vmem:[%s2002 + $0x40] sm:$0xff]
  %v2012 = vld [vmem:[%s2002 + $0x48] sm:$0xff]
  %v2013 = vld [vmem:[%s2002 + $0x50] sm:$0xff]
  %v2014 = vld [vmem:[%s2002 + $0x58] sm:$0xff]
  %v2015 = vld [vmem:[%s2002 + $0x60] sm:$0xff]
  %v2016 = vld [vmem:[%s2002 + $0x68] sm:$0xff]
  %v2017 = vld [vmem:[%s2002 + $0x70] sm:$0xff]
  %v2018 = vld [vmem:[%s2002 + $0x78] sm:$0xff]
  %v2019 = vld [vmem:[%s2002 + $0x80] sm:$0xff]
  %v2020 = vld [vmem:[%s2002 + $0x88] sm:$0xff]
  %v2021 = vld [vmem:[%s2002 + $0x90] sm:$0xff]
  %v2022 = vld [vmem:[%s2002 + $0x98] sm:$0xff]
  %v2023 = vld [vmem:[%s2002 + $0xa0] sm:$0xff]
  %v2024 = vld [vmem:[%s2002 + $0xa8] sm:$0xff]
  %v2025 = vld [vmem:[%s2002 + $0xb0] sm:$0xff]
  %v2026 = vld [vmem:[%s2002 + $0xb8] sm:$0xff]
  %v2027 = vld [vmem:[%s2002 + $0xc0] sm:$0xff]
  %v2028 = vld [vmem:[%s2002 + $0xc8] sm:$0xff]
  %v2029 = vld [vmem:[%s2002 + $0xd0] sm:$0xff]
  %v2030 = vld [vmem:[%s2002 + $0xd8] sm:$0xff]
  %v2032 = vsel %vm1441, %v1998, 0
  %v2035 = vsel %vm1441, %v1999, 0
  %v2038 = vsel %vm1441, %v2000, 0
  %v2041 = vsel %vm1441, %v2001, 0
  %2043 = vmatprep.subr.mxu0 %v2004
  %2044 = vmatpush1.msra.mxu0 %v2003
  %2045 = vmatprep.subr.mxu0 %v2006
  %2046 = vmatpush1.msra.mxu0 %v2005
  %2047 = vmatprep.subr.mxu0 %v2008
  %2048 = vmatpush1.msra.mxu0 %v2007
  %2049 = vmatprep.subr.mxu0 %v2010
  %2050 = vmatpush1.msra.mxu0 %v2009
  %2051 = vmatprep.subr.mxu0 %v2012
  %2052 = vmatpush1.msra.mxu0 %v2011
  %2053 = vmatprep.subr.mxu0 %v2014
  %2054 = vmatpush1.msra.mxu0 %v2013
  %2055 = vmatprep.subr.mxu0 %v2016
  %2056 = vmatpush1.msra.mxu0 %v2015
  %2057 = vmatprep.subr.mxu0 %v2018
  %2058 = vmatpush1.msra.mxu0 %v2017
  %2059 = vmatprep.subr.mxu0 %v2020
  %2060 = vmatpush1.msra.mxu0 %v2019
  %2061 = vmatprep.subr.mxu0 %v2022
  %2062 = vmatpush1.msra.mxu0 %v2021
  %2063 = vmatprep.subr.mxu0 %v2024
  %2064 = vmatpush1.msra.mxu0 %v2023
  %2065 = vmatprep.subr.mxu0 %v2026
  %2066 = vmatpush1.msra.mxu0 %v2025
  %2067 = vmatprep.subr.mxu0 %v2028
  %2068 = vmatpush1.msra.mxu0 %v2027
  %2069 = vmatprep.subr.mxu0 %v2030
  %2070 = vmatpush1.msra.mxu0 %v2029
  %2071 = vmatprep.subr.mxu0 0.0
  %2072 = vmatpush1.msra.mxu0 0.0
  %2073 = vmatprep.subr.mxu0 0.0
  %2074 = vmatpush1.msra.mxu0 0.0
  %2075 = vmatprep.subr.mxu0 0.0
  %2076 = vmatpush1.msra.mxu0 0.0
  %2077 = vmatprep.subr.mxu0 0.0
  %2078 = vmatpush1.msra.mxu0 0.0
  %2079 = vmatprep.subr.mxu0 0.0
  %2080 = vmatpush1.msra.mxu0 0.0
  %2081 = vmatprep.subr.mxu0 0.0
  %2082 = vmatpush1.msra.mxu0 0.0
  %2083 = vmatprep.subr.mxu0 0.0
  %2084 = vmatpush1.msra.mxu0 0.0
  %2085 = vmatprep.subr.mxu0 0.0
  %2086 = vmatpush1.msra.mxu0 0.0
  %2087 = vmatprep.subr.mxu0 0.0
  %2088 = vmatpush1.msra.mxu0 0.0
  %2089 = vmatprep.subr.mxu0 0.0
  %2090 = vmatpush1.msra.mxu0 0.0
  %2091 = vmatprep.subr.mxu0 0.0
  %2092 = vmatpush1.msra.mxu0 0.0
  %2093 = vmatprep.subr.mxu0 0.0
  %2094 = vmatpush1.msra.mxu0 0.0
  %2095 = vmatprep.subr.mxu0 0.0
  %2096 = vmatpush1.msra.mxu0 0.0
  %2097 = vmatprep.subr.mxu0 0.0
  %2098 = vmatpush1.msra.mxu0 0.0
  %2099 = vmatprep.subr.mxu0 0.0
  %2100 = vmatpush1.msra.mxu0 0.0
  %2101 = vmatprep.subr.mxu0 0.0
  %2102 = vmatpush1.msra.mxu0 0.0
  %2103 = vmatprep.subr.mxu0 0.0
  %2104 = vmatpush1.msra.mxu0 0.0
  %2105 = vmatprep.subr.mxu0 0.0
  %2106 = vmatpush1.msra.mxu0 0.0
  %2107 = vmatprep.mubr.f32.mxu0 0.0
  %2108 = vmatmul.mubr.f32.gmra.mrb[0].mxu0 %v2032
  %v2109 = vpop.f32.mrb[0].mxu0
  %v2110 = vadd.f32 0.0, %v2109
  %v2111 = vpop.f32.mrb[0].mxu0
  %v2112 = vadd.f32 0.0, %v2111
  %2113 = vmatprep.mubr.f32.mxu0 0.0
  %2114 = vmatmul.mubr.f32.gmra.mrb[0].mxu0 %v2035
  %v2115 = vpop.f32.mrb[0].mxu0
  %v2116 = vadd.f32 0.0, %v2115
  %v2117 = vpop.f32.mrb[0].mxu0
  %v2118 = vadd.f32 0.0, %v2117
  %2119 = vmatprep.mubr.f32.mxu0 0.0
  %2120 = vmatmul.mubr.f32.gmra.mrb[0].mxu0 %v2038
  %v2121 = vpop.f32.mrb[0].mxu0
  %v2122 = vadd.f32 0.0, %v2121
  %v2123 = vpop.f32.mrb[0].mxu0
  %v2124 = vadd.f32 0.0, %v2123
  %2125 = vmatprep.mubr.f32.mxu0 0.0
  %2126 = vmatmul.mubr.f32.gmra.mrb[0].mxu0 %v2041
  %v2127 = vpop.f32.mrb[0].mxu0
  %v2128 = vadd.f32 0.0, %v2127
  %v2129 = vpop.f32.mrb[0].mxu0
  %v2130 = vadd.f32 0.0, %v2129
  %2131 = vdwg.mxu0
  %v2132 = vadd.f32 %v1990, %v2110
  %v2133 = vadd.f32 %v1991, %v2112
  %v2134 = vadd.f32 %v1992, %v2116
  %v2135 = vadd.f32 %v1993, %v2118
  %v2136 = vadd.f32 %v1994, %v2122
  %v2137 = vadd.f32 %v1995, %v2124
  %v2138 = vadd.f32 %v1996, %v2128
  %v2139 = vadd.f32 %v1997, %v2130
  %v2140 = vld [vmem:[%s6] sm:$0x3]
  %v2142 = vlaneseq
  %v2143 = vshrl.u32 %v2142, 7
  %v2144 = vsub.s32 0, %v2143
  %v2145 = vrot.slane %v2140, %v2144
  %v2146 = vlaneseq
  %v2147 = vshrl.u32 %v2146, 7
  %v2148 = vsub.s32 1, %v2147
  %v2149 = vrot.slane %v2140, %v2148
  %v2152 = vadd.f32 %v2132, %v2145
  %v2153 = vadd.f32 %v2133, %v2149
  %v2154 = vadd.f32 %v2134, %v2145
  %v2155 = vadd.f32 %v2135, %v2149
  %v2156 = vadd.f32 %v2136, %v2145
  %v2157 = vadd.f32 %v2137, %v2149
  %v2158 = vadd.f32 %v2138, %v2145
  %v2159 = vadd.f32 %v2139, %v2149
  %v2160 = vmax.f32 %v2152, 0.0
  %v2161 = vmax.f32 %v2153, 0.0
  %v2162 = vmax.f32 %v2154, 0.0
  %v2163 = vmax.f32 %v2155, 0.0
  %v2164 = vmax.f32 %v2156, 0.0
  %v2165 = vmax.f32 %v2157, 0.0
  %v2166 = vmax.f32 %v2158, 0.0
  %v2167 = vmax.f32 %v2159, 0.0
  %v2168 = vld [vmem:[%s7] sm:$0xff]
  %v2169 = vld [vmem:[%s7 + $0x8] sm:$0xff]
  %v2170 = vld [vmem:[%s7 + $0x10] sm:$0xff]
  %v2171 = vld [vmem:[%s7 + $0x18] sm:$0xff]
  %v2172 = vld [vmem:[%s7 + $0x20] sm:$0xff]
  %v2173 = vld [vmem:[%s7 + $0x28] sm:$0xff]
  %v2174 = vld [vmem:[%s7 + $0x30] sm:$0xff]
  %v2175 = vld [vmem:[%s7 + $0x38] sm:$0xff]
  %v2176 = vld [vmem:[%s7 + $0x40] sm:$0xff]
  %v2177 = vld [vmem:[%s7 + $0x48] sm:$0xff]
  %v2178 = vld [vmem:[%s7 + $0x50] sm:$0xff]
  %v2179 = vld [vmem:[%s7 + $0x58] sm:$0xff]
  %v2180 = vld [vmem:[%s7 + $0x60] sm:$0xff]
  %v2181 = vld [vmem:[%s7 + $0x68] sm:$0xff]
  %v2182 = vld [vmem:[%s7 + $0x70] sm:$0xff]
  %v2183 = vld [vmem:[%s7 + $0x78] sm:$0xff]
  %v2184 = vld [vmem:[%s7 + $0x80] sm:$0xff]
  %v2185 = vld [vmem:[%s7 + $0x88] sm:$0xff]
  %v2186 = vld [vmem:[%s7 + $0x90] sm:$0xff]
  %v2187 = vld [vmem:[%s7 + $0x98] sm:$0xff]
  %vm2188 = vcmask 261120
  %v2190 = vsel %vm2188, %v2161, 0
  %v2193 = vsel %vm2188, %v2163, 0
  %v2196 = vsel %vm2188, %v2165, 0
  %v2199 = vsel %vm2188, %v2167, 0
  %2201 = vmatprep.subr.mxu0 0.0
  %2202 = vmatpush1.msra.mxu0 %v2168
  %2203 = vmatprep.subr.mxu0 0.0
  %2204 = vmatpush1.msra.mxu0 %v2169
  %2205 = vmatprep.subr.mxu0 0.0
  %2206 = vmatpush1.msra.mxu0 %v2170
  %2207 = vmatprep.subr.mxu0 0.0
  %2208 = vmatpush1.msra.mxu0 %v2171
  %2209 = vmatprep.subr.mxu0 0.0
  %2210 = vmatpush1.msra.mxu0 %v2172
  %2211 = vmatprep.subr.mxu0 0.0
  %2212 = vmatpush1.msra.mxu0 %v2173
  %2213 = vmatprep.subr.mxu0 0.0
  %2214 = vmatpush1.msra.mxu0 %v2174
  %2215 = vmatprep.subr.mxu0 0.0
  %2216 = vmatpush1.msra.mxu0 %v2175
  %2217 = vmatprep.subr.mxu0 0.0
  %2218 = vmatpush1.msra.mxu0 %v2176
  %2219 = vmatprep.subr.mxu0 0.0
  %2220 = vmatpush1.msra.mxu0 %v2177
  %2221 = vmatprep.subr.mxu0 0.0
  %2222 = vmatpush1.msra.mxu0 %v2178
  %2223 = vmatprep.subr.mxu0 0.0
  %2224 = vmatpush1.msra.mxu0 %v2179
  %2225 = vmatprep.subr.mxu0 0.0
  %2226 = vmatpush1.msra.mxu0 %v2180
  %2227 = vmatprep.subr.mxu0 0.0
  %2228 = vmatpush1.msra.mxu0 %v2181
  %2229 = vmatprep.subr.mxu0 0.0
  %2230 = vmatpush1.msra.mxu0 %v2182
  %2231 = vmatprep.subr.mxu0 0.0
  %2232 = vmatpush1.msra.mxu0 %v2183
  %2233 = vmatprep.subr.mxu0 0.0
  %2234 = vmatpush1.msra.mxu0 %v2184
  %2235 = vmatprep.subr.mxu0 0.0
  %2236 = vmatpush1.msra.mxu0 %v2185
  %2237 = vmatprep.subr.mxu0 0.0
  %2238 = vmatpush1.msra.mxu0 %v2186
  %2239 = vmatprep.subr.mxu0 0.0
  %2240 = vmatpush1.msra.mxu0 %v2187
  %2241 = vmatprep.subr.mxu0 0.0
  %2242 = vmatpush1.msra.mxu0 0.0
  %2243 = vmatprep.subr.mxu0 0.0
  %2244 = vmatpush1.msra.mxu0 0.0
  %2245 = vmatprep.subr.mxu0 0.0
  %2246 = vmatpush1.msra.mxu0 0.0
  %2247 = vmatprep.subr.mxu0 0.0
  %2248 = vmatpush1.msra.mxu0 0.0
  %2249 = vmatprep.subr.mxu0 0.0
  %2250 = vmatpush1.msra.mxu0 0.0
  %2251 = vmatprep.subr.mxu0 0.0
  %2252 = vmatpush1.msra.mxu0 0.0
  %2253 = vmatprep.subr.mxu0 0.0
  %2254 = vmatpush1.msra.mxu0 0.0
  %2255 = vmatprep.subr.mxu0 0.0
  %2256 = vmatpush1.msra.mxu0 0.0
  %2257 = vmatprep.subr.mxu0 0.0
  %2258 = vmatpush1.msra.mxu0 0.0
  %2259 = vmatprep.subr.mxu0 0.0
  %2260 = vmatpush1.msra.mxu0 0.0
  %2261 = vmatprep.subr.mxu0 0.0
  %2262 = vmatpush1.msra.mxu0 0.0
  %2263 = vmatprep.subr.mxu0 0.0
  %2264 = vmatpush1.msra.mxu0 0.0
  %2265 = vmatprep.mubr.f32.mxu0 %v2190
  %2266 = vmatmul.mubr.f32.gmra.mrb[0].mxu0 %v2160
  %v2267 = vpop.f32.mrb[0].mxu0
  %v2268 = vadd.f32 0.0, %v2267
  %v2269 = vpop.f32.mrb[0].mxu0
  %2270 = vmatprep.mubr.f32.mxu0 %v2193
  %2271 = vmatmul.mubr.f32.gmra.mrb[0].mxu0 %v2162
  %v2272 = vpop.f32.mrb[0].mxu0
  %v2273 = vadd.f32 0.0, %v2272
  %v2274 = vpop.f32.mrb[0].mxu0
  %2275 = vmatprep.mubr.f32.mxu0 %v2196
  %2276 = vmatmul.mubr.f32.gmra.mrb[0].mxu0 %v2164
  %v2277 = vpop.f32.mrb[0].mxu0
  %v2278 = vadd.f32 0.0, %v2277
  %v2279 = vpop.f32.mrb[0].mxu0
  %2280 = vmatprep.mubr.f32.mxu0 %v2199
  %2281 = vmatmul.mubr.f32.gmra.mrb[0].mxu0 %v2166
  %v2282 = vpop.f32.mrb[0].mxu0
  %v2283 = vadd.f32 0.0, %v2282
  %v2284 = vpop.f32.mrb[0].mxu0
  %2285 = vdwg.mxu0
  %s2286 = scalar_lea.vmem %s7, 160
  %v2287 = vld [vmem:[%s2286] sm:$0xff]
  %v2288 = vld [vmem:[%s2286 + $0x8] sm:$0xff]
  %v2289 = vld [vmem:[%s2286 + $0x10] sm:$0xff]
  %v2290 = vld [vmem:[%s2286 + $0x18] sm:$0xff]
  %v2291 = vld [vmem:[%s2286 + $0x20] sm:$0xff]
  %v2292 = vld [vmem:[%s2286 + $0x28] sm:$0xff]
  %v2293 = vld [vmem:[%s2286 + $0x30] sm:$0xff]
  %v2294 = vld [vmem:[%s2286 + $0x38] sm:$0xff]
  %v2295 = vld [vmem:[%s2286 + $0x40] sm:$0xff]
  %v2296 = vld [vmem:[%s2286 + $0x48] sm:$0xff]
  %v2297 = vld [vmem:[%s2286 + $0x50] sm:$0xff]
  %v2298 = vld [vmem:[%s2286 + $0x58] sm:$0xff]
  %v2299 = vld [vmem:[%s2286 + $0x60] sm:$0xff]
  %v2300 = vld [vmem:[%s2286 + $0x68] sm:$0xff]
  %v2301 = vld [vmem:[%s2286 + $0x70] sm:$0xff]
  %v2302 = vld [vmem:[%s2286 + $0x78] sm:$0xff]
  %v2303 = vld [vmem:[%s2286 + $0x80] sm:$0xff]
  %v2304 = vld [vmem:[%s2286 + $0x88] sm:$0xff]
  %v2305 = vld [vmem:[%s2286 + $0x90] sm:$0xff]
  %v2306 = vld [vmem:[%s2286 + $0x98] sm:$0xff]
  %2307 = vmatprep.subr.mxu0 0.0
  %2308 = vmatpush1.msra.mxu0 %v2287
  %2309 = vmatprep.subr.mxu0 0.0
  %2310 = vmatpush1.msra.mxu0 %v2288
  %2311 = vmatprep.subr.mxu0 0.0
  %2312 = vmatpush1.msra.mxu0 %v2289
  %2313 = vmatprep.subr.mxu0 0.0
  %2314 = vmatpush1.msra.mxu0 %v2290
  %2315 = vmatprep.subr.mxu0 0.0
  %2316 = vmatpush1.msra.mxu0 %v2291
  %2317 = vmatprep.subr.mxu0 0.0
  %2318 = vmatpush1.msra.mxu0 %v2292
  %2319 = vmatprep.subr.mxu0 0.0
  %2320 = vmatpush1.msra.mxu0 %v2293
  %2321 = vmatprep.subr.mxu0 0.0
  %2322 = vmatpush1.msra.mxu0 %v2294
  %2323 = vmatprep.subr.mxu0 0.0
  %2324 = vmatpush1.msra.mxu0 %v2295
  %2325 = vmatprep.subr.mxu0 0.0
  %2326 = vmatpush1.msra.mxu0 %v2296
  %2327 = vmatprep.subr.mxu0 0.0
  %2328 = vmatpush1.msra.mxu0 %v2297
  %2329 = vmatprep.subr.mxu0 0.0
  %2330 = vmatpush1.msra.mxu0 %v2298
  %2331 = vmatprep.subr.mxu0 0.0
  %2332 = vmatpush1.msra.mxu0 %v2299
  %2333 = vmatprep.subr.mxu0 0.0
  %2334 = vmatpush1.msra.mxu0 %v2300
  %2335 = vmatprep.subr.mxu0 0.0
  %2336 = vmatpush1.msra.mxu0 %v2301
  %2337 = vmatprep.subr.mxu0 0.0
  %2338 = vmatpush1.msra.mxu0 %v2302
  %2339 = vmatprep.subr.mxu0 0.0
  %2340 = vmatpush1.msra.mxu0 %v2303
  %2341 = vmatprep.subr.mxu0 0.0
  %2342 = vmatpush1.msra.mxu0 %v2304
  %2343 = vmatprep.subr.mxu0 0.0
  %2344 = vmatpush1.msra.mxu0 %v2305
  %2345 = vmatprep.subr.mxu0 0.0
  %2346 = vmatpush1.msra.mxu0 %v2306
  %2347 = vmatprep.subr.mxu0 0.0
  %2348 = vmatpush1.msra.mxu0 0.0
  %2349 = vmatprep.subr.mxu0 0.0
  %2350 = vmatpush1.msra.mxu0 0.0
  %2351 = vmatprep.subr.mxu0 0.0
  %2352 = vmatpush1.msra.mxu0 0.0
  %2353 = vmatprep.subr.mxu0 0.0
  %2354 = vmatpush1.msra.mxu0 0.0
  %2355 = vmatprep.subr.mxu0 0.0
  %2356 = vmatpush1.msra.mxu0 0.0
  %2357 = vmatprep.subr.mxu0 0.0
  %2358 = vmatpush1.msra.mxu0 0.0
  %2359 = vmatprep.subr.mxu0 0.0
  %2360 = vmatpush1.msra.mxu0 0.0
  %2361 = vmatprep.subr.mxu0 0.0
  %2362 = vmatpush1.msra.mxu0 0.0
  %2363 = vmatprep.subr.mxu0 0.0
  %2364 = vmatpush1.msra.mxu0 0.0
  %2365 = vmatprep.subr.mxu0 0.0
  %2366 = vmatpush1.msra.mxu0 0.0
  %2367 = vmatprep.subr.mxu0 0.0
  %2368 = vmatpush1.msra.mxu0 0.0
  %2369 = vmatprep.subr.mxu0 0.0
  %2370 = vmatpush1.msra.mxu0 0.0
  %2371 = vmatprep.mubr.f32.mxu0 %v2190
  %2372 = vmatmul.mubr.f32.gmra.mrb[0].mxu0 %v2160
  %v2373 = vpop.f32.mrb[0].mxu0
  %v2374 = vadd.f32 0.0, %v2373
  %v2375 = vpop.f32.mrb[0].mxu0
  %2376 = vmatprep.mubr.f32.mxu0 %v2193
  %2377 = vmatmul.mubr.f32.gmra.mrb[0].mxu0 %v2162
  %v2378 = vpop.f32.mrb[0].mxu0
  %v2379 = vadd.f32 0.0, %v2378
  %v2380 = vpop.f32.mrb[0].mxu0
  %2381 = vmatprep.mubr.f32.mxu0 %v2196
  %2382 = vmatmul.mubr.f32.gmra.mrb[0].mxu0 %v2164
  %v2383 = vpop.f32.mrb[0].mxu0
  %v2384 = vadd.f32 0.0, %v2383
  %v2385 = vpop.f32.mrb[0].mxu0
  %2386 = vmatprep.mubr.f32.mxu0 %v2199
  %2387 = vmatmul.mubr.f32.gmra.mrb[0].mxu0 %v2166
  %v2388 = vpop.f32.mrb[0].mxu0
  %v2389 = vadd.f32 0.0, %v2388
  %v2390 = vpop.f32.mrb[0].mxu0
  %2391 = vdwg.mxu0
  %v2392 = vmax.f32 %v2268, %v2374
  %v2393 = vmax.f32 %v2273, %v2379
  %v2394 = vmax.f32 %v2278, %v2384
  %v2395 = vmax.f32 %v2283, %v2389
  %v2396 = vld [vmem:[%s8] sm:$0xff]
  %v2397 = vld [vmem:[%s8 + $0x8] sm:$0xff]
  %v2399 = vsel %vm2188, %v2396, 0
  %v2402 = vsel %vm2188, %v2397, 0
  %2404 = vmatprep.subr.mxu0 0.0
  %2405 = vmatpush1.msra.mxu0 %v2392
  %2406 = vmatprep.subr.mxu0 0.0
  %2407 = vmatpush1.msra.mxu0 %v2393
  %2408 = vmatprep.subr.mxu0 0.0
  %2409 = vmatpush1.msra.mxu0 %v2394
  %2410 = vmatprep.subr.mxu0 0.0
  %2411 = vmatpush1.msra.mxu0 %v2395
  %2412 = vmatprep.subr.mxu0 0.0
  %2413 = vmatpush1.msra.mxu0 0.0
  %2414 = vmatprep.subr.mxu0 0.0
  %2415 = vmatpush1.msra.mxu0 0.0
  %2416 = vmatprep.subr.mxu0 0.0
  %2417 = vmatpush1.msra.mxu0 0.0
  %2418 = vmatprep.subr.mxu0 0.0
  %2419 = vmatpush1.msra.mxu0 0.0
  %2420 = vmatprep.subr.mxu0 0.0
  %2421 = vmatpush1.msra.mxu0 0.0
  %2422 = vmatprep.subr.mxu0 0.0
  %2423 = vmatpush1.msra.mxu0 0.0
  %2424 = vmatprep.subr.mxu0 0.0
  %2425 = vmatpush1.msra.mxu0 0.0
  %2426 = vmatprep.subr.mxu0 0.0
  %2427 = vmatpush1.msra.mxu0 0.0
  %2428 = vmatprep.subr.mxu0 0.0
  %2429 = vmatpush1.msra.mxu0 0.0
  %2430 = vmatprep.subr.mxu0 0.0
  %2431 = vmatpush1.msra.mxu0 0.0
  %2432 = vmatprep.subr.mxu0 0.0
  %2433 = vmatpush1.msra.mxu0 0.0
  %2434 = vmatprep.subr.mxu0 0.0
  %2435 = vmatpush1.msra.mxu0 0.0
  %2436 = vmatprep.subr.mxu0 0.0
  %2437 = vmatpush1.msra.mxu0 0.0
  %2438 = vmatprep.subr.mxu0 0.0
  %2439 = vmatpush1.msra.mxu0 0.0
  %2440 = vmatprep.subr.mxu0 0.0
  %2441 = vmatpush1.msra.mxu0 0.0
  %2442 = vmatprep.subr.mxu0 0.0
  %2443 = vmatpush1.msra.mxu0 0.0
  %2444 = vmatprep.subr.mxu0 0.0
  %2445 = vmatpush1.msra.mxu0 0.0
  %2446 = vmatprep.subr.mxu0 0.0
  %2447 = vmatpush1.msra.mxu0 0.0
  %2448 = vmatprep.subr.mxu0 0.0
  %2449 = vmatpush1.msra.mxu0 0.0
  %2450 = vmatprep.subr.mxu0 0.0
  %2451 = vmatpush1.msra.mxu0 0.0
  %2452 = vmatprep.subr.mxu0 0.0
  %2453 = vmatpush1.msra.mxu0 0.0
  %2454 = vmatprep.subr.mxu0 0.0
  %2455 = vmatpush1.msra.mxu0 0.0
  %2456 = vmatprep.subr.mxu0 0.0
  %2457 = vmatpush1.msra.mxu0 0.0
  %2458 = vmatprep.subr.mxu0 0.0
  %2459 = vmatpush1.msra.mxu0 0.0
  %2460 = vmatprep.subr.mxu0 0.0
  %2461 = vmatpush1.msra.mxu0 0.0
  %2462 = vmatprep.subr.mxu0 0.0
  %2463 = vmatpush1.msra.mxu0 0.0
  %2464 = vmatprep.subr.mxu0 0.0
  %2465 = vmatpush1.msra.mxu0 0.0
  %2466 = vmatprep.subr.mxu0 0.0
  %2467 = vmatpush1.msra.mxu0 0.0
  %2468 = vmatprep.mubr.f32.mxu0 0.0
  %2469 = vmatmul.mubr.f32.gmra.mrb[0].mxu0 %v2399
  %v2470 = vpop.f32.mrb[0].mxu0
  %v2471 = vadd.f32 0.0, %v2470
  %v2472 = vpop.f32.mrb[0].mxu0
  %2473 = vmatprep.mubr.f32.mxu0 0.0
  %2474 = vmatmul.mubr.f32.gmra.mrb[0].mxu0 %v2402
  %v2475 = vpop.f32.mrb[0].mxu0
  %v2476 = vadd.f32 0.0, %v2475
  %v2477 = vpop.f32.mrb[0].mxu0
  %2478 = vdwg.mxu0
  %s2479 = scalar_lea.vmem %s8, 16
  %v2480 = vld [vmem:[%s2479] sm:$0xff]
  %v2481 = vld [vmem:[%s2479 + $0x8] sm:$0xff]
  %v2483 = vsel %vm2188, %v2480, 0
  %v2486 = vsel %vm2188, %v2481, 0
  %2488 = vmatprep.subr.mxu0 0.0
  %2489 = vmatpush1.msra.mxu0 %v2392
  %2490 = vmatprep.subr.mxu0 0.0
  %2491 = vmatpush1.msra.mxu0 %v2393
  %2492 = vmatprep.subr.mxu0 0.0
  %2493 = vmatpush1.msra.mxu0 %v2394
  %2494 = vmatprep.subr.mxu0 0.0
  %2495 = vmatpush1.msra.mxu0 %v2395
  %2496 = vmatprep.subr.mxu0 0.0
  %2497 = vmatpush1.msra.mxu0 0.0
  %2498 = vmatprep.subr.mxu0 0.0
  %2499 = vmatpush1.msra.mxu0 0.0
  %2500 = vmatprep.subr.mxu0 0.0
  %2501 = vmatpush1.msra.mxu0 0.0
  %2502 = vmatprep.subr.mxu0 0.0
  %2503 = vmatpush1.msra.mxu0 0.0
  %2504 = vmatprep.subr.mxu0 0.0
  %2505 = vmatpush1.msra.mxu0 0.0
  %2506 = vmatprep.subr.mxu0 0.0
  %2507 = vmatpush1.msra.mxu0 0.0
  %2508 = vmatprep.subr.mxu0 0.0
  %2509 = vmatpush1.msra.mxu0 0.0
  %2510 = vmatprep.subr.mxu0 0.0
  %2511 = vmatpush1.msra.mxu0 0.0
  %2512 = vmatprep.subr.mxu0 0.0
  %2513 = vmatpush1.msra.mxu0 0.0
  %2514 = vmatprep.subr.mxu0 0.0
  %2515 = vmatpush1.msra.mxu0 0.0
  %2516 = vmatprep.subr.mxu0 0.0
  %2517 = vmatpush1.msra.mxu0 0.0
  %2518 = vmatprep.subr.mxu0 0.0
  %2519 = vmatpush1.msra.mxu0 0.0
  %2520 = vmatprep.subr.mxu0 0.0
  %2521 = vmatpush1.msra.mxu0 0.0
  %2522 = vmatprep.subr.mxu0 0.0
  %2523 = vmatpush1.msra.mxu0 0.0
  %2524 = vmatprep.subr.mxu0 0.0
  %2525 = vmatpush1.msra.mxu0 0.0
  %2526 = vmatprep.subr.mxu0 0.0
  %2527 = vmatpush1.msra.mxu0 0.0
  %2528 = vmatprep.subr.mxu0 0.0
  %2529 = vmatpush1.msra.mxu0 0.0
  %2530 = vmatprep.subr.mxu0 0.0
  %2531 = vmatpush1.msra.mxu0 0.0
  %2532 = vmatprep.subr.mxu0 0.0
  %2533 = vmatpush1.msra.mxu0 0.0
  %2534 = vmatprep.subr.mxu0 0.0
  %2535 = vmatpush1.msra.mxu0 0.0
  %2536 = vmatprep.subr.mxu0 0.0
  %2537 = vmatpush1.msra.mxu0 0.0
  %2538 = vmatprep.subr.mxu0 0.0
  %2539 = vmatpush1.msra.mxu0 0.0
  %2540 = vmatprep.subr.mxu0 0.0
  %2541 = vmatpush1.msra.mxu0 0.0
  %2542 = vmatprep.subr.mxu0 0.0
  %2543 = vmatpush1.msra.mxu0 0.0
  %2544 = vmatprep.subr.mxu0 0.0
  %2545 = vmatpush1.msra.mxu0 0.0
  %2546 = vmatprep.subr.mxu0 0.0
  %2547 = vmatpush1.msra.mxu0 0.0
  %2548 = vmatprep.subr.mxu0 0.0
  %2549 = vmatpush1.msra.mxu0 0.0
  %2550 = vmatprep.subr.mxu0 0.0
  %2551 = vmatpush1.msra.mxu0 0.0
  %2552 = vmatprep.mubr.f32.mxu0 0.0
  %2553 = vmatmul.mubr.f32.gmra.mrb[0].mxu0 %v2483
  %v2554 = vpop.f32.mrb[0].mxu0
  %v2555 = vadd.f32 0.0, %v2554
  %v2556 = vpop.f32.mrb[0].mxu0
  %2557 = vmatprep.mubr.f32.mxu0 0.0
  %2558 = vmatmul.mubr.f32.gmra.mrb[0].mxu0 %v2486
  %v2559 = vpop.f32.mrb[0].mxu0
  %v2560 = vadd.f32 0.0, %v2559
  %v2561 = vpop.f32.mrb[0].mxu0
  %2562 = vdwg.mxu0
  %v2563 = vmax.f32 %v2471, %v2555
  %v2564 = vmax.f32 %v2476, %v2560
  %v2565 = vld [vmem:[%s9] sm:$0xff]
  %vm2566 = vcmask 130048
  %v2568 = vsel %vm2566, %v2565, 0
  %2570 = vmatprep.subr.mxu0 0.0
  %2571 = vmatpush1.msra.mxu0 %v2563
  %2572 = vmatprep.subr.mxu0 0.0
  %2573 = vmatpush1.msra.mxu0 %v2564
  %2574 = vmatprep.subr.mxu0 0.0
  %2575 = vmatpush1.msra.mxu0 0.0
  %2576 = vmatprep.subr.mxu0 0.0
  %2577 = vmatpush1.msra.mxu0 0.0
  %2578 = vmatprep.subr.mxu0 0.0
  %2579 = vmatpush1.msra.mxu0 0.0
  %2580 = vmatprep.subr.mxu0 0.0
  %2581 = vmatpush1.msra.mxu0 0.0
  %2582 = vmatprep.subr.mxu0 0.0
  %2583 = vmatpush1.msra.mxu0 0.0
  %2584 = vmatprep.subr.mxu0 0.0
  %2585 = vmatpush1.msra.mxu0 0.0
  %2586 = vmatprep.subr.mxu0 0.0
  %2587 = vmatpush1.msra.mxu0 0.0
  %2588 = vmatprep.subr.mxu0 0.0
  %2589 = vmatpush1.msra.mxu0 0.0
  %2590 = vmatprep.subr.mxu0 0.0
  %2591 = vmatpush1.msra.mxu0 0.0
  %2592 = vmatprep.subr.mxu0 0.0
  %2593 = vmatpush1.msra.mxu0 0.0
  %2594 = vmatprep.subr.mxu0 0.0
  %2595 = vmatpush1.msra.mxu0 0.0
  %2596 = vmatprep.subr.mxu0 0.0
  %2597 = vmatpush1.msra.mxu0 0.0
  %2598 = vmatprep.subr.mxu0 0.0
  %2599 = vmatpush1.msra.mxu0 0.0
  %2600 = vmatprep.subr.mxu0 0.0
  %2601 = vmatpush1.msra.mxu0 0.0
  %2602 = vmatprep.subr.mxu0 0.0
  %2603 = vmatpush1.msra.mxu0 0.0
  %2604 = vmatprep.subr.mxu0 0.0
  %2605 = vmatpush1.msra.mxu0 0.0
  %2606 = vmatprep.subr.mxu0 0.0
  %2607 = vmatpush1.msra.mxu0 0.0
  %2608 = vmatprep.subr.mxu0 0.0
  %2609 = vmatpush1.msra.mxu0 0.0
  %2610 = vmatprep.subr.mxu0 0.0
  %2611 = vmatpush1.msra.mxu0 0.0
  %2612 = vmatprep.subr.mxu0 0.0
  %2613 = vmatpush1.msra.mxu0 0.0
  %2614 = vmatprep.subr.mxu0 0.0
  %2615 = vmatpush1.msra.mxu0 0.0
  %2616 = vmatprep.subr.mxu0 0.0
  %2617 = vmatpush1.msra.mxu0 0.0
  %2618 = vmatprep.subr.mxu0 0.0
  %2619 = vmatpush1.msra.mxu0 0.0
  %2620 = vmatprep.subr.mxu0 0.0
  %2621 = vmatpush1.msra.mxu0 0.0
  %2622 = vmatprep.subr.mxu0 0.0
  %2623 = vmatpush1.msra.mxu0 0.0
  %2624 = vmatprep.subr.mxu0 0.0
  %2625 = vmatpush1.msra.mxu0 0.0
  %2626 = vmatprep.subr.mxu0 0.0
  %2627 = vmatpush1.msra.mxu0 0.0
  %2628 = vmatprep.subr.mxu0 0.0
  %2629 = vmatpush1.msra.mxu0 0.0
  %2630 = vmatprep.subr.mxu0 0.0
  %2631 = vmatpush1.msra.mxu0 0.0
  %2632 = vmatprep.subr.mxu0 0.0
  %2633 = vmatpush1.msra.mxu0 0.0
  %2634 = vmatprep.mubr.f32.mxu0 0.0
  %2635 = vmatmul.mubr.f32.gmra.mrb[0].mxu0 %v2568
  %v2636 = vpop.f32.mrb[0].mxu0
  %v2637 = vadd.f32 0.0, %v2636
  %v2638 = vpop.f32.mrb[0].mxu0
  %2639 = vdwg.mxu0
  %v2640 = vld [vmem:[%s10] sm:$0xff]
  %v2641 = vld [vmem:[%s10 + $0x8] sm:$0xff]
  %v2642 = vld [vmem:[%s10 + $0x10] sm:$0xff]
  %v2643 = vld [vmem:[%s10 + $0x18] sm:$0xff]
  %v2644 = vld [vmem:[%s10 + $0x20] sm:$0xff]
  %v2645 = vld [vmem:[%s10 + $0x28] sm:$0xff]
  %v2646 = vld [vmem:[%s10 + $0x30] sm:$0xff]
  %v2647 = vld [vmem:[%s10 + $0x38] sm:$0xff]
  %v2648 = vld [vmem:[%s10 + $0x40] sm:$0xff]
  %v2649 = vld [vmem:[%s10 + $0x48] sm:$0xff]
  %s2650 = scalar_lea.vmem %s9, 8
  %v2651 = vld [vmem:[%s2650] sm:$0xff]
  %v2653 = vsel %vm2566, %v2651, 0
  %2655 = vmatprep.subr.mxu0 0.0
  %2656 = vmatpush1.msra.mxu0 %v2563
  %2657 = vmatprep.subr.mxu0 0.0
  %2658 = vmatpush1.msra.mxu0 %v2564
  %2659 = vmatprep.subr.mxu0 0.0
  %2660 = vmatpush1.msra.mxu0 0.0
  %2661 = vmatprep.subr.mxu0 0.0
  %2662 = vmatpush1.msra.mxu0 0.0
  %2663 = vmatprep.subr.mxu0 0.0
  %2664 = vmatpush1.msra.mxu0 0.0
  %2665 = vmatprep.subr.mxu0 0.0
  %2666 = vmatpush1.msra.mxu0 0.0
  %2667 = vmatprep.subr.mxu0 0.0
  %2668 = vmatpush1.msra.mxu0 0.0
  %2669 = vmatprep.subr.mxu0 0.0
  %2670 = vmatpush1.msra.mxu0 0.0
  %2671 = vmatprep.subr.mxu0 0.0
  %2672 = vmatpush1.msra.mxu0 0.0
  %2673 = vmatprep.subr.mxu0 0.0
  %2674 = vmatpush1.msra.mxu0 0.0
  %2675 = vmatprep.subr.mxu0 0.0
  %2676 = vmatpush1.msra.mxu0 0.0
  %2677 = vmatprep.subr.mxu0 0.0
  %2678 = vmatpush1.msra.mxu0 0.0
  %2679 = vmatprep.subr.mxu0 0.0
  %2680 = vmatpush1.msra.mxu0 0.0
  %2681 = vmatprep.subr.mxu0 0.0
  %2682 = vmatpush1.msra.mxu0 0.0
  %2683 = vmatprep.subr.mxu0 0.0
  %2684 = vmatpush1.msra.mxu0 0.0
  %2685 = vmatprep.subr.mxu0 0.0
  %2686 = vmatpush1.msra.mxu0 0.0
  %2687 = vmatprep.subr.mxu0 0.0
  %2688 = vmatpush1.msra.mxu0 0.0
  %2689 = vmatprep.subr.mxu0 0.0
  %2690 = vmatpush1.msra.mxu0 0.0
  %2691 = vmatprep.subr.mxu0 0.0
  %2692 = vmatpush1.msra.mxu0 0.0
  %2693 = vmatprep.subr.mxu0 0.0
  %2694 = vmatpush1.msra.mxu0 0.0
  %2695 = vmatprep.subr.mxu0 0.0
  %2696 = vmatpush1.msra.mxu0 0.0
  %2697 = vmatprep.subr.mxu0 0.0
  %2698 = vmatpush1.msra.mxu0 0.0
  %2699 = vmatprep.subr.mxu0 0.0
  %2700 = vmatpush1.msra.mxu0 0.0
  %2701 = vmatprep.subr.mxu0 0.0
  %2702 = vmatpush1.msra.mxu0 0.0
  %2703 = vmatprep.subr.mxu0 0.0
  %2704 = vmatpush1.msra.mxu0 0.0
  %2705 = vmatprep.subr.mxu0 0.0
  %2706 = vmatpush1.msra.mxu0 0.0
  %2707 = vmatprep.subr.mxu0 0.0
  %2708 = vmatpush1.msra.mxu0 0.0
  %2709 = vmatprep.subr.mxu0 0.0
  %2710 = vmatpush1.msra.mxu0 0.0
  %2711 = vmatprep.subr.mxu0 0.0
  %2712 = vmatpush1.msra.mxu0 0.0
  %2713 = vmatprep.subr.mxu0 0.0
  %2714 = vmatpush1.msra.mxu0 0.0
  %2715 = vmatprep.subr.mxu0 0.0
  %2716 = vmatpush1.msra.mxu0 0.0
  %2717 = vmatprep.subr.mxu0 0.0
  %2718 = vmatpush1.msra.mxu0 0.0
  %2719 = vmatprep.mubr.f32.mxu0 0.0
  %2720 = vmatmul.mubr.f32.gmra.mrb[0].mxu0 %v2653
  %v2721 = vpop.f32.mrb[0].mxu0
  %v2722 = vadd.f32 0.0, %v2721
  %v2723 = vpop.f32.mrb[0].mxu0
  %2724 = vdwg.mxu0
  %s2725 = scalar_lea.vmem %s10, 80
  %v2726 = vld [vmem:[%s2725] sm:$0xff]
  %v2727 = vld [vmem:[%s2725 + $0x8] sm:$0xff]
  %v2728 = vld [vmem:[%s2725 + $0x10] sm:$0xff]
  %v2729 = vld [vmem:[%s2725 + $0x18] sm:$0xff]
  %v2730 = vld [vmem:[%s2725 + $0x20] sm:$0xff]
  %v2731 = vld [vmem:[%s2725 + $0x28] sm:$0xff]
  %v2732 = vld [vmem:[%s2725 + $0x30] sm:$0xff]
  %v2733 = vld [vmem:[%s2725 + $0x38] sm:$0xff]
  %v2734 = vld [vmem:[%s2725 + $0x40] sm:$0xff]
  %v2735 = vld [vmem:[%s2725 + $0x48] sm:$0xff]
  %vm2736 = vcmask 654336
  %v2738 = vsel %vm2736, %v2722, 0
  %2740 = vmatprep.subr.mxu0 0.0
  %2741 = vmatpush1.msra.mxu0 %v2726
  %2742 = vmatprep.subr.mxu0 0.0
  %2743 = vmatpush1.msra.mxu0 %v2727
  %2744 = vmatprep.subr.mxu0 0.0
  %2745 = vmatpush1.msra.mxu0 %v2728
  %2746 = vmatprep.subr.mxu0 0.0
  %2747 = vmatpush1.msra.mxu0 %v2729
  %2748 = vmatprep.subr.mxu0 0.0
  %2749 = vmatpush1.msra.mxu0 %v2730
  %2750 = vmatprep.subr.mxu0 0.0
  %2751 = vmatpush1.msra.mxu0 %v2731
  %2752 = vmatprep.subr.mxu0 0.0
  %2753 = vmatpush1.msra.mxu0 %v2732
  %2754 = vmatprep.subr.mxu0 0.0
  %2755 = vmatpush1.msra.mxu0 %v2733
  %2756 = vmatprep.subr.mxu0 0.0
  %2757 = vmatpush1.msra.mxu0 %v2734
  %2758 = vmatprep.subr.mxu0 0.0
  %2759 = vmatpush1.msra.mxu0 %v2735
  %2760 = vmatprep.subr.mxu0 0.0
  %2761 = vmatpush1.msra.mxu0 0.0
  %2762 = vmatprep.subr.mxu0 0.0
  %2763 = vmatpush1.msra.mxu0 0.0
  %2764 = vmatprep.subr.mxu0 0.0
  %2765 = vmatpush1.msra.mxu0 0.0
  %2766 = vmatprep.subr.mxu0 0.0
  %2767 = vmatpush1.msra.mxu0 0.0
  %2768 = vmatprep.subr.mxu0 0.0
  %2769 = vmatpush1.msra.mxu0 0.0
  %2770 = vmatprep.subr.mxu0 0.0
  %2771 = vmatpush1.msra.mxu0 0.0
  %2772 = vmatprep.subr.mxu0 0.0
  %2773 = vmatpush1.msra.mxu0 0.0
  %2774 = vmatprep.subr.mxu0 0.0
  %2775 = vmatpush1.msra.mxu0 0.0
  %2776 = vmatprep.subr.mxu0 0.0
  %2777 = vmatpush1.msra.mxu0 0.0
  %2778 = vmatprep.subr.mxu0 0.0
  %2779 = vmatpush1.msra.mxu0 0.0
  %2780 = vmatprep.subr.mxu0 0.0
  %2781 = vmatpush1.msra.mxu0 0.0
  %2782 = vmatprep.subr.mxu0 0.0
  %2783 = vmatpush1.msra.mxu0 0.0
  %2784 = vmatprep.subr.mxu0 0.0
  %2785 = vmatpush1.msra.mxu0 0.0
  %2786 = vmatprep.subr.mxu0 0.0
  %2787 = vmatpush1.msra.mxu0 0.0
  %2788 = vmatprep.subr.mxu0 0.0
  %2789 = vmatpush1.msra.mxu0 0.0
  %2790 = vmatprep.subr.mxu0 0.0
  %2791 = vmatpush1.msra.mxu0 0.0
  %2792 = vmatprep.subr.mxu0 0.0
  %2793 = vmatpush1.msra.mxu0 0.0
  %2794 = vmatprep.subr.mxu0 0.0
  %2795 = vmatpush1.msra.mxu0 0.0
  %2796 = vmatprep.subr.mxu0 0.0
  %2797 = vmatpush1.msra.mxu0 0.0
  %2798 = vmatprep.subr.mxu0 0.0
  %2799 = vmatpush1.msra.mxu0 0.0
  %2800 = vmatprep.subr.mxu0 0.0
  %2801 = vmatpush1.msra.mxu0 0.0
  %2802 = vmatprep.subr.mxu0 0.0
  %2803 = vmatpush1.msra.mxu0 0.0
  %2804 = vmatprep.mubr.f32.mxu0 0.0
  %2805 = vmatmul.mubr.f32.gmra.mrb[0].mxu0 %v2738
  %v2806 = vpop.f32.mrb[0].mxu0
  %v2807 = vadd.f32 0.0, %v2806
  %v2808 = vpop.f32.mrb[0].mxu0
  %2809 = vdwg.mxu0
  %v2811 = vsel %vm2736, %v2637, 0
  %2813 = vmatprep.subr.mxu0 0.0
  %2814 = vmatpush1.msra.mxu0 %v2640
  %2815 = vmatprep.subr.mxu0 0.0
  %2816 = vmatpush1.msra.mxu0 %v2641
  %2817 = vmatprep.subr.mxu0 0.0
  %2818 = vmatpush1.msra.mxu0 %v2642
  %2819 = vmatprep.subr.mxu0 0.0
  %2820 = vmatpush1.msra.mxu0 %v2643
  %2821 = vmatprep.subr.mxu0 0.0
  %2822 = vmatpush1.msra.mxu0 %v2644
  %2823 = vmatprep.subr.mxu0 0.0
  %2824 = vmatpush1.msra.mxu0 %v2645
  %2825 = vmatprep.subr.mxu0 0.0
  %2826 = vmatpush1.msra.mxu0 %v2646
  %2827 = vmatprep.subr.mxu0 0.0
  %2828 = vmatpush1.msra.mxu0 %v2647
  %2829 = vmatprep.subr.mxu0 0.0
  %2830 = vmatpush1.msra.mxu0 %v2648
  %2831 = vmatprep.subr.mxu0 0.0
  %2832 = vmatpush1.msra.mxu0 %v2649
  %2833 = vmatprep.subr.mxu0 0.0
  %2834 = vmatpush1.msra.mxu0 0.0
  %2835 = vmatprep.subr.mxu0 0.0
  %2836 = vmatpush1.msra.mxu0 0.0
  %2837 = vmatprep.subr.mxu0 0.0
  %2838 = vmatpush1.msra.mxu0 0.0
  %2839 = vmatprep.subr.mxu0 0.0
  %2840 = vmatpush1.msra.mxu0 0.0
  %2841 = vmatprep.subr.mxu0 0.0
  %2842 = vmatpush1.msra.mxu0 0.0
  %2843 = vmatprep.subr.mxu0 0.0
  %2844 = vmatpush1.msra.mxu0 0.0
  %2845 = vmatprep.subr.mxu0 0.0
  %2846 = vmatpush1.msra.mxu0 0.0
  %2847 = vmatprep.subr.mxu0 0.0
  %2848 = vmatpush1.msra.mxu0 0.0
  %2849 = vmatprep.subr.mxu0 0.0
  %2850 = vmatpush1.msra.mxu0 0.0
  %2851 = vmatprep.subr.mxu0 0.0
  %2852 = vmatpush1.msra.mxu0 0.0
  %2853 = vmatprep.subr.mxu0 0.0
  %2854 = vmatpush1.msra.mxu0 0.0
  %2855 = vmatprep.subr.mxu0 0.0
  %2856 = vmatpush1.msra.mxu0 0.0
  %2857 = vmatprep.subr.mxu0 0.0
  %2858 = vmatpush1.msra.mxu0 0.0
  %2859 = vmatprep.subr.mxu0 0.0
  %2860 = vmatpush1.msra.mxu0 0.0
  %2861 = vmatprep.subr.mxu0 0.0
  %2862 = vmatpush1.msra.mxu0 0.0
  %2863 = vmatprep.subr.mxu0 0.0
  %2864 = vmatpush1.msra.mxu0 0.0
  %2865 = vmatprep.subr.mxu0 0.0
  %2866 = vmatpush1.msra.mxu0 0.0
  %2867 = vmatprep.subr.mxu0 0.0
  %2868 = vmatpush1.msra.mxu0 0.0
  %2869 = vmatprep.subr.mxu0 0.0
  %2870 = vmatpush1.msra.mxu0 0.0
  %2871 = vmatprep.subr.mxu0 0.0
  %2872 = vmatpush1.msra.mxu0 0.0
  %2873 = vmatprep.subr.mxu0 0.0
  %2874 = vmatpush1.msra.mxu0 0.0
  %2875 = vmatprep.subr.mxu0 0.0
  %2876 = vmatpush1.msra.mxu0 0.0
  %2877 = vmatprep.mubr.f32.mxu0 0.0
  %2878 = vmatmul.mubr.f32.gmra.mrb[0].mxu0 %v2811
  %v2879 = vpop.f32.mrb[0].mxu0
  %v2880 = vadd.f32 %v2807, %v2879
  %v2881 = vpop.f32.mrb[0].mxu0
  %2882 = vdwg.mxu0
  %s2883 = scalar_lea.vmem %s9, 16
  %v2884 = vld [vmem:[%s2883] sm:$0xff]
  %v2886 = vsel %vm2566, %v2884, 0
  %2888 = vmatprep.subr.mxu0 0.0
  %2889 = vmatpush1.msra.mxu0 %v2563
  %2890 = vmatprep.subr.mxu0 0.0
  %2891 = vmatpush1.msra.mxu0 %v2564
  %2892 = vmatprep.subr.mxu0 0.0
  %2893 = vmatpush1.msra.mxu0 0.0
  %2894 = vmatprep.subr.mxu0 0.0
  %2895 = vmatpush1.msra.mxu0 0.0
  %2896 = vmatprep.subr.mxu0 0.0
  %2897 = vmatpush1.msra.mxu0 0.0
  %2898 = vmatprep.subr.mxu0 0.0
  %2899 = vmatpush1.msra.mxu0 0.0
  %2900 = vmatprep.subr.mxu0 0.0
  %2901 = vmatpush1.msra.mxu0 0.0
  %2902 = vmatprep.subr.mxu0 0.0
  %2903 = vmatpush1.msra.mxu0 0.0
  %2904 = vmatprep.subr.mxu0 0.0
  %2905 = vmatpush1.msra.mxu0 0.0
  %2906 = vmatprep.subr.mxu0 0.0
  %2907 = vmatpush1.msra.mxu0 0.0
  %2908 = vmatprep.subr.mxu0 0.0
  %2909 = vmatpush1.msra.mxu0 0.0
  %2910 = vmatprep.subr.mxu0 0.0
  %2911 = vmatpush1.msra.mxu0 0.0
  %2912 = vmatprep.subr.mxu0 0.0
  %2913 = vmatpush1.msra.mxu0 0.0
  %2914 = vmatprep.subr.mxu0 0.0
  %2915 = vmatpush1.msra.mxu0 0.0
  %2916 = vmatprep.subr.mxu0 0.0
  %2917 = vmatpush1.msra.mxu0 0.0
  %2918 = vmatprep.subr.mxu0 0.0
  %2919 = vmatpush1.msra.mxu0 0.0
  %2920 = vmatprep.subr.mxu0 0.0
  %2921 = vmatpush1.msra.mxu0 0.0
  %2922 = vmatprep.subr.mxu0 0.0
  %2923 = vmatpush1.msra.mxu0 0.0
  %2924 = vmatprep.subr.mxu0 0.0
  %2925 = vmatpush1.msra.mxu0 0.0
  %2926 = vmatprep.subr.mxu0 0.0
  %2927 = vmatpush1.msra.mxu0 0.0
  %2928 = vmatprep.subr.mxu0 0.0
  %2929 = vmatpush1.msra.mxu0 0.0
  %2930 = vmatprep.subr.mxu0 0.0
  %2931 = vmatpush1.msra.mxu0 0.0
  %2932 = vmatprep.subr.mxu0 0.0
  %2933 = vmatpush1.msra.mxu0 0.0
  %2934 = vmatprep.subr.mxu0 0.0
  %2935 = vmatpush1.msra.mxu0 0.0
  %2936 = vmatprep.subr.mxu0 0.0
  %2937 = vmatpush1.msra.mxu0 0.0
  %2938 = vmatprep.subr.mxu0 0.0
  %2939 = vmatpush1.msra.mxu0 0.0
  %2940 = vmatprep.subr.mxu0 0.0
  %2941 = vmatpush1.msra.mxu0 0.0
  %2942 = vmatprep.subr.mxu0 0.0
  %2943 = vmatpush1.msra.mxu0 0.0
  %2944 = vmatprep.subr.mxu0 0.0
  %2945 = vmatpush1.msra.mxu0 0.0
  %2946 = vmatprep.subr.mxu0 0.0
  %2947 = vmatpush1.msra.mxu0 0.0
  %2948 = vmatprep.subr.mxu0 0.0
  %2949 = vmatpush1.msra.mxu0 0.0
  %2950 = vmatprep.subr.mxu0 0.0
  %2951 = vmatpush1.msra.mxu0 0.0
  %2952 = vmatprep.mubr.f32.mxu0 0.0
  %2953 = vmatmul.mubr.f32.gmra.mrb[0].mxu0 %v2886
  %v2954 = vpop.f32.mrb[0].mxu0
  %v2955 = vadd.f32 0.0, %v2954
  %v2956 = vpop.f32.mrb[0].mxu0
  %2957 = vdwg.mxu0
  %s2958 = scalar_lea.vmem %s10, 160
  %v2959 = vld [vmem:[%s2958] sm:$0xff]
  %v2960 = vld [vmem:[%s2958 + $0x8] sm:$0xff]
  %v2961 = vld [vmem:[%s2958 + $0x10] sm:$0xff]
  %v2962 = vld [vmem:[%s2958 + $0x18] sm:$0xff]
  %v2963 = vld [vmem:[%s2958 + $0x20] sm:$0xff]
  %v2964 = vld [vmem:[%s2958 + $0x28] sm:$0xff]
  %v2965 = vld [vmem:[%s2958 + $0x30] sm:$0xff]
  %v2966 = vld [vmem:[%s2958 + $0x38] sm:$0xff]
  %v2967 = vld [vmem:[%s2958 + $0x40] sm:$0xff]
  %v2968 = vld [vmem:[%s2958 + $0x48] sm:$0xff]
  %v2970 = vsel %vm2736, %v2955, 0
  %2972 = vmatprep.subr.mxu0 0.0
  %2973 = vmatpush1.msra.mxu0 %v2959
  %2974 = vmatprep.subr.mxu0 0.0
  %2975 = vmatpush1.msra.mxu0 %v2960
  %2976 = vmatprep.subr.mxu0 0.0
  %2977 = vmatpush1.msra.mxu0 %v2961
  %2978 = vmatprep.subr.mxu0 0.0
  %2979 = vmatpush1.msra.mxu0 %v2962
  %2980 = vmatprep.subr.mxu0 0.0
  %2981 = vmatpush1.msra.mxu0 %v2963
  %2982 = vmatprep.subr.mxu0 0.0
  %2983 = vmatpush1.msra.mxu0 %v2964
  %2984 = vmatprep.subr.mxu0 0.0
  %2985 = vmatpush1.msra.mxu0 %v2965
  %2986 = vmatprep.subr.mxu0 0.0
  %2987 = vmatpush1.msra.mxu0 %v2966
  %2988 = vmatprep.subr.mxu0 0.0
  %2989 = vmatpush1.msra.mxu0 %v2967
  %2990 = vmatprep.subr.mxu0 0.0
  %2991 = vmatpush1.msra.mxu0 %v2968
  %2992 = vmatprep.subr.mxu0 0.0
  %2993 = vmatpush1.msra.mxu0 0.0
  %2994 = vmatprep.subr.mxu0 0.0
  %2995 = vmatpush1.msra.mxu0 0.0
  %2996 = vmatprep.subr.mxu0 0.0
  %2997 = vmatpush1.msra.mxu0 0.0
  %2998 = vmatprep.subr.mxu0 0.0
  %2999 = vmatpush1.msra.mxu0 0.0
  %3000 = vmatprep.subr.mxu0 0.0
  %3001 = vmatpush1.msra.mxu0 0.0
  %3002 = vmatprep.subr.mxu0 0.0
  %3003 = vmatpush1.msra.mxu0 0.0
  %3004 = vmatprep.subr.mxu0 0.0
  %3005 = vmatpush1.msra.mxu0 0.0
  %3006 = vmatprep.subr.mxu0 0.0
  %3007 = vmatpush1.msra.mxu0 0.0
  %3008 = vmatprep.subr.mxu0 0.0
  %3009 = vmatpush1.msra.mxu0 0.0
  %3010 = vmatprep.subr.mxu0 0.0
  %3011 = vmatpush1.msra.mxu0 0.0
  %3012 = vmatprep.subr.mxu0 0.0
  %3013 = vmatpush1.msra.mxu0 0.0
  %3014 = vmatprep.subr.mxu0 0.0
  %3015 = vmatpush1.msra.mxu0 0.0
  %3016 = vmatprep.subr.mxu0 0.0
  %3017 = vmatpush1.msra.mxu0 0.0
  %3018 = vmatprep.subr.mxu0 0.0
  %3019 = vmatpush1.msra.mxu0 0.0
  %3020 = vmatprep.subr.mxu0 0.0
  %3021 = vmatpush1.msra.mxu0 0.0
  %3022 = vmatprep.subr.mxu0 0.0
  %3023 = vmatpush1.msra.mxu0 0.0
  %3024 = vmatprep.subr.mxu0 0.0
  %3025 = vmatpush1.msra.mxu0 0.0
  %3026 = vmatprep.subr.mxu0 0.0
  %3027 = vmatpush1.msra.mxu0 0.0
  %3028 = vmatprep.subr.mxu0 0.0
  %3029 = vmatpush1.msra.mxu0 0.0
  %3030 = vmatprep.subr.mxu0 0.0
  %3031 = vmatpush1.msra.mxu0 0.0
  %3032 = vmatprep.subr.mxu0 0.0
  %3033 = vmatpush1.msra.mxu0 0.0
  %3034 = vmatprep.subr.mxu0 0.0
  %3035 = vmatpush1.msra.mxu0 0.0
  %3036 = vmatprep.mubr.f32.mxu0 0.0
  %3037 = vmatmul.mubr.f32.gmra.mrb[0].mxu0 %v2970
  %v3038 = vpop.f32.mrb[0].mxu0
  %v3039 = vadd.f32 0.0, %v3038
  %v3040 = vpop.f32.mrb[0].mxu0
  %3041 = vdwg.mxu0
  %v3042 = vadd.f32 %v2880, %v3039
  %s3043 = scalar_lea.vmem %s9, 24
  %v3044 = vld [vmem:[%s3043] sm:$0xff]
  %v3046 = vsel %vm2566, %v3044, 0
  %3048 = vmatprep.subr.mxu0 0.0
  %3049 = vmatpush1.msra.mxu0 %v2563
  %3050 = vmatprep.subr.mxu0 0.0
  %3051 = vmatpush1.msra.mxu0 %v2564
  %3052 = vmatprep.subr.mxu0 0.0
  %3053 = vmatpush1.msra.mxu0 0.0
  %3054 = vmatprep.subr.mxu0 0.0
  %3055 = vmatpush1.msra.mxu0 0.0
  %3056 = vmatprep.subr.mxu0 0.0
  %3057 = vmatpush1.msra.mxu0 0.0
  %3058 = vmatprep.subr.mxu0 0.0
  %3059 = vmatpush1.msra.mxu0 0.0
  %3060 = vmatprep.subr.mxu0 0.0
  %3061 = vmatpush1.msra.mxu0 0.0
  %3062 = vmatprep.subr.mxu0 0.0
  %3063 = vmatpush1.msra.mxu0 0.0
  %3064 = vmatprep.subr.mxu0 0.0
  %3065 = vmatpush1.msra.mxu0 0.0
  %3066 = vmatprep.subr.mxu0 0.0
  %3067 = vmatpush1.msra.mxu0 0.0
  %3068 = vmatprep.subr.mxu0 0.0
  %3069 = vmatpush1.msra.mxu0 0.0
  %3070 = vmatprep.subr.mxu0 0.0
  %3071 = vmatpush1.msra.mxu0 0.0
  %3072 = vmatprep.subr.mxu0 0.0
  %3073 = vmatpush1.msra.mxu0 0.0
  %3074 = vmatprep.subr.mxu0 0.0
  %3075 = vmatpush1.msra.mxu0 0.0
  %3076 = vmatprep.subr.mxu0 0.0
  %3077 = vmatpush1.msra.mxu0 0.0
  %3078 = vmatprep.subr.mxu0 0.0
  %3079 = vmatpush1.msra.mxu0 0.0
  %3080 = vmatprep.subr.mxu0 0.0
  %3081 = vmatpush1.msra.mxu0 0.0
  %3082 = vmatprep.subr.mxu0 0.0
  %3083 = vmatpush1.msra.mxu0 0.0
  %3084 = vmatprep.subr.mxu0 0.0
  %3085 = vmatpush1.msra.mxu0 0.0
  %3086 = vmatprep.subr.mxu0 0.0
  %3087 = vmatpush1.msra.mxu0 0.0
  %3088 = vmatprep.subr.mxu0 0.0
  %3089 = vmatpush1.msra.mxu0 0.0
  %3090 = vmatprep.subr.mxu0 0.0
  %3091 = vmatpush1.msra.mxu0 0.0
  %3092 = vmatprep.subr.mxu0 0.0
  %3093 = vmatpush1.msra.mxu0 0.0
  %3094 = vmatprep.subr.mxu0 0.0
  %3095 = vmatpush1.msra.mxu0 0.0
  %3096 = vmatprep.subr.mxu0 0.0
  %3097 = vmatpush1.msra.mxu0 0.0
  %3098 = vmatprep.subr.mxu0 0.0
  %3099 = vmatpush1.msra.mxu0 0.0
  %3100 = vmatprep.subr.mxu0 0.0
  %3101 = vmatpush1.msra.mxu0 0.0
  %3102 = vmatprep.subr.mxu0 0.0
  %3103 = vmatpush1.msra.mxu0 0.0
  %3104 = vmatprep.subr.mxu0 0.0
  %3105 = vmatpush1.msra.mxu0 0.0
  %3106 = vmatprep.subr.mxu0 0.0
  %3107 = vmatpush1.msra.mxu0 0.0
  %3108 = vmatprep.subr.mxu0 0.0
  %3109 = vmatpush1.msra.mxu0 0.0
  %3110 = vmatprep.subr.mxu0 0.0
  %3111 = vmatpush1.msra.mxu0 0.0
  %3112 = vmatprep.mubr.f32.mxu0 0.0
  %3113 = vmatmul.mubr.f32.gmra.mrb[0].mxu0 %v3046
  %v3114 = vpop.f32.mrb[0].mxu0
  %v3115 = vadd.f32 0.0, %v3114
  %v3116 = vpop.f32.mrb[0].mxu0
  %3117 = vdwg.mxu0
  %s3118 = scalar_lea.vmem %s10, 240
  %v3119 = vld [vmem:[%s3118] sm:$0xff]
  %v3120 = vld [vmem:[%s3118 + $0x8] sm:$0xff]
  %v3121 = vld [vmem:[%s3118 + $0x10] sm:$0xff]
  %v3122 = vld [vmem:[%s3118 + $0x18] sm:$0xff]
  %v3123 = vld [vmem:[%s3118 + $0x20] sm:$0xff]
  %v3124 = vld [vmem:[%s3118 + $0x28] sm:$0xff]
  %v3125 = vld [vmem:[%s3118 + $0x30] sm:$0xff]
  %v3126 = vld [vmem:[%s3118 + $0x38] sm:$0xff]
  %v3127 = vld [vmem:[%s3118 + $0x40] sm:$0xff]
  %v3128 = vld [vmem:[%s3118 + $0x48] sm:$0xff]
  %v3130 = vsel %vm2736, %v3115, 0
  %3132 = vmatprep.subr.mxu0 0.0
  %3133 = vmatpush1.msra.mxu0 %v3119
  %3134 = vmatprep.subr.mxu0 0.0
  %3135 = vmatpush1.msra.mxu0 %v3120
  %3136 = vmatprep.subr.mxu0 0.0
  %3137 = vmatpush1.msra.mxu0 %v3121
  %3138 = vmatprep.subr.mxu0 0.0
  %3139 = vmatpush1.msra.mxu0 %v3122
  %3140 = vmatprep.subr.mxu0 0.0
  %3141 = vmatpush1.msra.mxu0 %v3123
  %3142 = vmatprep.subr.mxu0 0.0
  %3143 = vmatpush1.msra.mxu0 %v3124
  %3144 = vmatprep.subr.mxu0 0.0
  %3145 = vmatpush1.msra.mxu0 %v3125
  %3146 = vmatprep.subr.mxu0 0.0
  %3147 = vmatpush1.msra.mxu0 %v3126
  %3148 = vmatprep.subr.mxu0 0.0
  %3149 = vmatpush1.msra.mxu0 %v3127
  %3150 = vmatprep.subr.mxu0 0.0
  %3151 = vmatpush1.msra.mxu0 %v3128
  %3152 = vmatprep.subr.mxu0 0.0
  %3153 = vmatpush1.msra.mxu0 0.0
  %3154 = vmatprep.subr.mxu0 0.0
  %3155 = vmatpush1.msra.mxu0 0.0
  %3156 = vmatprep.subr.mxu0 0.0
  %3157 = vmatpush1.msra.mxu0 0.0
  %3158 = vmatprep.subr.mxu0 0.0
  %3159 = vmatpush1.msra.mxu0 0.0
  %3160 = vmatprep.subr.mxu0 0.0
  %3161 = vmatpush1.msra.mxu0 0.0
  %3162 = vmatprep.subr.mxu0 0.0
  %3163 = vmatpush1.msra.mxu0 0.0
  %3164 = vmatprep.subr.mxu0 0.0
  %3165 = vmatpush1.msra.mxu0 0.0
  %3166 = vmatprep.subr.mxu0 0.0
  %3167 = vmatpush1.msra.mxu0 0.0
  %3168 = vmatprep.subr.mxu0 0.0
  %3169 = vmatpush1.msra.mxu0 0.0
  %3170 = vmatprep.subr.mxu0 0.0
  %3171 = vmatpush1.msra.mxu0 0.0
  %3172 = vmatprep.subr.mxu0 0.0
  %3173 = vmatpush1.msra.mxu0 0.0
  %3174 = vmatprep.subr.mxu0 0.0
  %3175 = vmatpush1.msra.mxu0 0.0
  %3176 = vmatprep.subr.mxu0 0.0
  %3177 = vmatpush1.msra.mxu0 0.0
  %3178 = vmatprep.subr.mxu0 0.0
  %3179 = vmatpush1.msra.mxu0 0.0
  %3180 = vmatprep.subr.mxu0 0.0
  %3181 = vmatpush1.msra.mxu0 0.0
  %3182 = vmatprep.subr.mxu0 0.0
  %3183 = vmatpush1.msra.mxu0 0.0
  %3184 = vmatprep.subr.mxu0 0.0
  %3185 = vmatpush1.msra.mxu0 0.0
  %3186 = vmatprep.subr.mxu0 0.0
  %3187 = vmatpush1.msra.mxu0 0.0
  %3188 = vmatprep.subr.mxu0 0.0
  %3189 = vmatpush1.msra.mxu0 0.0
  %3190 = vmatprep.subr.mxu0 0.0
  %3191 = vmatpush1.msra.mxu0 0.0
  %3192 = vmatprep.subr.mxu0 0.0
  %3193 = vmatpush1.msra.mxu0 0.0
  %3194 = vmatprep.subr.mxu0 0.0
  %3195 = vmatpush1.msra.mxu0 0.0
  %3196 = vmatprep.mubr.f32.mxu0 0.0
  %3197 = vmatmul.mubr.f32.gmra.mrb[0].mxu0 %v3130
  %v3198 = vpop.f32.mrb[0].mxu0
  %v3199 = vadd.f32 0.0, %v3198
  %v3200 = vpop.f32.mrb[0].mxu0
  %3201 = vdwg.mxu0
  %v3202 = vadd.f32 %v3042, %v3199
  %s3203 = scalar_lea.vmem %s9, 32
  %v3204 = vld [vmem:[%s3203] sm:$0xff]
  %v3206 = vsel %vm2566, %v3204, 0
  %3208 = vmatprep.subr.mxu0 0.0
  %3209 = vmatpush1.msra.mxu0 %v2563
  %3210 = vmatprep.subr.mxu0 0.0
  %3211 = vmatpush1.msra.mxu0 %v2564
  %3212 = vmatprep.subr.mxu0 0.0
  %3213 = vmatpush1.msra.mxu0 0.0
  %3214 = vmatprep.subr.mxu0 0.0
  %3215 = vmatpush1.msra.mxu0 0.0
  %3216 = vmatprep.subr.mxu0 0.0
  %3217 = vmatpush1.msra.mxu0 0.0
  %3218 = vmatprep.subr.mxu0 0.0
  %3219 = vmatpush1.msra.mxu0 0.0
  %3220 = vmatprep.subr.mxu0 0.0
  %3221 = vmatpush1.msra.mxu0 0.0
  %3222 = vmatprep.subr.mxu0 0.0
  %3223 = vmatpush1.msra.mxu0 0.0
  %3224 = vmatprep.subr.mxu0 0.0
  %3225 = vmatpush1.msra.mxu0 0.0
  %3226 = vmatprep.subr.mxu0 0.0
  %3227 = vmatpush1.msra.mxu0 0.0
  %3228 = vmatprep.subr.mxu0 0.0
  %3229 = vmatpush1.msra.mxu0 0.0
  %3230 = vmatprep.subr.mxu0 0.0
  %3231 = vmatpush1.msra.mxu0 0.0
  %3232 = vmatprep.subr.mxu0 0.0
  %3233 = vmatpush1.msra.mxu0 0.0
  %3234 = vmatprep.subr.mxu0 0.0
  %3235 = vmatpush1.msra.mxu0 0.0
  %3236 = vmatprep.subr.mxu0 0.0
  %3237 = vmatpush1.msra.mxu0 0.0
  %3238 = vmatprep.subr.mxu0 0.0
  %3239 = vmatpush1.msra.mxu0 0.0
  %3240 = vmatprep.subr.mxu0 0.0
  %3241 = vmatpush1.msra.mxu0 0.0
  %3242 = vmatprep.subr.mxu0 0.0
  %3243 = vmatpush1.msra.mxu0 0.0
  %3244 = vmatprep.subr.mxu0 0.0
  %3245 = vmatpush1.msra.mxu0 0.0
  %3246 = vmatprep.subr.mxu0 0.0
  %3247 = vmatpush1.msra.mxu0 0.0
  %3248 = vmatprep.subr.mxu0 0.0
  %3249 = vmatpush1.msra.mxu0 0.0
  %3250 = vmatprep.subr.mxu0 0.0
  %3251 = vmatpush1.msra.mxu0 0.0
  %3252 = vmatprep.subr.mxu0 0.0
  %3253 = vmatpush1.msra.mxu0 0.0
  %3254 = vmatprep.subr.mxu0 0.0
  %3255 = vmatpush1.msra.mxu0 0.0
  %3256 = vmatprep.subr.mxu0 0.0
  %3257 = vmatpush1.msra.mxu0 0.0
  %3258 = vmatprep.subr.mxu0 0.0
  %3259 = vmatpush1.msra.mxu0 0.0
  %3260 = vmatprep.subr.mxu0 0.0
  %3261 = vmatpush1.msra.mxu0 0.0
  %3262 = vmatprep.subr.mxu0 0.0
  %3263 = vmatpush1.msra.mxu0 0.0
  %3264 = vmatprep.subr.mxu0 0.0
  %3265 = vmatpush1.msra.mxu0 0.0
  %3266 = vmatprep.subr.mxu0 0.0
  %3267 = vmatpush1.msra.mxu0 0.0
  %3268 = vmatprep.subr.mxu0 0.0
  %3269 = vmatpush1.msra.mxu0 0.0
  %3270 = vmatprep.subr.mxu0 0.0
  %3271 = vmatpush1.msra.mxu0 0.0
  %3272 = vmatprep.mubr.f32.mxu0 0.0
  %3273 = vmatmul.mubr.f32.gmra.mrb[0].mxu0 %v3206
  %v3274 = vpop.f32.mrb[0].mxu0
  %v3275 = vadd.f32 0.0, %v3274
  %v3276 = vpop.f32.mrb[0].mxu0
  %3277 = vdwg.mxu0
  %s3278 = scalar_lea.vmem %s10, 320
  %v3279 = vld [vmem:[%s3278] sm:$0xff]
  %v3280 = vld [vmem:[%s3278 + $0x8] sm:$0xff]
  %v3281 = vld [vmem:[%s3278 + $0x10] sm:$0xff]
  %v3282 = vld [vmem:[%s3278 + $0x18] sm:$0xff]
  %v3283 = vld [vmem:[%s3278 + $0x20] sm:$0xff]
  %v3284 = vld [vmem:[%s3278 + $0x28] sm:$0xff]
  %v3285 = vld [vmem:[%s3278 + $0x30] sm:$0xff]
  %v3286 = vld [vmem:[%s3278 + $0x38] sm:$0xff]
  %v3287 = vld [vmem:[%s3278 + $0x40] sm:$0xff]
  %v3288 = vld [vmem:[%s3278 + $0x48] sm:$0xff]
  %v3290 = vsel %vm2736, %v3275, 0
  %3292 = vmatprep.subr.mxu0 0.0
  %3293 = vmatpush1.msra.mxu0 %v3279
  %3294 = vmatprep.subr.mxu0 0.0
  %3295 = vmatpush1.msra.mxu0 %v3280
  %3296 = vmatprep.subr.mxu0 0.0
  %3297 = vmatpush1.msra.mxu0 %v3281
  %3298 = vmatprep.subr.mxu0 0.0
  %3299 = vmatpush1.msra.mxu0 %v3282
  %3300 = vmatprep.subr.mxu0 0.0
  %3301 = vmatpush1.msra.mxu0 %v3283
  %3302 = vmatprep.subr.mxu0 0.0
  %3303 = vmatpush1.msra.mxu0 %v3284
  %3304 = vmatprep.subr.mxu0 0.0
  %3305 = vmatpush1.msra.mxu0 %v3285
  %3306 = vmatprep.subr.mxu0 0.0
  %3307 = vmatpush1.msra.mxu0 %v3286
  %3308 = vmatprep.subr.mxu0 0.0
  %3309 = vmatpush1.msra.mxu0 %v3287
  %3310 = vmatprep.subr.mxu0 0.0
  %3311 = vmatpush1.msra.mxu0 %v3288
  %3312 = vmatprep.subr.mxu0 0.0
  %3313 = vmatpush1.msra.mxu0 0.0
  %3314 = vmatprep.subr.mxu0 0.0
  %3315 = vmatpush1.msra.mxu0 0.0
  %3316 = vmatprep.subr.mxu0 0.0
  %3317 = vmatpush1.msra.mxu0 0.0
  %3318 = vmatprep.subr.mxu0 0.0
  %3319 = vmatpush1.msra.mxu0 0.0
  %3320 = vmatprep.subr.mxu0 0.0
  %3321 = vmatpush1.msra.mxu0 0.0
  %3322 = vmatprep.subr.mxu0 0.0
  %3323 = vmatpush1.msra.mxu0 0.0
  %3324 = vmatprep.subr.mxu0 0.0
  %3325 = vmatpush1.msra.mxu0 0.0
  %3326 = vmatprep.subr.mxu0 0.0
  %3327 = vmatpush1.msra.mxu0 0.0
  %3328 = vmatprep.subr.mxu0 0.0
  %3329 = vmatpush1.msra.mxu0 0.0
  %3330 = vmatprep.subr.mxu0 0.0
  %3331 = vmatpush1.msra.mxu0 0.0
  %3332 = vmatprep.subr.mxu0 0.0
  %3333 = vmatpush1.msra.mxu0 0.0
  %3334 = vmatprep.subr.mxu0 0.0
  %3335 = vmatpush1.msra.mxu0 0.0
  %3336 = vmatprep.subr.mxu0 0.0
  %3337 = vmatpush1.msra.mxu0 0.0
  %3338 = vmatprep.subr.mxu0 0.0
  %3339 = vmatpush1.msra.mxu0 0.0
  %3340 = vmatprep.subr.mxu0 0.0
  %3341 = vmatpush1.msra.mxu0 0.0
  %3342 = vmatprep.subr.mxu0 0.0
  %3343 = vmatpush1.msra.mxu0 0.0
  %3344 = vmatprep.subr.mxu0 0.0
  %3345 = vmatpush1.msra.mxu0 0.0
  %3346 = vmatprep.subr.mxu0 0.0
  %3347 = vmatpush1.msra.mxu0 0.0
  %3348 = vmatprep.subr.mxu0 0.0
  %3349 = vmatpush1.msra.mxu0 0.0
  %3350 = vmatprep.subr.mxu0 0.0
  %3351 = vmatpush1.msra.mxu0 0.0
  %3352 = vmatprep.subr.mxu0 0.0
  %3353 = vmatpush1.msra.mxu0 0.0
  %3354 = vmatprep.subr.mxu0 0.0
  %3355 = vmatpush1.msra.mxu0 0.0
  %3356 = vmatprep.mubr.f32.mxu0 0.0
  %3357 = vmatmul.mubr.f32.gmra.mrb[0].mxu0 %v3290
  %v3358 = vpop.f32.mrb[0].mxu0
  %v3359 = vadd.f32 0.0, %v3358
  %v3360 = vpop.f32.mrb[0].mxu0
  %3361 = vdwg.mxu0
  %v3362 = vadd.f32 %v3202, %v3359
  %v3363 = vld [vmem:[%s11] sm:$0x1]
  %v3365 = vlaneseq
  %v3366 = vshrl.u32 %v3365, 7
  %v3367 = vsub.s32 0, %v3366
  %v3368 = vrot.slane %v3363, %v3367
  %v3370 = vadd.f32 %v3362, %v3368
  %v3371 = vld [vmem:[%s12] sm:$0xff]
  %v3372 = vld [vmem:[%s12 + $0x8] sm:$0xff]
  %v3373 = vld [vmem:[%s12 + $0x10] sm:$0xff]
  %v3374 = vld [vmem:[%s12 + $0x18] sm:$0xff]
  %v3375 = vld [vmem:[%s12 + $0x20] sm:$0xff]
  %v3376 = vld [vmem:[%s12 + $0x28] sm:$0xff]
  %v3377 = vld [vmem:[%s12 + $0x30] sm:$0xff]
  %v3378 = vld [vmem:[%s12 + $0x38] sm:$0xff]
  %v3379 = vld [vmem:[%s12 + $0x40] sm:$0xff]
  %v3380 = vld [vmem:[%s12 + $0x48] sm:$0xff]
  %v3381 = vld [vmem:[%s12 + $0x50] sm:$0xff]
  %v3382 = vld [vmem:[%s12 + $0x58] sm:$0xff]
  %v3383 = vld [vmem:[%s12 + $0x60] sm:$0xff]
  %v3384 = vld [vmem:[%s12 + $0x68] sm:$0xff]
  %v3385 = vld [vmem:[%s12 + $0x70] sm:$0xff]
  %v3386 = vld [vmem:[%s12 + $0x78] sm:$0xff]
  %v3387 = vld [vmem:[%s13] sm:$0x1]
  %v3389 = vlaneseq
  %v3390 = vshrl.u32 %v3389, 7
  %v3391 = vsub.s32 0, %v3390
  %v3392 = vrot.slane %v3387, %v3391
  %3394 = vmatprep.subr.mxu0 0.0
  %3395 = vmatpush1.msra.mxu0 %v3371
  %3396 = vmatprep.subr.mxu0 0.0
  %3397 = vmatpush1.msra.mxu0 %v3372
  %3398 = vmatprep.subr.mxu0 0.0
  %3399 = vmatpush1.msra.mxu0 %v3373
  %3400 = vmatprep.subr.mxu0 0.0
  %3401 = vmatpush1.msra.mxu0 %v3374
  %3402 = vmatprep.subr.mxu0 0.0
  %3403 = vmatpush1.msra.mxu0 %v3375
  %3404 = vmatprep.subr.mxu0 0.0
  %3405 = vmatpush1.msra.mxu0 %v3376
  %3406 = vmatprep.subr.mxu0 0.0
  %3407 = vmatpush1.msra.mxu0 %v3377
  %3408 = vmatprep.subr.mxu0 0.0
  %3409 = vmatpush1.msra.mxu0 %v3378
  %3410 = vmatprep.subr.mxu0 0.0
  %3411 = vmatpush1.msra.mxu0 %v3379
  %3412 = vmatprep.subr.mxu0 0.0
  %3413 = vmatpush1.msra.mxu0 %v3380
  %3414 = vmatprep.subr.mxu0 0.0
  %3415 = vmatpush1.msra.mxu0 %v3381
  %3416 = vmatprep.subr.mxu0 0.0
  %3417 = vmatpush1.msra.mxu0 %v3382
  %3418 = vmatprep.subr.mxu0 0.0
  %3419 = vmatpush1.msra.mxu0 %v3383
  %3420 = vmatprep.subr.mxu0 0.0
  %3421 = vmatpush1.msra.mxu0 %v3384
  %3422 = vmatprep.subr.mxu0 0.0
  %3423 = vmatpush1.msra.mxu0 %v3385
  %3424 = vmatprep.subr.mxu0 0.0
  %3425 = vmatpush1.msra.mxu0 %v3386
  %3426 = vmatprep.subr.mxu0 0.0
  %3427 = vmatpush1.msra.mxu0 0.0
  %3428 = vmatprep.subr.mxu0 0.0
  %3429 = vmatpush1.msra.mxu0 0.0
  %3430 = vmatprep.subr.mxu0 0.0
  %3431 = vmatpush1.msra.mxu0 0.0
  %3432 = vmatprep.subr.mxu0 0.0
  %3433 = vmatpush1.msra.mxu0 0.0
  %3434 = vmatprep.subr.mxu0 0.0
  %3435 = vmatpush1.msra.mxu0 0.0
  %3436 = vmatprep.subr.mxu0 0.0
  %3437 = vmatpush1.msra.mxu0 0.0
  %3438 = vmatprep.subr.mxu0 0.0
  %3439 = vmatpush1.msra.mxu0 0.0
  %3440 = vmatprep.subr.mxu0 0.0
  %3441 = vmatpush1.msra.mxu0 0.0
  %3442 = vmatprep.subr.mxu0 0.0
  %3443 = vmatpush1.msra.mxu0 0.0
  %3444 = vmatprep.subr.mxu0 0.0
  %3445 = vmatpush1.msra.mxu0 0.0
  %3446 = vmatprep.subr.mxu0 0.0
  %3447 = vmatpush1.msra.mxu0 0.0
  %3448 = vmatprep.subr.mxu0 0.0
  %3449 = vmatpush1.msra.mxu0 0.0
  %3450 = vmatprep.subr.mxu0 0.0
  %3451 = vmatpush1.msra.mxu0 0.0
  %3452 = vmatprep.subr.mxu0 0.0
  %3453 = vmatpush1.msra.mxu0 0.0
  %3454 = vmatprep.subr.mxu0 0.0
  %3455 = vmatpush1.msra.mxu0 0.0
  %3456 = vmatprep.subr.mxu0 0.0
  %3457 = vmatpush1.msra.mxu0 0.0
  %3458 = vmatprep.mubr.f32.mxu0 0.0
  %3459 = vmatmul.mubr.f32.gmra.mrb[0].mxu0 %v3370
  %v3460 = vpop.f32.mrb[0].mxu0
  %v3461 = vadd.f32 %v3392, %v3460
  %v3462 = vpop.f32.mrb[0].mxu0
  %3463 = vdwg.mxu0
  %v3464 = vld [vmem:[%s14] sm:$0xff]
  %v3465 = vld [vmem:[%s14 + $0x8] sm:$0xff]
  %v3466 = vld [vmem:[%s14 + $0x10] sm:$0xff]
  %v3467 = vld [vmem:[%s14 + $0x18] sm:$0xff]
  %v3468 = vld [vmem:[%s14 + $0x20] sm:$0xff]
  %v3469 = vld [vmem:[%s14 + $0x28] sm:$0xff]
  %v3470 = vld [vmem:[%s14 + $0x30] sm:$0xff]
  %v3471 = vld [vmem:[%s14 + $0x38] sm:$0xff]
  %v3472 = vld [vmem:[%s14 + $0x40] sm:$0xff]
  %v3473 = vld [vmem:[%s14 + $0x48] sm:$0xff]
  %v3474 = vld [vmem:[%s14 + $0x50] sm:$0xff]
  %v3475 = vld [vmem:[%s14 + $0x58] sm:$0xff]
  %v3476 = vld [vmem:[%s14 + $0x60] sm:$0xff]
  %v3477 = vld [vmem:[%s14 + $0x68] sm:$0xff]
  %v3478 = vld [vmem:[%s14 + $0x70] sm:$0xff]
  %v3479 = vld [vmem:[%s14 + $0x78] sm:$0xff]
  %v3480 = vld [vmem:[%s15] sm:$0x1]
  %v3482 = vlaneseq
  %v3483 = vshrl.u32 %v3482, 7
  %v3484 = vsub.s32 0, %v3483
  %v3485 = vrot.slane %v3480, %v3484
  %3487 = vmatprep.subr.mxu0 0.0
  %3488 = vmatpush1.msra.mxu0 %v3464
  %3489 = vmatprep.subr.mxu0 0.0
  %3490 = vmatpush1.msra.mxu0 %v3465
  %3491 = vmatprep.subr.mxu0 0.0
  %3492 = vmatpush1.msra.mxu0 %v3466
  %3493 = vmatprep.subr.mxu0 0.0
  %3494 = vmatpush1.msra.mxu0 %v3467
  %3495 = vmatprep.subr.mxu0 0.0
  %3496 = vmatpush1.msra.mxu0 %v3468
  %3497 = vmatprep.subr.mxu0 0.0
  %3498 = vmatpush1.msra.mxu0 %v3469
  %3499 = vmatprep.subr.mxu0 0.0
  %3500 = vmatpush1.msra.mxu0 %v3470
  %3501 = vmatprep.subr.mxu0 0.0
  %3502 = vmatpush1.msra.mxu0 %v3471
  %3503 = vmatprep.subr.mxu0 0.0
  %3504 = vmatpush1.msra.mxu0 %v3472
  %3505 = vmatprep.subr.mxu0 0.0
  %3506 = vmatpush1.msra.mxu0 %v3473
  %3507 = vmatprep.subr.mxu0 0.0
  %3508 = vmatpush1.msra.mxu0 %v3474
  %3509 = vmatprep.subr.mxu0 0.0
  %3510 = vmatpush1.msra.mxu0 %v3475
  %3511 = vmatprep.subr.mxu0 0.0
  %3512 = vmatpush1.msra.mxu0 %v3476
  %3513 = vmatprep.subr.mxu0 0.0
  %3514 = vmatpush1.msra.mxu0 %v3477
  %3515 = vmatprep.subr.mxu0 0.0
  %3516 = vmatpush1.msra.mxu0 %v3478
  %3517 = vmatprep.subr.mxu0 0.0
  %3518 = vmatpush1.msra.mxu0 %v3479
  %3519 = vmatprep.subr.mxu0 0.0
  %3520 = vmatpush1.msra.mxu0 0.0
  %3521 = vmatprep.subr.mxu0 0.0
  %3522 = vmatpush1.msra.mxu0 0.0
  %3523 = vmatprep.subr.mxu0 0.0
  %3524 = vmatpush1.msra.mxu0 0.0
  %3525 = vmatprep.subr.mxu0 0.0
  %3526 = vmatpush1.msra.mxu0 0.0
  %3527 = vmatprep.subr.mxu0 0.0
  %3528 = vmatpush1.msra.mxu0 0.0
  %3529 = vmatprep.subr.mxu0 0.0
  %3530 = vmatpush1.msra.mxu0 0.0
  %3531 = vmatprep.subr.mxu0 0.0
  %3532 = vmatpush1.msra.mxu0 0.0
  %3533 = vmatprep.subr.mxu0 0.0
  %3534 = vmatpush1.msra.mxu0 0.0
  %3535 = vmatprep.subr.mxu0 0.0
  %3536 = vmatpush1.msra.mxu0 0.0
  %3537 = vmatprep.subr.mxu0 0.0
  %3538 = vmatpush1.msra.mxu0 0.0
  %3539 = vmatprep.subr.mxu0 0.0
  %3540 = vmatpush1.msra.mxu0 0.0
  %3541 = vmatprep.subr.mxu0 0.0
  %3542 = vmatpush1.msra.mxu0 0.0
  %3543 = vmatprep.subr.mxu0 0.0
  %3544 = vmatpush1.msra.mxu0 0.0
  %3545 = vmatprep.subr.mxu0 0.0
  %3546 = vmatpush1.msra.mxu0 0.0
  %3547 = vmatprep.subr.mxu0 0.0
  %3548 = vmatpush1.msra.mxu0 0.0
  %3549 = vmatprep.subr.mxu0 0.0
  %3550 = vmatpush1.msra.mxu0 0.0
  %3551 = vmatprep.mubr.f32.mxu0 0.0
  %3552 = vmatmul.mubr.f32.gmra.mrb[0].mxu0 %v3461
  %v3553 = vpop.f32.mrb[0].mxu0
  %v3554 = vadd.f32 %v3485, %v3553
  %v3555 = vpop.f32.mrb[0].mxu0
  %3556 = vdwg.mxu0
  %3557 = vst [vmem:[%s16] sm:$0xff] %v3554
  // Predicated region
  $region66: #{lenet5_forward.1} parent=0 // pred_check
    _
  $region67: #{lenet5_forward.1} parent=0 // pred_check_branch
    %3559 = sbr.rel (0) target = $region69
  $region68: #{lenet5_forward.1} parent=0 // pred_region
    _
  $region69: #{lenet5_forward.1} parent=0 // pred_fallthru
    _
  // Predicated region
  $region70: #{lenet5_forward.1} parent=0 // pred_check
    _
  $region71: #{lenet5_forward.1} parent=0 // pred_check_branch
    %3561 = sbr.rel (0) target = $region73
  $region72: #{lenet5_forward.1} parent=0 // pred_region
    _
  $region73: #{lenet5_forward.1} parent=0 // pred_fallthru
    _

</llo_original>
